<compile_context>
chip_gen: v7x
topology: tpu7x:2x2x1
jax: 0.10.0
libtpu: 0.0.40
codegen_flags: <defaults>
</compile_context>

<pallas_src>
import math

import jax
import jax.numpy as jnp
from jax import lax
from jax.experimental import pallas as pl
from jax.experimental.pallas import tpu as pltpu

# ----------------------------- synthetic config ------------------------------
B = 2            # batch
S = 8            # sequence length
H = 32           # hidden size
NH = 4           # attention heads
HD = H // NH     # head dim
F = 64           # FFN intermediate size
L = 2            # transformer layers
VOCAB = 100
NUM_CLASSES = 2
LN_EPS = 1e-12
MASK_NEG = -1e9

T = B * S        # tokens
Z = B * NH       # merged (batch, head) pairs
W3 = 3 * H       # fused QKV width


# --------------------------- shared math helpers -----------------------------
def _layernorm(x, g, b):
    mu = jnp.mean(x, axis=-1, keepdims=True)
    var = jnp.mean(jnp.square(x - mu), axis=-1, keepdims=True)
    return (x - mu) * lax.rsqrt(var + LN_EPS) * g + b


def _gelu(x):
    # TODO(synk): BERT uses exact (erf) GELU; tanh approximation used here for clean
    # TPU lowering (the in-file reference uses the same approximation).
    c = math.sqrt(2.0 / math.pi)
    return 0.5 * x * (1.0 + jnp.tanh(c * (x + 0.044715 * x * x * x)))


def _softmax_last_kernel(s):
    # In-kernel softmax: divide goes to the EUP via approx reciprocal.
    m = jnp.max(s, axis=-1, keepdims=True)
    e = jnp.exp(s - m)
    return e * pl.reciprocal(jnp.sum(e, axis=-1, keepdims=True), approx=True)


def _softmax_last_ref(s):
    m = jnp.max(s, axis=-1, keepdims=True)
    e = jnp.exp(s - m)
    return e / jnp.sum(e, axis=-1, keepdims=True)


# -------------------------------- kernel -------------------------------------
def _bert_kernel(x_ref, mask_ref, vech_ref, wqkv_ref, wo_ref, lvecs_ref,
                 w1_ref, w2_ref, whead_ref, out_ref):
    f32 = jnp.float32
    bf16 = jnp.bfloat16
    scale = 1.0 / math.sqrt(HD)

    # Hoisted attention-mask bias: built ONCE, reused by every layer and head
    # (JAX does not CSE broadcast_in_dim).                       [Z, S, S]
    bias = jnp.broadcast_to(mask_ref[...].reshape(B, 1, 1, S),
                            (B, NH, S, S)).reshape(Z, S, S)

    # Embedding LayerNorm. Activations stay f32; only MXU operands are bf16.
    x = _layernorm(x_ref[...], vech_ref[0:1, :], vech_ref[1:2, :])        # [T, H]

    for l in range(L):
        # ---- fused QKV projection: one [T,H]@[H,3H] matmul (bf16 in, f32 acc) ----
        qkv = (jnp.dot(x.astype(bf16), wqkv_ref[l],
                       preferred_element_type=f32)
               + lvecs_ref[l, 0:1, :])                                    # [T, 3H]
        # Head-major rearrangement; the q/k/v split becomes a leading-dim index
        # (no unaligned lane slices at offsets 32/64).
        qkv = jnp.transpose(qkv.reshape(B, S, 3 * NH, HD),
                            (0, 2, 1, 3)).reshape(B, 3, NH, S, HD)
        q = qkv[:, 0].reshape(Z, S, HD)
        k = qkv[:, 1].reshape(Z, S, HD)
        v = qkv[:, 2].reshape(Z, S, HD)

        # ---- head-batched attention: single contraction over the Z batch axis ----
        scores = (jnp.einsum('zqd,zkd->zqk', q.astype(bf16), k.astype(bf16),
                             preferred_element_type=f32) * scale + bias)  # [Z, S, S]
        p = _softmax_last_kernel(scores)
        ctx = jnp.einsum('zqk,zkd->zqd', p.astype(bf16), v.astype(bf16),
                         preferred_element_type=f32)                      # [Z, S, HD]
        ctx = jnp.transpose(ctx.reshape(B, NH, S, HD),
                            (0, 2, 1, 3)).reshape(T, H)                   # concat heads

        attn_out = (jnp.dot(ctx.astype(bf16), wo_ref[l],
                            preferred_element_type=f32)
                    + lvecs_ref[l, 1:2, :H])
        x = _layernorm(x + attn_out, lvecs_ref[l, 2:3, :H], lvecs_ref[l, 3:4, :H])

        # ---- feed forward ----
        hmid = _gelu(jnp.dot(x.astype(bf16), w1_ref[l],
                             preferred_element_type=f32) + lvecs_ref[l, 4:5, :F])
        ffn = (jnp.dot(hmid.astype(bf16), w2_ref[l],
                       preferred_element_type=f32)
               + lvecs_ref[l, 5:6, :H])
        x = _layernorm(x + ffn, lvecs_ref[l, 6:7, :H], lvecs_ref[l, 7:8, :H])

    # ---- pooler on the CLS token (single strided slice) + classifier ----
    cls = x.reshape(B, S, H)[:, 0, :]                                     # [B, H]
    pooled = jnp.tanh(jnp.dot(cls.astype(bf16), whead_ref[0],
                              preferred_element_type=f32) + vech_ref[2:3, :])
    logits = (jnp.dot(pooled.astype(bf16), whead_ref[1],
                      preferred_element_type=f32) + vech_ref[3:4, :])     # [B, H] (padded)
    out_ref[...] = logits[:, :NUM_CLASSES]


# ------------------------------- wrapper --------------------------------------
def multilingual_nlp_forward(params, input_ids, attention_mask):
    # Embedding lookup (glue, plain JAX): word + position + token-type(0).
    pos = jnp.arange(S)
    emb = (params["word_emb"][input_ids]
           + params["pos_emb"][pos][None, :, :]
           + params["type_emb"][0][None, None, :])
    x_emb = emb.reshape(T, H).astype(jnp.float32)

    # Additive attention-mask bias per key position: [B, S] (broadcast in-kernel).
    mask_bias = (1.0 - attention_mask.astype(jnp.float32)) * MASK_NEG

    bf16 = jnp.bfloat16

    def pad_last(a, width):
        return jnp.pad(a, [(0, 0)] * (a.ndim - 1) + [(0, width - a.shape[-1])])

    # bf16 weight slabs (halves DMA bytes; kernel accumulates in f32 on the MXU).
    wqkv = jnp.concatenate([params["wq"], params["wk"], params["wv"]],
                           axis=-1).astype(bf16)                          # [L, H, 3H]
    wo = params["wo"].astype(bf16)                                        # [L, H, H]
    w1 = params["w1"].astype(bf16)                                        # [L, H, F]
    w2 = params["w2"].astype(bf16)                                        # [L, F, H]
    whead = jnp.stack([params["wp"],
                       pad_last(params["wfc"], H)], axis=0).astype(bf16)  # [2, H, H]

    # All per-layer bias / LayerNorm vectors packed into ONE [L, 8, 3H] slab.
    lvecs = jnp.concatenate([
        jnp.concatenate([params["bq"], params["bk"], params["bv"]], axis=-1),
        pad_last(params["bo"], W3),
        pad_last(params["ln1_g"], W3),
        pad_last(params["ln1_b"], W3),
        pad_last(params["b1"], W3),
        pad_last(params["b2"], W3),
        pad_last(params["ln2_g"], W3),
        pad_last(params["ln2_b"], W3),
    ], axis=1).astype(jnp.float32)                                        # [L, 8, 3H]

    # Global H-sized vectors packed into one [4, H] slab.
    vech = jnp.concatenate([
        params["emb_ln_g"], params["emb_ln_b"], params["bp"],
        pad_last(params["bfc"], H),
    ], axis=0).astype(jnp.float32)                                        # [4, H]

    inputs = (x_emb, mask_bias, vech, wqkv, wo, lvecs, w1, w2, whead)

    flops = (L * (2 * T * H * W3 + 2 * T * H * H + 4 * T * H * F
                  + 4 * Z * S * S * HD)
             + 4 * B * H * H)
    transcendentals = L * (Z * S * S + T * F) + B * H
    bytes_accessed = (sum(int(a.size) * a.dtype.itemsize for a in inputs)
                      + B * NUM_CLASSES * 4)

    vmem = pl.BlockSpec(memory_space=pltpu.MemorySpace.VMEM)
    # TODO(synk): at real bert-base scale (H=768, L=12) switch to grid=(L,) with
    # per-layer streamed bf16 weights (pipeline_mode=pl.Buffered(2)), a "parallel"
    # token-grid axis so both v7x TensorCores are used, and an explicit
    # pltpu.CompilerParams(vmem_limit_bytes=...); at this toy scale (a few hundred
    # KiB) everything is VMEM-resident in one grid-less call.
    return pl.pallas_call(
        _bert_kernel,
        out_shape=jax.ShapeDtypeStruct((B, NUM_CLASSES), jnp.float32),
        in_specs=[vmem] * len(inputs),
        out_specs=vmem,
        cost_estimate=pl.CostEstimate(flops=flops,
                                      transcendentals=transcendentals,
                                      bytes_accessed=bytes_accessed),
    )(*inputs)


# --------------------------- deterministic params ------------------------------
def init_params(key):
    ks = jax.random.split(key, 12)
    sd = 0.02

    def nrm(k, shape):
        return (sd * jax.random.normal(k, shape)).astype(jnp.float32)

    ones = lambda shape: jnp.ones(shape, jnp.float32)
    zeros = lambda shape: jnp.zeros(shape, jnp.float32)

    return {
        "word_emb": nrm(ks[0], (VOCAB, H)),
        "pos_emb": nrm(ks[1], (S, H)),
        "type_emb": nrm(ks[2], (2, H)),
        "emb_ln_g": ones((1, H)), "emb_ln_b": zeros((1, H)),
        "wq": nrm(ks[3], (L, H, H)), "bq": zeros((L, 1, H)),
        "wk": nrm(ks[4], (L, H, H)), "bk": zeros((L, 1, H)),
        "wv": nrm(ks[5], (L, H, H)), "bv": zeros((L, 1, H)),
        "wo": nrm(ks[6], (L, H, H)), "bo": zeros((L, 1, H)),
        "ln1_g": ones((L, 1, H)), "ln1_b": zeros((L, 1, H)),
        "w1": nrm(ks[7], (L, H, F)), "b1": zeros((L, 1, F)),
        "w2": nrm(ks[8], (L, F, H)), "b2": zeros((L, 1, H)),
        "ln2_g": ones((L, 1, H)), "ln2_b": zeros((L, 1, H)),
        "wp": nrm(ks[9], (H, H)), "bp": zeros((1, H)),
        "wfc": nrm(ks[10], (H, NUM_CLASSES)), "bfc": zeros((1, NUM_CLASSES)),
    }


# ------------------------------ pure-JAX reference -----------------------------
def reference_forward(params, input_ids, attention_mask):
    pos = jnp.arange(S)
    emb = (params["word_emb"][input_ids]
           + params["pos_emb"][pos][None, :, :]
           + params["type_emb"][0][None, None, :])
    x = emb.reshape(T, H).astype(jnp.float32)
    mask_bias = (1.0 - attention_mask.astype(jnp.float32)) * MASK_NEG  # [B, S]
    x = _layernorm(x, params["emb_ln_g"], params["emb_ln_b"])
    scale = 1.0 / math.sqrt(HD)

    for l in range(L):
        q = x @ params["wq"][l] + params["bq"][l]
        k = x @ params["wk"][l] + params["bk"][l]
        v = x @ params["wv"][l] + params["bv"][l]
        rows = []
        for bi in range(B):
            ctx = jnp.zeros((S, H), jnp.float32)
            for h in range(NH):
                c0, c1 = h * HD, (h + 1) * HD
                r0, r1 = bi * S, (bi + 1) * S
                qh, kh, vh = q[r0:r1, c0:c1], k[r0:r1, c0:c1], v[r0:r1, c0:c1]
                scores = (qh @ kh.T) * scale + mask_bias[bi][None, :]
                p = _softmax_last_ref(scores)
                ctx = ctx + (p @ vh) @ params["wo"][l][c0:c1, :]
            rows.append(ctx)
        attn_out = jnp.concatenate(rows, axis=0) + params["bo"][l]
        x = _layernorm(x + attn_out, params["ln1_g"][l], params["ln1_b"][l])
        hmid = _gelu(x @ params["w1"][l] + params["b1"][l])
        ffn = hmid @ params["w2"][l] + params["b2"][l]
        x = _layernorm(x + ffn, params["ln2_g"][l], params["ln2_b"][l])

    cls = x.reshape(B, S, H)[:, 0, :]
    pooled = jnp.tanh(cls @ params["wp"] + params["bp"])
    return pooled @ params["wfc"] + params["bfc"]


# ----------------------------------- main --------------------------------------
if __name__ == "__main__":
    key = jax.random.PRNGKey(0)
    pkey, ikey = jax.random.split(key)
    params = init_params(pkey)

    input_ids = jax.random.randint(ikey, (B, S), 0, VOCAB, dtype=jnp.int32)
    attention_mask = jnp.ones((B, S), jnp.int32).at[1, 6:].set(0)  # pad last 2 tokens of batch 1

    out = multilingual_nlp_forward(params, input_ids, attention_mask)
    out = jax.block_until_ready(out)

    ref = reference_forward(params, input_ids, attention_mask)
    err = float(jnp.max(jnp.abs(out - ref)))
    assert out.shape == (B, NUM_CLASSES) and err < 1e-2, f"mismatch: max abs err = {err}"
    print("KERNEL_OK")
</pallas_src>

<mosaic_0001>
module attributes {stable_mosaic.version = 11 : i64} {
  func.func @_bert_kernel(%arg0: memref<16x32xf32, #tpu.memory_space<vmem>>, %arg1: memref<2x8xf32, #tpu.memory_space<vmem>>, %arg2: memref<4x32xf32, #tpu.memory_space<vmem>>, %arg3: memref<2x32x96xbf16, #tpu.memory_space<vmem>>, %arg4: memref<2x32x32xbf16, #tpu.memory_space<vmem>>, %arg5: memref<2x8x96xf32, #tpu.memory_space<vmem>>, %arg6: memref<2x32x64xbf16, #tpu.memory_space<vmem>>, %arg7: memref<2x64x32xbf16, #tpu.memory_space<vmem>>, %arg8: memref<2x32x32xbf16, #tpu.memory_space<vmem>>, %arg9: memref<2x2xf32, #tpu.memory_space<vmem>>) attributes {dimension_semantics = [], scalar_prefetch = 0 : i64, scratch_operands = 0 : i64, tpu.core_type = #tpu.core_type<tc>} {
    %c0 = arith.constant 0 : index
    %c0_0 = arith.constant 0 : index
    %0 = vector.load %arg1[%c0, %c0_0] : memref<2x8xf32, #tpu.memory_space<vmem>>, vector<2x8xf32>
    %1 = vector.shape_cast %0 : vector<2x8xf32> to vector<2x1x1x8xf32>
    %2 = vector.shape_cast %1 : vector<2x1x1x8xf32> to vector<2x1x1x8xf32>
    %3 = vector.broadcast %2 : vector<2x1x1x8xf32> to vector<2x4x8x8xf32>
    %4 = vector.shape_cast %3 : vector<2x4x8x8xf32> to vector<8x8x8xf32>
    %c0_1 = arith.constant 0 : index
    %c0_2 = arith.constant 0 : index
    %5 = vector.load %arg0[%c0_1, %c0_2] : memref<16x32xf32, #tpu.memory_space<vmem>>, vector<16x32xf32>
    %c0_3 = arith.constant 0 : index
    %c0_4 = arith.constant 0 : index
    %6 = vector.load %arg2[%c0_3, %c0_4] : memref<4x32xf32, #tpu.memory_space<vmem>>, vector<1x32xf32>
    %c1 = arith.constant 1 : index
    %c0_5 = arith.constant 0 : index
    %7 = vector.load %arg2[%c1, %c0_5] : memref<4x32xf32, #tpu.memory_space<vmem>>, vector<1x32xf32>
    %cst = arith.constant dense<0.000000e+00> : vector<16xf32>
    %8 = vector.multi_reduction <add>, %5, %cst [1] : vector<16x32xf32> to vector<16xf32>
    %9 = vector.shape_cast %8 : vector<16xf32> to vector<16x1xf32>
    %cst_6 = arith.constant 3.200000e+01 : f32
    %10 = vector.broadcast %cst_6 : f32 to vector<16x1xf32>
    %11 = arith.divf %9, %10 : vector<16x1xf32>
    %12 = vector.broadcast %11 : vector<16x1xf32> to vector<16x32xf32>
    %13 = arith.subf %5, %12 : vector<16x32xf32>
    %14 = arith.mulf %13, %13 : vector<16x32xf32>
    %cst_7 = arith.constant dense<0.000000e+00> : vector<16xf32>
    %15 = vector.multi_reduction <add>, %14, %cst_7 [1] : vector<16x32xf32> to vector<16xf32>
    %16 = vector.shape_cast %15 : vector<16xf32> to vector<16x1xf32>
    %cst_8 = arith.constant 3.200000e+01 : f32
    %17 = vector.broadcast %cst_8 : f32 to vector<16x1xf32>
    %18 = arith.divf %16, %17 : vector<16x1xf32>
    %19 = vector.broadcast %11 : vector<16x1xf32> to vector<16x32xf32>
    %20 = arith.subf %5, %19 : vector<16x32xf32>
    %cst_9 = arith.constant 9.99999996E-13 : f32
    %21 = vector.broadcast %cst_9 : f32 to vector<16x1xf32>
    %22 = arith.addf %18, %21 : vector<16x1xf32>
    %23 = math.rsqrt %22 : vector<16x1xf32>
    %24 = vector.broadcast %23 : vector<16x1xf32> to vector<16x32xf32>
    %25 = arith.mulf %20, %24 : vector<16x32xf32>
    %26 = vector.broadcast %6 : vector<1x32xf32> to vector<16x32xf32>
    %27 = arith.mulf %25, %26 : vector<16x32xf32>
    %28 = vector.broadcast %7 : vector<1x32xf32> to vector<16x32xf32>
    %29 = arith.addf %27, %28 : vector<16x32xf32>
    %30 = arith.truncf %29 : vector<16x32xf32> to vector<16x32xbf16>
    %c0_10 = arith.constant 0 : index
    %c0_11 = arith.constant 0 : index
    %c0_12 = arith.constant 0 : index
    %31 = vector.load %arg3[%c0_10, %c0_11, %c0_12] : memref<2x32x96xbf16, #tpu.memory_space<vmem>>, vector<1x32x96xbf16>
    %32 = vector.shape_cast %31 : vector<1x32x96xbf16> to vector<32x96xbf16>
    %cst_13 = arith.constant dense<0.000000e+00> : vector<16x96xf32>
    %33 = tpu.matmul %30, %32, %cst_13 {dimension_numbers = #tpu.dot_dimension_numbers<[1], [0], [0], [1], [0, 0, 1, 1], [], []>} : vector<16x32xbf16>, vector<32x96xbf16>, vector<16x96xf32> -> vector<16x96xf32>
    %c0_14 = arith.constant 0 : index
    %c0_15 = arith.constant 0 : index
    %c0_16 = arith.constant 0 : index
    %34 = vector.load %arg5[%c0_14, %c0_15, %c0_16] : memref<2x8x96xf32, #tpu.memory_space<vmem>>, vector<1x1x96xf32>
    %35 = vector.shape_cast %34 : vector<1x1x96xf32> to vector<1x96xf32>
    %36 = vector.broadcast %35 : vector<1x96xf32> to vector<16x96xf32>
    %37 = arith.addf %33, %36 : vector<16x96xf32>
    %38 = vector.shape_cast %37 : vector<16x96xf32> to vector<2x8x12x8xf32>
    %39 = tpu.transpose %38, [0, 2, 1, 3] : vector<2x8x12x8xf32> -> vector<2x12x8x8xf32>
    %40 = vector.shape_cast %39 : vector<2x12x8x8xf32> to vector<2x3x4x8x8xf32>
    %41 = vector.extract_strided_slice %40 {offsets = [0, 0, 0, 0, 0], sizes = [2, 1, 4, 8, 8], strides = [1, 1, 1, 1, 1]} : vector<2x3x4x8x8xf32> to vector<2x1x4x8x8xf32>
    %42 = vector.shape_cast %41 : vector<2x1x4x8x8xf32> to vector<2x4x8x8xf32>
    %43 = vector.shape_cast %42 : vector<2x4x8x8xf32> to vector<8x8x8xf32>
    %44 = vector.extract_strided_slice %40 {offsets = [0, 1, 0, 0, 0], sizes = [2, 1, 4, 8, 8], strides = [1, 1, 1, 1, 1]} : vector<2x3x4x8x8xf32> to vector<2x1x4x8x8xf32>
    %45 = vector.shape_cast %44 : vector<2x1x4x8x8xf32> to vector<2x4x8x8xf32>
    %46 = vector.shape_cast %45 : vector<2x4x8x8xf32> to vector<8x8x8xf32>
    %47 = vector.extract_strided_slice %40 {offsets = [0, 2, 0, 0, 0], sizes = [2, 1, 4, 8, 8], strides = [1, 1, 1, 1, 1]} : vector<2x3x4x8x8xf32> to vector<2x1x4x8x8xf32>
    %48 = vector.shape_cast %47 : vector<2x1x4x8x8xf32> to vector<2x4x8x8xf32>
    %49 = vector.shape_cast %48 : vector<2x4x8x8xf32> to vector<8x8x8xf32>
    %50 = arith.truncf %43 : vector<8x8x8xf32> to vector<8x8x8xbf16>
    %51 = arith.truncf %46 : vector<8x8x8xf32> to vector<8x8x8xbf16>
    "tpu.trace_start"() <{level = 10 : i32, message = "zqd,zkd->zqk"}> : () -> ()
    %cst_17 = arith.constant dense<0.000000e+00> : vector<8x8x8xf32>
    %52 = tpu.matmul %50, %51, %cst_17 {dimension_numbers = #tpu.dot_dimension_numbers<[2], [2], [1], [1], [0, 0, 0, 1, 1, 1], [0], [0]>} : vector<8x8x8xbf16>, vector<8x8x8xbf16>, vector<8x8x8xf32> -> vector<8x8x8xf32>
    "tpu.trace_stop"() : () -> ()
    %cst_18 = arith.constant 0.353553385 : f32
    %53 = vector.broadcast %cst_18 : f32 to vector<8x8x8xf32>
    %54 = arith.mulf %52, %53 : vector<8x8x8xf32>
    %55 = arith.addf %54, %4 : vector<8x8x8xf32>
    %cst_19 = arith.constant dense<0xFF800000> : vector<8x8xf32>
    %56 = vector.multi_reduction <maximumf>, %55, %cst_19 [2] : vector<8x8x8xf32> to vector<8x8xf32>
    %57 = vector.shape_cast %56 : vector<8x8xf32> to vector<8x8x1xf32>
    %58 = vector.broadcast %57 : vector<8x8x1xf32> to vector<8x8x8xf32>
    %59 = arith.subf %55, %58 : vector<8x8x8xf32>
    %60 = math.exp %59 : vector<8x8x8xf32>
    %cst_20 = arith.constant dense<0.000000e+00> : vector<8x8xf32>
    %61 = vector.multi_reduction <add>, %60, %cst_20 [2] : vector<8x8x8xf32> to vector<8x8xf32>
    %62 = vector.shape_cast %61 : vector<8x8xf32> to vector<8x8x1xf32>
    %63 = tpu.reciprocal %62 {approx = true} : vector<8x8x1xf32> -> vector<8x8x1xf32>
    %64 = vector.broadcast %63 : vector<8x8x1xf32> to vector<8x8x8xf32>
    %65 = arith.mulf %60, %64 : vector<8x8x8xf32>
    %66 = arith.truncf %65 : vector<8x8x8xf32> to vector<8x8x8xbf16>
    %67 = arith.truncf %49 : vector<8x8x8xf32> to vector<8x8x8xbf16>
    "tpu.trace_start"() <{level = 10 : i32, message = "zqk,zkd->zqd"}> : () -> ()
    %cst_21 = arith.constant dense<0.000000e+00> : vector<8x8x8xf32>
    %68 = tpu.matmul %66, %67, %cst_21 {dimension_numbers = #tpu.dot_dimension_numbers<[2], [1], [1], [2], [0, 0, 0, 1, 1, 2], [0], [0]>} : vector<8x8x8xbf16>, vector<8x8x8xbf16>, vector<8x8x8xf32> -> vector<8x8x8xf32>
    "tpu.trace_stop"() : () -> ()
    %69 = vector.shape_cast %68 : vector<8x8x8xf32> to vector<2x4x8x8xf32>
    %70 = tpu.transpose %69, [0, 2, 1, 3] : vector<2x4x8x8xf32> -> vector<2x8x4x8xf32>
    %71 = vector.shape_cast %70 : vector<2x8x4x8xf32> to vector<16x32xf32>
    %72 = arith.truncf %71 : vector<16x32xf32> to vector<16x32xbf16>
    %c0_22 = arith.constant 0 : index
    %c0_23 = arith.constant 0 : index
    %c0_24 = arith.constant 0 : index
    %73 = vector.load %arg4[%c0_22, %c0_23, %c0_24] : memref<2x32x32xbf16, #tpu.memory_space<vmem>>, vector<1x32x32xbf16>
    %74 = vector.shape_cast %73 : vector<1x32x32xbf16> to vector<32x32xbf16>
    %cst_25 = arith.constant dense<0.000000e+00> : vector<16x32xf32>
    %75 = tpu.matmul %72, %74, %cst_25 {dimension_numbers = #tpu.dot_dimension_numbers<[1], [0], [0], [1], [0, 0, 1, 1], [], []>} : vector<16x32xbf16>, vector<32x32xbf16>, vector<16x32xf32> -> vector<16x32xf32>
    %c0_26 = arith.constant 0 : index
    %c1_27 = arith.constant 1 : index
    %c0_28 = arith.constant 0 : index
    %76 = vector.load %arg5[%c0_26, %c1_27, %c0_28] : memref<2x8x96xf32, #tpu.memory_space<vmem>>, vector<1x1x32xf32>
    %77 = vector.shape_cast %76 : vector<1x1x32xf32> to vector<1x32xf32>
    %78 = vector.broadcast %77 : vector<1x32xf32> to vector<16x32xf32>
    %79 = arith.addf %75, %78 : vector<16x32xf32>
    %80 = arith.addf %29, %79 : vector<16x32xf32>
    %c0_29 = arith.constant 0 : index
    %c2 = arith.constant 2 : index
    %c0_30 = arith.constant 0 : index
    %81 = vector.load %arg5[%c0_29, %c2, %c0_30] : memref<2x8x96xf32, #tpu.memory_space<vmem>>, vector<1x1x32xf32>
    %82 = vector.shape_cast %81 : vector<1x1x32xf32> to vector<1x32xf32>
    %c0_31 = arith.constant 0 : index
    %c3 = arith.constant 3 : index
    %c0_32 = arith.constant 0 : index
    %83 = vector.load %arg5[%c0_31, %c3, %c0_32] : memref<2x8x96xf32, #tpu.memory_space<vmem>>, vector<1x1x32xf32>
    %84 = vector.shape_cast %83 : vector<1x1x32xf32> to vector<1x32xf32>
    %cst_33 = arith.constant dense<0.000000e+00> : vector<16xf32>
    %85 = vector.multi_reduction <add>, %80, %cst_33 [1] : vector<16x32xf32> to vector<16xf32>
    %86 = vector.shape_cast %85 : vector<16xf32> to vector<16x1xf32>
    %cst_34 = arith.constant 3.200000e+01 : f32
    %87 = vector.broadcast %cst_34 : f32 to vector<16x1xf32>
    %88 = arith.divf %86, %87 : vector<16x1xf32>
    %89 = vector.broadcast %88 : vector<16x1xf32> to vector<16x32xf32>
    %90 = arith.subf %80, %89 : vector<16x32xf32>
    %91 = arith.mulf %90, %90 : vector<16x32xf32>
    %cst_35 = arith.constant dense<0.000000e+00> : vector<16xf32>
    %92 = vector.multi_reduction <add>, %91, %cst_35 [1] : vector<16x32xf32> to vector<16xf32>
    %93 = vector.shape_cast %92 : vector<16xf32> to vector<16x1xf32>
    %cst_36 = arith.constant 3.200000e+01 : f32
    %94 = vector.broadcast %cst_36 : f32 to vector<16x1xf32>
    %95 = arith.divf %93, %94 : vector<16x1xf32>
    %96 = vector.broadcast %88 : vector<16x1xf32> to vector<16x32xf32>
    %97 = arith.subf %80, %96 : vector<16x32xf32>
    %cst_37 = arith.constant 9.99999996E-13 : f32
    %98 = vector.broadcast %cst_37 : f32 to vector<16x1xf32>
    %99 = arith.addf %95, %98 : vector<16x1xf32>
    %100 = math.rsqrt %99 : vector<16x1xf32>
    %101 = vector.broadcast %100 : vector<16x1xf32> to vector<16x32xf32>
    %102 = arith.mulf %97, %101 : vector<16x32xf32>
    %103 = vector.broadcast %82 : vector<1x32xf32> to vector<16x32xf32>
    %104 = arith.mulf %102, %103 : vector<16x32xf32>
    %105 = vector.broadcast %84 : vector<1x32xf32> to vector<16x32xf32>
    %106 = arith.addf %104, %105 : vector<16x32xf32>
    %107 = arith.truncf %106 : vector<16x32xf32> to vector<16x32xbf16>
    %c0_38 = arith.constant 0 : index
    %c0_39 = arith.constant 0 : index
    %c0_40 = arith.constant 0 : index
    %108 = vector.load %arg6[%c0_38, %c0_39, %c0_40] : memref<2x32x64xbf16, #tpu.memory_space<vmem>>, vector<1x32x64xbf16>
    %109 = vector.shape_cast %108 : vector<1x32x64xbf16> to vector<32x64xbf16>
    %cst_41 = arith.constant dense<0.000000e+00> : vector<16x64xf32>
    %110 = tpu.matmul %107, %109, %cst_41 {dimension_numbers = #tpu.dot_dimension_numbers<[1], [0], [0], [1], [0, 0, 1, 1], [], []>} : vector<16x32xbf16>, vector<32x64xbf16>, vector<16x64xf32> -> vector<16x64xf32>
    %c0_42 = arith.constant 0 : index
    %c4 = arith.constant 4 : index
    %c0_43 = arith.constant 0 : index
    %111 = vector.load %arg5[%c0_42, %c4, %c0_43] : memref<2x8x96xf32, #tpu.memory_space<vmem>>, vector<1x1x64xf32>
    %112 = vector.shape_cast %111 : vector<1x1x64xf32> to vector<1x64xf32>
    %113 = vector.broadcast %112 : vector<1x64xf32> to vector<16x64xf32>
    %114 = arith.addf %110, %113 : vector<16x64xf32>
    %cst_44 = arith.constant 5.000000e-01 : f32
    %115 = vector.broadcast %cst_44 : f32 to vector<16x64xf32>
    %116 = arith.mulf %115, %114 : vector<16x64xf32>
    %cst_45 = arith.constant 4.471500e-02 : f32
    %117 = vector.broadcast %cst_45 : f32 to vector<16x64xf32>
    %118 = arith.mulf %117, %114 : vector<16x64xf32>
    %119 = arith.mulf %118, %114 : vector<16x64xf32>
    %120 = arith.mulf %119, %114 : vector<16x64xf32>
    %121 = arith.addf %114, %120 : vector<16x64xf32>
    %cst_46 = arith.constant 0.797884583 : f32
    %122 = vector.broadcast %cst_46 : f32 to vector<16x64xf32>
    %123 = arith.mulf %122, %121 : vector<16x64xf32>
    %124 = math.tanh %123 : vector<16x64xf32>
    %cst_47 = arith.constant 1.000000e+00 : f32
    %125 = vector.broadcast %cst_47 : f32 to vector<16x64xf32>
    %126 = arith.addf %125, %124 : vector<16x64xf32>
    %127 = arith.mulf %116, %126 : vector<16x64xf32>
    %128 = arith.truncf %127 : vector<16x64xf32> to vector<16x64xbf16>
    %c0_48 = arith.constant 0 : index
    %c0_49 = arith.constant 0 : index
    %c0_50 = arith.constant 0 : index
    %129 = vector.load %arg7[%c0_48, %c0_49, %c0_50] : memref<2x64x32xbf16, #tpu.memory_space<vmem>>, vector<1x64x32xbf16>
    %130 = vector.shape_cast %129 : vector<1x64x32xbf16> to vector<64x32xbf16>
    %cst_51 = arith.constant dense<0.000000e+00> : vector<16x32xf32>
    %131 = tpu.matmul %128, %130, %cst_51 {dimension_numbers = #tpu.dot_dimension_numbers<[1], [0], [0], [1], [0, 0, 1, 1], [], []>} : vector<16x64xbf16>, vector<64x32xbf16>, vector<16x32xf32> -> vector<16x32xf32>
    %c0_52 = arith.constant 0 : index
    %c5 = arith.constant 5 : index
    %c0_53 = arith.constant 0 : index
    %132 = vector.load %arg5[%c0_52, %c5, %c0_53] : memref<2x8x96xf32, #tpu.memory_space<vmem>>, vector<1x1x32xf32>
    %133 = vector.shape_cast %132 : vector<1x1x32xf32> to vector<1x32xf32>
    %134 = vector.broadcast %133 : vector<1x32xf32> to vector<16x32xf32>
    %135 = arith.addf %131, %134 : vector<16x32xf32>
    %136 = arith.addf %106, %135 : vector<16x32xf32>
    %c0_54 = arith.constant 0 : index
    %c6 = arith.constant 6 : index
    %c0_55 = arith.constant 0 : index
    %137 = vector.load %arg5[%c0_54, %c6, %c0_55] : memref<2x8x96xf32, #tpu.memory_space<vmem>>, vector<1x1x32xf32>
    %138 = vector.shape_cast %137 : vector<1x1x32xf32> to vector<1x32xf32>
    %c0_56 = arith.constant 0 : index
    %c7 = arith.constant 7 : index
    %c0_57 = arith.constant 0 : index
    %139 = vector.load %arg5[%c0_56, %c7, %c0_57] : memref<2x8x96xf32, #tpu.memory_space<vmem>>, vector<1x1x32xf32>
    %140 = vector.shape_cast %139 : vector<1x1x32xf32> to vector<1x32xf32>
    %cst_58 = arith.constant dense<0.000000e+00> : vector<16xf32>
    %141 = vector.multi_reduction <add>, %136, %cst_58 [1] : vector<16x32xf32> to vector<16xf32>
    %142 = vector.shape_cast %141 : vector<16xf32> to vector<16x1xf32>
    %cst_59 = arith.constant 3.200000e+01 : f32
    %143 = vector.broadcast %cst_59 : f32 to vector<16x1xf32>
    %144 = arith.divf %142, %143 : vector<16x1xf32>
    %145 = vector.broadcast %144 : vector<16x1xf32> to vector<16x32xf32>
    %146 = arith.subf %136, %145 : vector<16x32xf32>
    %147 = arith.mulf %146, %146 : vector<16x32xf32>
    %cst_60 = arith.constant dense<0.000000e+00> : vector<16xf32>
    %148 = vector.multi_reduction <add>, %147, %cst_60 [1] : vector<16x32xf32> to vector<16xf32>
    %149 = vector.shape_cast %148 : vector<16xf32> to vector<16x1xf32>
    %cst_61 = arith.constant 3.200000e+01 : f32
    %150 = vector.broadcast %cst_61 : f32 to vector<16x1xf32>
    %151 = arith.divf %149, %150 : vector<16x1xf32>
    %152 = vector.broadcast %144 : vector<16x1xf32> to vector<16x32xf32>
    %153 = arith.subf %136, %152 : vector<16x32xf32>
    %cst_62 = arith.constant 9.99999996E-13 : f32
    %154 = vector.broadcast %cst_62 : f32 to vector<16x1xf32>
    %155 = arith.addf %151, %154 : vector<16x1xf32>
    %156 = math.rsqrt %155 : vector<16x1xf32>
    %157 = vector.broadcast %156 : vector<16x1xf32> to vector<16x32xf32>
    %158 = arith.mulf %153, %157 : vector<16x32xf32>
    %159 = vector.broadcast %138 : vector<1x32xf32> to vector<16x32xf32>
    %160 = arith.mulf %158, %159 : vector<16x32xf32>
    %161 = vector.broadcast %140 : vector<1x32xf32> to vector<16x32xf32>
    %162 = arith.addf %160, %161 : vector<16x32xf32>
    %163 = arith.truncf %162 : vector<16x32xf32> to vector<16x32xbf16>
    %c1_63 = arith.constant 1 : index
    %c0_64 = arith.constant 0 : index
    %c0_65 = arith.constant 0 : index
    %164 = vector.load %arg3[%c1_63, %c0_64, %c0_65] : memref<2x32x96xbf16, #tpu.memory_space<vmem>>, vector<1x32x96xbf16>
    %165 = vector.shape_cast %164 : vector<1x32x96xbf16> to vector<32x96xbf16>
    %cst_66 = arith.constant dense<0.000000e+00> : vector<16x96xf32>
    %166 = tpu.matmul %163, %165, %cst_66 {dimension_numbers = #tpu.dot_dimension_numbers<[1], [0], [0], [1], [0, 0, 1, 1], [], []>} : vector<16x32xbf16>, vector<32x96xbf16>, vector<16x96xf32> -> vector<16x96xf32>
    %c1_67 = arith.constant 1 : index
    %c0_68 = arith.constant 0 : index
    %c0_69 = arith.constant 0 : index
    %167 = vector.load %arg5[%c1_67, %c0_68, %c0_69] : memref<2x8x96xf32, #tpu.memory_space<vmem>>, vector<1x1x96xf32>
    %168 = vector.shape_cast %167 : vector<1x1x96xf32> to vector<1x96xf32>
    %169 = vector.broadcast %168 : vector<1x96xf32> to vector<16x96xf32>
    %170 = arith.addf %166, %169 : vector<16x96xf32>
    %171 = vector.shape_cast %170 : vector<16x96xf32> to vector<2x8x12x8xf32>
    %172 = tpu.transpose %171, [0, 2, 1, 3] : vector<2x8x12x8xf32> -> vector<2x12x8x8xf32>
    %173 = vector.shape_cast %172 : vector<2x12x8x8xf32> to vector<2x3x4x8x8xf32>
    %174 = vector.extract_strided_slice %173 {offsets = [0, 0, 0, 0, 0], sizes = [2, 1, 4, 8, 8], strides = [1, 1, 1, 1, 1]} : vector<2x3x4x8x8xf32> to vector<2x1x4x8x8xf32>
    %175 = vector.shape_cast %174 : vector<2x1x4x8x8xf32> to vector<2x4x8x8xf32>
    %176 = vector.shape_cast %175 : vector<2x4x8x8xf32> to vector<8x8x8xf32>
    %177 = vector.extract_strided_slice %173 {offsets = [0, 1, 0, 0, 0], sizes = [2, 1, 4, 8, 8], strides = [1, 1, 1, 1, 1]} : vector<2x3x4x8x8xf32> to vector<2x1x4x8x8xf32>
    %178 = vector.shape_cast %177 : vector<2x1x4x8x8xf32> to vector<2x4x8x8xf32>
    %179 = vector.shape_cast %178 : vector<2x4x8x8xf32> to vector<8x8x8xf32>
    %180 = vector.extract_strided_slice %173 {offsets = [0, 2, 0, 0, 0], sizes = [2, 1, 4, 8, 8], strides = [1, 1, 1, 1, 1]} : vector<2x3x4x8x8xf32> to vector<2x1x4x8x8xf32>
    %181 = vector.shape_cast %180 : vector<2x1x4x8x8xf32> to vector<2x4x8x8xf32>
    %182 = vector.shape_cast %181 : vector<2x4x8x8xf32> to vector<8x8x8xf32>
    %183 = arith.truncf %176 : vector<8x8x8xf32> to vector<8x8x8xbf16>
    %184 = arith.truncf %179 : vector<8x8x8xf32> to vector<8x8x8xbf16>
    "tpu.trace_start"() <{level = 10 : i32, message = "zqd,zkd->zqk"}> : () -> ()
    %cst_70 = arith.constant dense<0.000000e+00> : vector<8x8x8xf32>
    %185 = tpu.matmul %183, %184, %cst_70 {dimension_numbers = #tpu.dot_dimension_numbers<[2], [2], [1], [1], [0, 0, 0, 1, 1, 1], [0], [0]>} : vector<8x8x8xbf16>, vector<8x8x8xbf16>, vector<8x8x8xf32> -> vector<8x8x8xf32>
    "tpu.trace_stop"() : () -> ()
    %cst_71 = arith.constant 0.353553385 : f32
    %186 = vector.broadcast %cst_71 : f32 to vector<8x8x8xf32>
    %187 = arith.mulf %185, %186 : vector<8x8x8xf32>
    %188 = arith.addf %187, %4 : vector<8x8x8xf32>
    %cst_72 = arith.constant dense<0xFF800000> : vector<8x8xf32>
    %189 = vector.multi_reduction <maximumf>, %188, %cst_72 [2] : vector<8x8x8xf32> to vector<8x8xf32>
    %190 = vector.shape_cast %189 : vector<8x8xf32> to vector<8x8x1xf32>
    %191 = vector.broadcast %190 : vector<8x8x1xf32> to vector<8x8x8xf32>
    %192 = arith.subf %188, %191 : vector<8x8x8xf32>
    %193 = math.exp %192 : vector<8x8x8xf32>
    %cst_73 = arith.constant dense<0.000000e+00> : vector<8x8xf32>
    %194 = vector.multi_reduction <add>, %193, %cst_73 [2] : vector<8x8x8xf32> to vector<8x8xf32>
    %195 = vector.shape_cast %194 : vector<8x8xf32> to vector<8x8x1xf32>
    %196 = tpu.reciprocal %195 {approx = true} : vector<8x8x1xf32> -> vector<8x8x1xf32>
    %197 = vector.broadcast %196 : vector<8x8x1xf32> to vector<8x8x8xf32>
    %198 = arith.mulf %193, %197 : vector<8x8x8xf32>
    %199 = arith.truncf %198 : vector<8x8x8xf32> to vector<8x8x8xbf16>
    %200 = arith.truncf %182 : vector<8x8x8xf32> to vector<8x8x8xbf16>
    "tpu.trace_start"() <{level = 10 : i32, message = "zqk,zkd->zqd"}> : () -> ()
    %cst_74 = arith.constant dense<0.000000e+00> : vector<8x8x8xf32>
    %201 = tpu.matmul %199, %200, %cst_74 {dimension_numbers = #tpu.dot_dimension_numbers<[2], [1], [1], [2], [0, 0, 0, 1, 1, 2], [0], [0]>} : vector<8x8x8xbf16>, vector<8x8x8xbf16>, vector<8x8x8xf32> -> vector<8x8x8xf32>
    "tpu.trace_stop"() : () -> ()
    %202 = vector.shape_cast %201 : vector<8x8x8xf32> to vector<2x4x8x8xf32>
    %203 = tpu.transpose %202, [0, 2, 1, 3] : vector<2x4x8x8xf32> -> vector<2x8x4x8xf32>
    %204 = vector.shape_cast %203 : vector<2x8x4x8xf32> to vector<16x32xf32>
    %205 = arith.truncf %204 : vector<16x32xf32> to vector<16x32xbf16>
    %c1_75 = arith.constant 1 : index
    %c0_76 = arith.constant 0 : index
    %c0_77 = arith.constant 0 : index
    %206 = vector.load %arg4[%c1_75, %c0_76, %c0_77] : memref<2x32x32xbf16, #tpu.memory_space<vmem>>, vector<1x32x32xbf16>
    %207 = vector.shape_cast %206 : vector<1x32x32xbf16> to vector<32x32xbf16>
    %cst_78 = arith.constant dense<0.000000e+00> : vector<16x32xf32>
    %208 = tpu.matmul %205, %207, %cst_78 {dimension_numbers = #tpu.dot_dimension_numbers<[1], [0], [0], [1], [0, 0, 1, 1], [], []>} : vector<16x32xbf16>, vector<32x32xbf16>, vector<16x32xf32> -> vector<16x32xf32>
    %c1_79 = arith.constant 1 : index
    %c1_80 = arith.constant 1 : index
    %c0_81 = arith.constant 0 : index
    %209 = vector.load %arg5[%c1_79, %c1_80, %c0_81] : memref<2x8x96xf32, #tpu.memory_space<vmem>>, vector<1x1x32xf32>
    %210 = vector.shape_cast %209 : vector<1x1x32xf32> to vector<1x32xf32>
    %211 = vector.broadcast %210 : vector<1x32xf32> to vector<16x32xf32>
    %212 = arith.addf %208, %211 : vector<16x32xf32>
    %213 = arith.addf %162, %212 : vector<16x32xf32>
    %c1_82 = arith.constant 1 : index
    %c2_83 = arith.constant 2 : index
    %c0_84 = arith.constant 0 : index
    %214 = vector.load %arg5[%c1_82, %c2_83, %c0_84] : memref<2x8x96xf32, #tpu.memory_space<vmem>>, vector<1x1x32xf32>
    %215 = vector.shape_cast %214 : vector<1x1x32xf32> to vector<1x32xf32>
    %c1_85 = arith.constant 1 : index
    %c3_86 = arith.constant 3 : index
    %c0_87 = arith.constant 0 : index
    %216 = vector.load %arg5[%c1_85, %c3_86, %c0_87] : memref<2x8x96xf32, #tpu.memory_space<vmem>>, vector<1x1x32xf32>
    %217 = vector.shape_cast %216 : vector<1x1x32xf32> to vector<1x32xf32>
    %cst_88 = arith.constant dense<0.000000e+00> : vector<16xf32>
    %218 = vector.multi_reduction <add>, %213, %cst_88 [1] : vector<16x32xf32> to vector<16xf32>
    %219 = vector.shape_cast %218 : vector<16xf32> to vector<16x1xf32>
    %cst_89 = arith.constant 3.200000e+01 : f32
    %220 = vector.broadcast %cst_89 : f32 to vector<16x1xf32>
    %221 = arith.divf %219, %220 : vector<16x1xf32>
    %222 = vector.broadcast %221 : vector<16x1xf32> to vector<16x32xf32>
    %223 = arith.subf %213, %222 : vector<16x32xf32>
    %224 = arith.mulf %223, %223 : vector<16x32xf32>
    %cst_90 = arith.constant dense<0.000000e+00> : vector<16xf32>
    %225 = vector.multi_reduction <add>, %224, %cst_90 [1] : vector<16x32xf32> to vector<16xf32>
    %226 = vector.shape_cast %225 : vector<16xf32> to vector<16x1xf32>
    %cst_91 = arith.constant 3.200000e+01 : f32
    %227 = vector.broadcast %cst_91 : f32 to vector<16x1xf32>
    %228 = arith.divf %226, %227 : vector<16x1xf32>
    %229 = vector.broadcast %221 : vector<16x1xf32> to vector<16x32xf32>
    %230 = arith.subf %213, %229 : vector<16x32xf32>
    %cst_92 = arith.constant 9.99999996E-13 : f32
    %231 = vector.broadcast %cst_92 : f32 to vector<16x1xf32>
    %232 = arith.addf %228, %231 : vector<16x1xf32>
    %233 = math.rsqrt %232 : vector<16x1xf32>
    %234 = vector.broadcast %233 : vector<16x1xf32> to vector<16x32xf32>
    %235 = arith.mulf %230, %234 : vector<16x32xf32>
    %236 = vector.broadcast %215 : vector<1x32xf32> to vector<16x32xf32>
    %237 = arith.mulf %235, %236 : vector<16x32xf32>
    %238 = vector.broadcast %217 : vector<1x32xf32> to vector<16x32xf32>
    %239 = arith.addf %237, %238 : vector<16x32xf32>
    %240 = arith.truncf %239 : vector<16x32xf32> to vector<16x32xbf16>
    %c1_93 = arith.constant 1 : index
    %c0_94 = arith.constant 0 : index
    %c0_95 = arith.constant 0 : index
    %241 = vector.load %arg6[%c1_93, %c0_94, %c0_95] : memref<2x32x64xbf16, #tpu.memory_space<vmem>>, vector<1x32x64xbf16>
    %242 = vector.shape_cast %241 : vector<1x32x64xbf16> to vector<32x64xbf16>
    %cst_96 = arith.constant dense<0.000000e+00> : vector<16x64xf32>
    %243 = tpu.matmul %240, %242, %cst_96 {dimension_numbers = #tpu.dot_dimension_numbers<[1], [0], [0], [1], [0, 0, 1, 1], [], []>} : vector<16x32xbf16>, vector<32x64xbf16>, vector<16x64xf32> -> vector<16x64xf32>
    %c1_97 = arith.constant 1 : index
    %c4_98 = arith.constant 4 : index
    %c0_99 = arith.constant 0 : index
    %244 = vector.load %arg5[%c1_97, %c4_98, %c0_99] : memref<2x8x96xf32, #tpu.memory_space<vmem>>, vector<1x1x64xf32>
    %245 = vector.shape_cast %244 : vector<1x1x64xf32> to vector<1x64xf32>
    %246 = vector.broadcast %245 : vector<1x64xf32> to vector<16x64xf32>
    %247 = arith.addf %243, %246 : vector<16x64xf32>
    %cst_100 = arith.constant 5.000000e-01 : f32
    %248 = vector.broadcast %cst_100 : f32 to vector<16x64xf32>
    %249 = arith.mulf %248, %247 : vector<16x64xf32>
    %cst_101 = arith.constant 4.471500e-02 : f32
    %250 = vector.broadcast %cst_101 : f32 to vector<16x64xf32>
    %251 = arith.mulf %250, %247 : vector<16x64xf32>
    %252 = arith.mulf %251, %247 : vector<16x64xf32>
    %253 = arith.mulf %252, %247 : vector<16x64xf32>
    %254 = arith.addf %247, %253 : vector<16x64xf32>
    %cst_102 = arith.constant 0.797884583 : f32
    %255 = vector.broadcast %cst_102 : f32 to vector<16x64xf32>
    %256 = arith.mulf %255, %254 : vector<16x64xf32>
    %257 = math.tanh %256 : vector<16x64xf32>
    %cst_103 = arith.constant 1.000000e+00 : f32
    %258 = vector.broadcast %cst_103 : f32 to vector<16x64xf32>
    %259 = arith.addf %258, %257 : vector<16x64xf32>
    %260 = arith.mulf %249, %259 : vector<16x64xf32>
    %261 = arith.truncf %260 : vector<16x64xf32> to vector<16x64xbf16>
    %c1_104 = arith.constant 1 : index
    %c0_105 = arith.constant 0 : index
    %c0_106 = arith.constant 0 : index
    %262 = vector.load %arg7[%c1_104, %c0_105, %c0_106] : memref<2x64x32xbf16, #tpu.memory_space<vmem>>, vector<1x64x32xbf16>
    %263 = vector.shape_cast %262 : vector<1x64x32xbf16> to vector<64x32xbf16>
    %cst_107 = arith.constant dense<0.000000e+00> : vector<16x32xf32>
    %264 = tpu.matmul %261, %263, %cst_107 {dimension_numbers = #tpu.dot_dimension_numbers<[1], [0], [0], [1], [0, 0, 1, 1], [], []>} : vector<16x64xbf16>, vector<64x32xbf16>, vector<16x32xf32> -> vector<16x32xf32>
    %c1_108 = arith.constant 1 : index
    %c5_109 = arith.constant 5 : index
    %c0_110 = arith.constant 0 : index
    %265 = vector.load %arg5[%c1_108, %c5_109, %c0_110] : memref<2x8x96xf32, #tpu.memory_space<vmem>>, vector<1x1x32xf32>
    %266 = vector.shape_cast %265 : vector<1x1x32xf32> to vector<1x32xf32>
    %267 = vector.broadcast %266 : vector<1x32xf32> to vector<16x32xf32>
    %268 = arith.addf %264, %267 : vector<16x32xf32>
    %269 = arith.addf %239, %268 : vector<16x32xf32>
    %c1_111 = arith.constant 1 : index
    %c6_112 = arith.constant 6 : index
    %c0_113 = arith.constant 0 : index
    %270 = vector.load %arg5[%c1_111, %c6_112, %c0_113] : memref<2x8x96xf32, #tpu.memory_space<vmem>>, vector<1x1x32xf32>
    %271 = vector.shape_cast %270 : vector<1x1x32xf32> to vector<1x32xf32>
    %c1_114 = arith.constant 1 : index
    %c7_115 = arith.constant 7 : index
    %c0_116 = arith.constant 0 : index
    %272 = vector.load %arg5[%c1_114, %c7_115, %c0_116] : memref<2x8x96xf32, #tpu.memory_space<vmem>>, vector<1x1x32xf32>
    %273 = vector.shape_cast %272 : vector<1x1x32xf32> to vector<1x32xf32>
    %cst_117 = arith.constant dense<0.000000e+00> : vector<16xf32>
    %274 = vector.multi_reduction <add>, %269, %cst_117 [1] : vector<16x32xf32> to vector<16xf32>
    %275 = vector.shape_cast %274 : vector<16xf32> to vector<16x1xf32>
    %cst_118 = arith.constant 3.200000e+01 : f32
    %276 = vector.broadcast %cst_118 : f32 to vector<16x1xf32>
    %277 = arith.divf %275, %276 : vector<16x1xf32>
    %278 = vector.broadcast %277 : vector<16x1xf32> to vector<16x32xf32>
    %279 = arith.subf %269, %278 : vector<16x32xf32>
    %280 = arith.mulf %279, %279 : vector<16x32xf32>
    %cst_119 = arith.constant dense<0.000000e+00> : vector<16xf32>
    %281 = vector.multi_reduction <add>, %280, %cst_119 [1] : vector<16x32xf32> to vector<16xf32>
    %282 = vector.shape_cast %281 : vector<16xf32> to vector<16x1xf32>
    %cst_120 = arith.constant 3.200000e+01 : f32
    %283 = vector.broadcast %cst_120 : f32 to vector<16x1xf32>
    %284 = arith.divf %282, %283 : vector<16x1xf32>
    %285 = vector.broadcast %277 : vector<16x1xf32> to vector<16x32xf32>
    %286 = arith.subf %269, %285 : vector<16x32xf32>
    %cst_121 = arith.constant 9.99999996E-13 : f32
    %287 = vector.broadcast %cst_121 : f32 to vector<16x1xf32>
    %288 = arith.addf %284, %287 : vector<16x1xf32>
    %289 = math.rsqrt %288 : vector<16x1xf32>
    %290 = vector.broadcast %289 : vector<16x1xf32> to vector<16x32xf32>
    %291 = arith.mulf %286, %290 : vector<16x32xf32>
    %292 = vector.broadcast %271 : vector<1x32xf32> to vector<16x32xf32>
    %293 = arith.mulf %291, %292 : vector<16x32xf32>
    %294 = vector.broadcast %273 : vector<1x32xf32> to vector<16x32xf32>
    %295 = arith.addf %293, %294 : vector<16x32xf32>
    %296 = vector.shape_cast %295 : vector<16x32xf32> to vector<2x8x32xf32>
    %297 = vector.extract_strided_slice %296 {offsets = [0, 0, 0], sizes = [2, 1, 32], strides = [1, 1, 1]} : vector<2x8x32xf32> to vector<2x1x32xf32>
    %298 = vector.shape_cast %297 : vector<2x1x32xf32> to vector<2x32xf32>
    %299 = arith.truncf %298 : vector<2x32xf32> to vector<2x32xbf16>
    %c0_122 = arith.constant 0 : index
    %c0_123 = arith.constant 0 : index
    %c0_124 = arith.constant 0 : index
    %300 = vector.load %arg8[%c0_122, %c0_123, %c0_124] : memref<2x32x32xbf16, #tpu.memory_space<vmem>>, vector<1x32x32xbf16>
    %301 = vector.shape_cast %300 : vector<1x32x32xbf16> to vector<32x32xbf16>
    %cst_125 = arith.constant dense<0.000000e+00> : vector<2x32xf32>
    %302 = tpu.matmul %299, %301, %cst_125 {dimension_numbers = #tpu.dot_dimension_numbers<[1], [0], [0], [1], [0, 0, 1, 1], [], []>} : vector<2x32xbf16>, vector<32x32xbf16>, vector<2x32xf32> -> vector<2x32xf32>
    %c2_126 = arith.constant 2 : index
    %c0_127 = arith.constant 0 : index
    %303 = vector.load %arg2[%c2_126, %c0_127] : memref<4x32xf32, #tpu.memory_space<vmem>>, vector<1x32xf32>
    %304 = vector.broadcast %303 : vector<1x32xf32> to vector<2x32xf32>
    %305 = arith.addf %302, %304 : vector<2x32xf32>
    %306 = math.tanh %305 : vector<2x32xf32>
    %307 = arith.truncf %306 : vector<2x32xf32> to vector<2x32xbf16>
    %c1_128 = arith.constant 1 : index
    %c0_129 = arith.constant 0 : index
    %c0_130 = arith.constant 0 : index
    %308 = vector.load %arg8[%c1_128, %c0_129, %c0_130] : memref<2x32x32xbf16, #tpu.memory_space<vmem>>, vector<1x32x32xbf16>
    %309 = vector.shape_cast %308 : vector<1x32x32xbf16> to vector<32x32xbf16>
    %cst_131 = arith.constant dense<0.000000e+00> : vector<2x32xf32>
    %310 = tpu.matmul %307, %309, %cst_131 {dimension_numbers = #tpu.dot_dimension_numbers<[1], [0], [0], [1], [0, 0, 1, 1], [], []>} : vector<2x32xbf16>, vector<32x32xbf16>, vector<2x32xf32> -> vector<2x32xf32>
    %c3_132 = arith.constant 3 : index
    %c0_133 = arith.constant 0 : index
    %311 = vector.load %arg2[%c3_132, %c0_133] : memref<4x32xf32, #tpu.memory_space<vmem>>, vector<1x32xf32>
    %312 = vector.broadcast %311 : vector<1x32xf32> to vector<2x32xf32>
    %313 = arith.addf %310, %312 : vector<2x32xf32>
    %314 = vector.extract_strided_slice %313 {offsets = [0, 0], sizes = [2, 2], strides = [1, 1]} : vector<2x32xf32> to vector<2x2xf32>
    %c0_134 = arith.constant 0 : index
    %c0_135 = arith.constant 0 : index
    %315 = vector.load %arg9[%c0_134, %c0_135] : memref<2x2xf32, #tpu.memory_space<vmem>>, vector<2x2xf32>
    tpu.vector_store %arg9[%c0_134, %c0_135], %314 {strides = array<i32>} : memref<2x2xf32, #tpu.memory_space<vmem>>, vector<2x2xf32>,
    return
  }
}

</mosaic_0001>

<llo_original>
// kernel: tpu_custom_call.1
$region0: #{tpu_custom_call.1}
  #allocation0 [shape = 'u32[]', space=smem, size = 0x4, offset = 0x4, fixed_abs, tag = 'smem constant byte address 0x4 - core index']
  #allocation1 [shape = 'u32[144,128]{1,0:T(1,128)}', space=vmem, size = 0x12000, scoped, tag = 'internal scratch']
  %s0 = inlined_call_operand.hbm [shape: f32[16,32], index: 0, kind: input, shape index: {}]
  %s1 = inlined_call_operand.vmem [shape: f32[2,8], index: 1, kind: input, shape index: {}]
  %s2 = inlined_call_operand.hbm [shape: f32[4,32], index: 2, kind: input, shape index: {}]
  %s3 = inlined_call_operand.vmem [shape: bf16[2,32,96], index: 3, kind: input, shape index: {}]
  %s4 = inlined_call_operand.vmem [shape: bf16[2,32,32], index: 4, kind: input, shape index: {}]
  %s5 = inlined_call_operand.vmem [shape: f32[2,8,96], index: 5, kind: input, shape index: {}]
  %s6 = inlined_call_operand.vmem [shape: bf16[2,32,64], index: 6, kind: input, shape index: {}]
  %s7 = inlined_call_operand.vmem [shape: bf16[2,64,32], index: 7, kind: input, shape index: {}]
  %s8 = inlined_call_operand.hbm [shape: bf16[2,32,32], index: 8, kind: input, shape index: {}]
  %s9 = inlined_call_operand.hbm [shape: f32[2,2], index: 9, kind: output, shape index: {}]
  %s10 = sld [smem:[#allocation0]]
  $region58: #{tpu_custom_call.1} parent=0
    _
  %s12 = ssub.s32 1, %s10
  %s13 = scalar_select 0, %s12, %s10
  $region1: #{tpu_custom_call.1} parent=0
    #allocation2 [shape = 'u8[8192]{0}', space=vmem, size = 0x2000, scoped, tag = 'input window, operand 0, single buffered']
    #allocation3 [shape = 's32[1]{0}', space=sflag, size = 0x4, scoped, tag = 'scoped memory for tpu_custom_call.1']
    #allocation4 [shape = 's32[1]{0}', space=sflag, size = 0x4, scoped, tag = 'scoped memory for tpu_custom_call.1']
    #allocation5 [shape = 'u8[2048]{0}', space=vmem, size = 0x800, scoped, tag = 'input window, operand 2, single buffered']
    #allocation6 [shape = 's32[1]{0}', space=sflag, size = 0x4, scoped, tag = 'scoped memory for tpu_custom_call.1']
    #allocation7 [shape = 'u8[16384]{0}', space=vmem, size = 0x4000, scoped, tag = 'input window, operand 8, single buffered']
    #allocation8 [shape = 'u8[1024]{0}', space=vmem, size = 0x400, scoped, tag = 'output window, operand 0, single buffered']
    %14 = vsyncpa [#allocation3], 0
    %15 = vsyncpa [#allocation6], 0
    %16 = vsyncpa [#allocation4], 0
    // Predicated region
    $region2: #{tpu_custom_call.1} parent=1 // pred_check
      _
    $region3: #{tpu_custom_call.1} parent=1 // pred_check_branch
      %18 = sbr.rel (0) target = $region5
    $region4: #{tpu_custom_call.1} parent=1 // pred_region
      %s20 = ssub.s32 256, 256
      %21 = vsyncadd [#allocation3], %s20
      %s22 = sshll.u32 [#allocation2], 4
      %s23 = int_to_ptr.vmem [resolvable:$true] %s22
      %28 = dma.hbm_to_vmem [thread:$0]  %s0, 256, %s23, [#allocation3], 128, 128, 8
    $region5: #{tpu_custom_call.1} parent=1 // pred_fallthru
      _
    // Predicated region
    $region6: #{tpu_custom_call.1} parent=1 // pred_check
      _
    $region7: #{tpu_custom_call.1} parent=1 // pred_check_branch
      %30 = sbr.rel (0) target = $region9
    $region8: #{tpu_custom_call.1} parent=1 // pred_region
      _
    $region9: #{tpu_custom_call.1} parent=1 // pred_fallthru
      _
    // Predicated region
    $region10: #{tpu_custom_call.1} parent=1 // pred_check
      _
    $region11: #{tpu_custom_call.1} parent=1 // pred_check_branch
      %32 = sbr.rel (0) target = $region13
    $region12: #{tpu_custom_call.1} parent=1 // pred_region
      %s34 = ssub.s32 64, 64
      %35 = vsyncadd [#allocation6], %s34
      %s37 = sshll.u32 [#allocation5], 4
      %s38 = int_to_ptr.vmem [resolvable:$true] %s37
      %40 = dma.hbm_to_vmem [thread:$0]  %s2, 64, %s38, [#allocation6]
    $region13: #{tpu_custom_call.1} parent=1 // pred_fallthru
      _
    // Predicated region
    $region14: #{tpu_custom_call.1} parent=1 // pred_check
      _
    $region15: #{tpu_custom_call.1} parent=1 // pred_check_branch
      %42 = sbr.rel (0) target = $region17
    $region16: #{tpu_custom_call.1} parent=1 // pred_region
      _
    $region17: #{tpu_custom_call.1} parent=1 // pred_fallthru
      _
    // Predicated region
    $region18: #{tpu_custom_call.1} parent=1 // pred_check
      _
    $region19: #{tpu_custom_call.1} parent=1 // pred_check_branch
      %44 = sbr.rel (0) target = $region21
    $region20: #{tpu_custom_call.1} parent=1 // pred_region
      _
    $region21: #{tpu_custom_call.1} parent=1 // pred_fallthru
      _
    // Predicated region
    $region22: #{tpu_custom_call.1} parent=1 // pred_check
      _
    $region23: #{tpu_custom_call.1} parent=1 // pred_check_branch
      %46 = sbr.rel (0) target = $region25
    $region24: #{tpu_custom_call.1} parent=1 // pred_region
      _
    $region25: #{tpu_custom_call.1} parent=1 // pred_fallthru
      _
    // Predicated region
    $region26: #{tpu_custom_call.1} parent=1 // pred_check
      _
    $region27: #{tpu_custom_call.1} parent=1 // pred_check_branch
      %48 = sbr.rel (0) target = $region29
    $region28: #{tpu_custom_call.1} parent=1 // pred_region
      _
    $region29: #{tpu_custom_call.1} parent=1 // pred_fallthru
      _
    // Predicated region
    $region30: #{tpu_custom_call.1} parent=1 // pred_check
      _
    $region31: #{tpu_custom_call.1} parent=1 // pred_check_branch
      %50 = sbr.rel (0) target = $region33
    $region32: #{tpu_custom_call.1} parent=1 // pred_region
      _
    $region33: #{tpu_custom_call.1} parent=1 // pred_fallthru
      _
    // Predicated region
    $region34: #{tpu_custom_call.1} parent=1 // pred_check
      _
    $region35: #{tpu_custom_call.1} parent=1 // pred_check_branch
      %52 = sbr.rel (0) target = $region37
    $region36: #{tpu_custom_call.1} parent=1 // pred_region
      %s54 = ssub.s32 512, 512
      %55 = vsyncadd [#allocation6], %s54
      %s56 = sshll.u32 [#allocation7], 4
      %s57 = int_to_ptr.vmem [resolvable:$true] %s56
      %62 = dma.hbm_to_vmem [thread:$0]  %s8, 512, %s57, [#allocation6], 64, 64, 4
    $region37: #{tpu_custom_call.1} parent=1 // pred_fallthru
      _
    // Predicated region
    $region38: #{tpu_custom_call.1} parent=1 // pred_check
      _
    $region39: #{tpu_custom_call.1} parent=1 // pred_check_branch
      %64 = sbr.rel (0) target = $region41
    $region40: #{tpu_custom_call.1} parent=1 // pred_region
      %65 = dma.done [#allocation3], 256
    $region41: #{tpu_custom_call.1} parent=1 // pred_fallthru
      _
    // Predicated region
    $region42: #{tpu_custom_call.1} parent=1 // pred_check
      _
    $region43: #{tpu_custom_call.1} parent=1 // pred_check_branch
      %67 = sbr.rel (0) target = $region45
    $region44: #{tpu_custom_call.1} parent=1 // pred_region
      %68 = dma.done [#allocation6], 64
    $region45: #{tpu_custom_call.1} parent=1 // pred_fallthru
      _
    // Predicated region
    $region46: #{tpu_custom_call.1} parent=1 // pred_check
      _
    $region47: #{tpu_custom_call.1} parent=1 // pred_check_branch
      %70 = sbr.rel (0) target = $region49
    $region48: #{tpu_custom_call.1} parent=1 // pred_region
      %71 = dma.done [#allocation6], 512
    $region49: #{tpu_custom_call.1} parent=1 // pred_fallthru
      _
    %v73 = vld [vmem:[%s1] sm:$0x3]
    %v76 = vunpack.c.l.s4 1966171168
    %v77 = vunpack.c.0.s8 %v76
    %v78 = vlaneseq
    %v79 = vshrl.u32 %v78, 7
    %v80 = vsub.s32 %v77, %v79
    %v81 = vrot.slane %v73, %v80
    %v82 = vcombine.high %v81, %v81
    %v84 = vunpack.c.l.s4 1966171168
    %v85 = vunpack.c.0.s8 %v84
    %v86 = vlaneseq
    %v87 = vshrl.u32 %v86, 7
    %v88 = vsub.s32 %v85, %v87
    %v89 = vrot.slane %v81, %v88
    %v91 = vunpack.c.l.s4 1966171168
    %v92 = vunpack.c.0.s8 %v91
    %v93 = vlaneseq
    %v94 = vshrl.u32 %v93, 7
    %v95 = vsub.s32 %v92, %v94
    %v96 = vrot.slane %v82, %v95
    %v97 = vlaneseq
    %v98 = vshrl.u32 %v97, 7
    %v99 = vsub.s32 0, %v98
    %v100 = vrot.slane %v89, %v99
    %v101 = vlaneseq
    %v102 = vshrl.u32 %v101, 7
    %v103 = vsub.s32 0, %v102
    %v104 = vrot.slane %v96, %v103
    %v107 = vld [vmem:[#allocation2] sm:$0xff]
    %v108 = vld [vmem:[#allocation2 + $0x8] sm:$0xff]
    %v109 = vld [vmem:[#allocation5] sm:$0x1]
    %v110 = vld [vmem:[#allocation5 + $0x1] sm:$0x1]
    %vm111 = vcmask 261120
    %v112 = vsel %vm111, %v107, 0.0
    %113 = vadd.xlane.f32.xlu0 %v112
    %v114 = vpop.xlane.xlu0 %113
    %v115 = vsel %vm111, %v108, 0.0
    %116 = vadd.xlane.f32.xlu0 %v115
    %v117 = vpop.xlane.xlu0 %116
    %v118 = vrcp.pop 32.0
    %v119 = vmul.f32 %v114, %v118
    %v120 = vmul.f32 %v117, %v118
    %v121 = vsub.f32 %v107, %v119
    %v122 = vsub.f32 %v108, %v120
    %v123 = vmul.f32 %v121, %v121
    %v124 = vmul.f32 %v122, %v122
    %v125 = vsel %vm111, %v123, 0.0
    %126 = vadd.xlane.f32.xlu0 %v125
    %v127 = vpop.xlane.xlu0 %126
    %v128 = vsel %vm111, %v124, 0.0
    %129 = vadd.xlane.f32.xlu0 %v128
    %v130 = vpop.xlane.xlu0 %129
    %v131 = vmul.f32 %v127, %v118
    %v132 = vmul.f32 %v130, %v118
    %v133 = vadd.f32 %v131, 1e-12
    %v134 = vadd.f32 %v132, 1e-12
    %v135 = vrsqrt.pop %v133
    %v136 = vrsqrt.pop %v134
    %v137 = vmul.f32 %v121, %v135
    %v138 = vmul.f32 %v122, %v136
    %v139 = vlaneseq
    %v140 = vshrl.u32 %v139, 7
    %v141 = vsub.s32 0, %v140
    %v142 = vrot.slane %v109, %v141
    %v143 = vmul.f32 %v137, %v142
    %v144 = vmul.f32 %v138, %v142
    %v145 = vlaneseq
    %v146 = vshrl.u32 %v145, 7
    %v147 = vsub.s32 0, %v146
    %v148 = vrot.slane %v110, %v147
    %v149 = vadd.f32 %v143, %v148
    %v150 = vadd.f32 %v144, %v148
    %v151 = vpack.c.bf16 %v150, %v149
    %v152 = vld [vmem:[%s3] sm:$0xf]
    %v153 = vld [vmem:[%s3 + $0x4] sm:$0xf]
    %v154 = vld [vmem:[%s3 + $0x8] sm:$0xf]
    %v155 = vld [vmem:[%s3 + $0xc] sm:$0xf]
    %v156 = vld [vmem:[%s5] sm:$0x1]
    %v157 = vlaneseq
    %v158 = vshrl.u32 %v157, 7
    %v159 = vsub.s32 0, %v158
    %v160 = vrot.slane %v156, %v159
    %v165 = vunpack.c.l.b16 %v152
    %v166 = vunpack.c.l.b16 %v153
    %v167 = vunpack.c.l.b16 %v154
    %v168 = vunpack.c.l.b16 %v155
    %v169 = vpack.c.b16 %v166, %v165
    %v170 = vpack.c.b16 %v168, %v167
    %v174 = vsel %vm111, %v151, 0
    %176 = vmatprep.subr.bf16.mxu0 0
    %177 = vmatpush1.bf16.msra.mxu0 %v169
    %178 = vmatprep.subr.bf16.mxu0 0
    %179 = vmatpush1.bf16.msra.mxu0 %v170
    %180 = vmatprep.subr.bf16.mxu0 0
    %181 = vmatpush1.bf16.msra.mxu0 0
    %182 = vmatprep.subr.bf16.mxu0 0
    %183 = vmatpush1.bf16.msra.mxu0 0
    %184 = vmatprep.subr.bf16.mxu0 0
    %185 = vmatpush1.bf16.msra.mxu0 0
    %186 = vmatprep.subr.bf16.mxu0 0
    %187 = vmatpush1.bf16.msra.mxu0 0
    %188 = vmatprep.subr.bf16.mxu0 0
    %189 = vmatpush1.bf16.msra.mxu0 0
    %190 = vmatprep.subr.bf16.mxu0 0
    %191 = vmatpush1.bf16.msra.mxu0 0
    %192 = vmatprep.subr.bf16.mxu0 0
    %193 = vmatpush1.bf16.msra.mxu0 0
    %194 = vmatprep.subr.bf16.mxu0 0
    %195 = vmatpush1.bf16.msra.mxu0 0
    %196 = vmatprep.subr.bf16.mxu0 0
    %197 = vmatpush1.bf16.msra.mxu0 0
    %198 = vmatprep.subr.bf16.mxu0 0
    %199 = vmatpush1.bf16.msra.mxu0 0
    %200 = vmatprep.subr.bf16.mxu0 0
    %201 = vmatpush1.bf16.msra.mxu0 0
    %202 = vmatprep.subr.bf16.mxu0 0
    %203 = vmatpush1.bf16.msra.mxu0 0
    %204 = vmatprep.subr.bf16.mxu0 0
    %205 = vmatpush1.bf16.msra.mxu0 0
    %206 = vmatprep.subr.bf16.mxu0 0
    %207 = vmatpush1.bf16.msra.mxu0 0
    %208 = vmatprep.mubr.bf16.mxu0 0
    %209 = vmatmul.mubr.bf16.gmra.mrb[0].mxu0 %v174
    %v210 = vpop.f32.mrb[0].mxu0
    %v211 = vadd.f32 %v160, %v210
    %v212 = vpop.f32.mrb[0].mxu0
    %v213 = vpop.f32.mrb[0].mxu0
    %v214 = vadd.f32 %v160, %v213
    %v215 = vpop.f32.mrb[0].mxu0
    %216 = vdwg.mxu0
    %219 = vrot.lane.b32.xlu0 %v211, 120
    %v220 = vpop.permute.xlu0 %219
    %221 = vrot.lane.b32.xlu0 %v214, 120
    %v222 = vpop.permute.xlu0 %221
    %225 = vrot.lane.b32.xlu0 %v211, 112
    %v226 = vpop.permute.xlu0 %225
    %227 = vrot.lane.b32.xlu0 %v214, 112
    %v228 = vpop.permute.xlu0 %227
    %231 = vrot.lane.b32.xlu0 %v211, 104
    %v232 = vpop.permute.xlu0 %231
    %233 = vrot.lane.b32.xlu0 %v214, 104
    %v234 = vpop.permute.xlu0 %233
    %237 = vrot.lane.b32.xlu0 %v211, 96
    %v238 = vpop.permute.xlu0 %237
    %239 = vrot.lane.b32.xlu0 %v214, 96
    %v240 = vpop.permute.xlu0 %239
    %243 = vrot.lane.b32.xlu0 %v211, 88
    %v244 = vpop.permute.xlu0 %243
    %245 = vrot.lane.b32.xlu0 %v214, 88
    %v246 = vpop.permute.xlu0 %245
    %249 = vrot.lane.b32.xlu0 %v211, 80
    %v250 = vpop.permute.xlu0 %249
    %251 = vrot.lane.b32.xlu0 %v214, 80
    %v252 = vpop.permute.xlu0 %251
    %255 = vrot.lane.b32.xlu0 %v211, 72
    %v256 = vpop.permute.xlu0 %255
    %257 = vrot.lane.b32.xlu0 %v214, 72
    %v258 = vpop.permute.xlu0 %257
    %261 = vrot.lane.b32.xlu0 %v211, 64
    %v262 = vpop.permute.xlu0 %261
    %263 = vrot.lane.b32.xlu0 %v214, 64
    %v264 = vpop.permute.xlu0 %263
    %267 = vrot.lane.b32.xlu0 %v211, 56
    %v268 = vpop.permute.xlu0 %267
    %269 = vrot.lane.b32.xlu0 %v214, 56
    %v270 = vpop.permute.xlu0 %269
    %273 = vrot.lane.b32.xlu0 %v211, 48
    %v274 = vpop.permute.xlu0 %273
    %275 = vrot.lane.b32.xlu0 %v214, 48
    %v276 = vpop.permute.xlu0 %275
    %279 = vrot.lane.b32.xlu0 %v211, 40
    %v280 = vpop.permute.xlu0 %279
    %281 = vrot.lane.b32.xlu0 %v214, 40
    %v282 = vpop.permute.xlu0 %281
    %v285 = vcombine.low %v211, %v226
    %v286 = vcombine.high %v211, %v226
    %v288 = vunpack.c.l.s4 1983009808
    %v289 = vunpack.c.0.s8 %v288
    %v290 = vlaneseq
    %v291 = vshrl.u32 %v290, 7
    %v292 = vsub.s32 %v289, %v291
    %v293 = vrot.slane %v285, %v292
    %v295 = vunpack.c.l.s4 1983009808
    %v296 = vunpack.c.0.s8 %v295
    %v297 = vlaneseq
    %v298 = vshrl.u32 %v297, 7
    %v299 = vsub.s32 %v296, %v298
    %v300 = vrot.slane %v286, %v299
    %v301 = vcombine.low %v220, %v232
    %v302 = vcombine.high %v220, %v232
    %v304 = vunpack.c.l.s4 1983009808
    %v305 = vunpack.c.0.s8 %v304
    %v306 = vlaneseq
    %v307 = vshrl.u32 %v306, 7
    %v308 = vsub.s32 %v305, %v307
    %v309 = vrot.slane %v301, %v308
    %v311 = vunpack.c.l.s4 1983009808
    %v312 = vunpack.c.0.s8 %v311
    %v313 = vlaneseq
    %v314 = vshrl.u32 %v313, 7
    %v315 = vsub.s32 %v312, %v314
    %v316 = vrot.slane %v302, %v315
    %v317 = vcombine.low %v238, %v250
    %v318 = vcombine.high %v238, %v250
    %v320 = vunpack.c.l.s4 1983009808
    %v321 = vunpack.c.0.s8 %v320
    %v322 = vlaneseq
    %v323 = vshrl.u32 %v322, 7
    %v324 = vsub.s32 %v321, %v323
    %v325 = vrot.slane %v317, %v324
    %v327 = vunpack.c.l.s4 1983009808
    %v328 = vunpack.c.0.s8 %v327
    %v329 = vlaneseq
    %v330 = vshrl.u32 %v329, 7
    %v331 = vsub.s32 %v328, %v330
    %v332 = vrot.slane %v318, %v331
    %v333 = vcombine.low %v244, %v256
    %v334 = vcombine.high %v244, %v256
    %v336 = vunpack.c.l.s4 1983009808
    %v337 = vunpack.c.0.s8 %v336
    %v338 = vlaneseq
    %v339 = vshrl.u32 %v338, 7
    %v340 = vsub.s32 %v337, %v339
    %v341 = vrot.slane %v333, %v340
    %v343 = vunpack.c.l.s4 1983009808
    %v344 = vunpack.c.0.s8 %v343
    %v345 = vlaneseq
    %v346 = vshrl.u32 %v345, 7
    %v347 = vsub.s32 %v344, %v346
    %v348 = vrot.slane %v334, %v347
    %v349 = vcombine.low %v293, %v309
    %v350 = vcombine.high %v293, %v309
    %v352 = vunpack.c.l.s4 1934713408
    %v353 = vunpack.c.0.s8 %v352
    %v354 = vlaneseq
    %v355 = vshrl.u32 %v354, 7
    %v356 = vsub.s32 %v353, %v355
    %v357 = vrot.slane %v349, %v356
    %v359 = vunpack.c.l.s4 1934713408
    %v360 = vunpack.c.0.s8 %v359
    %v361 = vlaneseq
    %v362 = vshrl.u32 %v361, 7
    %v363 = vsub.s32 %v360, %v362
    %v364 = vrot.slane %v350, %v363
    %v365 = vcombine.low %v300, %v316
    %v366 = vcombine.high %v300, %v316
    %v368 = vunpack.c.l.s4 1934713408
    %v369 = vunpack.c.0.s8 %v368
    %v370 = vlaneseq
    %v371 = vshrl.u32 %v370, 7
    %v372 = vsub.s32 %v369, %v371
    %v373 = vrot.slane %v365, %v372
    %v375 = vunpack.c.l.s4 1934713408
    %v376 = vunpack.c.0.s8 %v375
    %v377 = vlaneseq
    %v378 = vshrl.u32 %v377, 7
    %v379 = vsub.s32 %v376, %v378
    %v380 = vrot.slane %v366, %v379
    %v381 = vcombine.low %v325, %v341
    %v382 = vcombine.high %v325, %v341
    %v384 = vunpack.c.l.s4 1934713408
    %v385 = vunpack.c.0.s8 %v384
    %v386 = vlaneseq
    %v387 = vshrl.u32 %v386, 7
    %v388 = vsub.s32 %v385, %v387
    %v389 = vrot.slane %v381, %v388
    %v391 = vunpack.c.l.s4 1934713408
    %v392 = vunpack.c.0.s8 %v391
    %v393 = vlaneseq
    %v394 = vshrl.u32 %v393, 7
    %v395 = vsub.s32 %v392, %v394
    %v396 = vrot.slane %v382, %v395
    %v397 = vcombine.low %v332, %v348
    %v398 = vcombine.high %v332, %v348
    %v400 = vunpack.c.l.s4 1934713408
    %v401 = vunpack.c.0.s8 %v400
    %v402 = vlaneseq
    %v403 = vshrl.u32 %v402, 7
    %v404 = vsub.s32 %v401, %v403
    %v405 = vrot.slane %v397, %v404
    %v407 = vunpack.c.l.s4 1934713408
    %v408 = vunpack.c.0.s8 %v407
    %v409 = vlaneseq
    %v410 = vshrl.u32 %v409, 7
    %v411 = vsub.s32 %v408, %v410
    %v412 = vrot.slane %v398, %v411
    %v413 = vcombine.low %v357, %v389
    %v414 = vcombine.high %v357, %v389
    %v415 = vcombine.low %v364, %v396
    %v416 = vcombine.high %v364, %v396
    %v417 = vcombine.low %v373, %v405
    %v418 = vcombine.high %v373, %v405
    %v419 = vcombine.low %v380, %v412
    %v420 = vcombine.high %v380, %v412
    %v421 = vcombine.low %v262, %v274
    %v422 = vcombine.high %v262, %v274
    %v424 = vunpack.c.l.s4 1983009808
    %v425 = vunpack.c.0.s8 %v424
    %v426 = vlaneseq
    %v427 = vshrl.u32 %v426, 7
    %v428 = vsub.s32 %v425, %v427
    %v429 = vrot.slane %v421, %v428
    %v431 = vunpack.c.l.s4 1983009808
    %v432 = vunpack.c.0.s8 %v431
    %v433 = vlaneseq
    %v434 = vshrl.u32 %v433, 7
    %v435 = vsub.s32 %v432, %v434
    %v436 = vrot.slane %v422, %v435
    %v437 = vcombine.low %v268, %v280
    %v438 = vcombine.high %v268, %v280
    %v440 = vunpack.c.l.s4 1983009808
    %v441 = vunpack.c.0.s8 %v440
    %v442 = vlaneseq
    %v443 = vshrl.u32 %v442, 7
    %v444 = vsub.s32 %v441, %v443
    %v445 = vrot.slane %v437, %v444
    %v447 = vunpack.c.l.s4 1983009808
    %v448 = vunpack.c.0.s8 %v447
    %v449 = vlaneseq
    %v450 = vshrl.u32 %v449, 7
    %v451 = vsub.s32 %v448, %v450
    %v452 = vrot.slane %v438, %v451
    %v453 = vcombine.low %v429, %v445
    %v454 = vcombine.high %v429, %v445
    %v456 = vunpack.c.l.s4 1934713408
    %v457 = vunpack.c.0.s8 %v456
    %v458 = vlaneseq
    %v459 = vshrl.u32 %v458, 7
    %v460 = vsub.s32 %v457, %v459
    %v461 = vrot.slane %v453, %v460
    %v463 = vunpack.c.l.s4 1934713408
    %v464 = vunpack.c.0.s8 %v463
    %v465 = vlaneseq
    %v466 = vshrl.u32 %v465, 7
    %v467 = vsub.s32 %v464, %v466
    %v468 = vrot.slane %v454, %v467
    %v469 = vcombine.low %v436, %v452
    %v470 = vcombine.high %v436, %v452
    %v472 = vunpack.c.l.s4 1934713408
    %v473 = vunpack.c.0.s8 %v472
    %v474 = vlaneseq
    %v475 = vshrl.u32 %v474, 7
    %v476 = vsub.s32 %v473, %v475
    %v477 = vrot.slane %v469, %v476
    %v479 = vunpack.c.l.s4 1934713408
    %v480 = vunpack.c.0.s8 %v479
    %v481 = vlaneseq
    %v482 = vshrl.u32 %v481, 7
    %v483 = vsub.s32 %v480, %v482
    %v484 = vrot.slane %v470, %v483
    %v485 = vcombine.high %v461, 0.0
    %v486 = vcombine.high %v468, 0.0
    %v487 = vcombine.high %v477, 0.0
    %v488 = vcombine.high %v484, 0.0
    %v489 = vcombine.low %v214, %v228
    %v490 = vcombine.high %v214, %v228
    %v492 = vunpack.c.l.s4 1983009808
    %v493 = vunpack.c.0.s8 %v492
    %v494 = vlaneseq
    %v495 = vshrl.u32 %v494, 7
    %v496 = vsub.s32 %v493, %v495
    %v497 = vrot.slane %v489, %v496
    %v499 = vunpack.c.l.s4 1983009808
    %v500 = vunpack.c.0.s8 %v499
    %v501 = vlaneseq
    %v502 = vshrl.u32 %v501, 7
    %v503 = vsub.s32 %v500, %v502
    %v504 = vrot.slane %v490, %v503
    %v505 = vcombine.low %v222, %v234
    %v506 = vcombine.high %v222, %v234
    %v508 = vunpack.c.l.s4 1983009808
    %v509 = vunpack.c.0.s8 %v508
    %v510 = vlaneseq
    %v511 = vshrl.u32 %v510, 7
    %v512 = vsub.s32 %v509, %v511
    %v513 = vrot.slane %v505, %v512
    %v515 = vunpack.c.l.s4 1983009808
    %v516 = vunpack.c.0.s8 %v515
    %v517 = vlaneseq
    %v518 = vshrl.u32 %v517, 7
    %v519 = vsub.s32 %v516, %v518
    %v520 = vrot.slane %v506, %v519
    %v521 = vcombine.low %v240, %v252
    %v522 = vcombine.high %v240, %v252
    %v524 = vunpack.c.l.s4 1983009808
    %v525 = vunpack.c.0.s8 %v524
    %v526 = vlaneseq
    %v527 = vshrl.u32 %v526, 7
    %v528 = vsub.s32 %v525, %v527
    %v529 = vrot.slane %v521, %v528
    %v531 = vunpack.c.l.s4 1983009808
    %v532 = vunpack.c.0.s8 %v531
    %v533 = vlaneseq
    %v534 = vshrl.u32 %v533, 7
    %v535 = vsub.s32 %v532, %v534
    %v536 = vrot.slane %v522, %v535
    %v537 = vcombine.low %v246, %v258
    %v538 = vcombine.high %v246, %v258
    %v540 = vunpack.c.l.s4 1983009808
    %v541 = vunpack.c.0.s8 %v540
    %v542 = vlaneseq
    %v543 = vshrl.u32 %v542, 7
    %v544 = vsub.s32 %v541, %v543
    %v545 = vrot.slane %v537, %v544
    %v547 = vunpack.c.l.s4 1983009808
    %v548 = vunpack.c.0.s8 %v547
    %v549 = vlaneseq
    %v550 = vshrl.u32 %v549, 7
    %v551 = vsub.s32 %v548, %v550
    %v552 = vrot.slane %v538, %v551
    %v553 = vcombine.low %v497, %v513
    %v554 = vcombine.high %v497, %v513
    %v556 = vunpack.c.l.s4 1934713408
    %v557 = vunpack.c.0.s8 %v556
    %v558 = vlaneseq
    %v559 = vshrl.u32 %v558, 7
    %v560 = vsub.s32 %v557, %v559
    %v561 = vrot.slane %v553, %v560
    %v563 = vunpack.c.l.s4 1934713408
    %v564 = vunpack.c.0.s8 %v563
    %v565 = vlaneseq
    %v566 = vshrl.u32 %v565, 7
    %v567 = vsub.s32 %v564, %v566
    %v568 = vrot.slane %v554, %v567
    %v569 = vcombine.low %v504, %v520
    %v570 = vcombine.high %v504, %v520
    %v572 = vunpack.c.l.s4 1934713408
    %v573 = vunpack.c.0.s8 %v572
    %v574 = vlaneseq
    %v575 = vshrl.u32 %v574, 7
    %v576 = vsub.s32 %v573, %v575
    %v577 = vrot.slane %v569, %v576
    %v579 = vunpack.c.l.s4 1934713408
    %v580 = vunpack.c.0.s8 %v579
    %v581 = vlaneseq
    %v582 = vshrl.u32 %v581, 7
    %v583 = vsub.s32 %v580, %v582
    %v584 = vrot.slane %v570, %v583
    %v585 = vcombine.low %v529, %v545
    %v586 = vcombine.high %v529, %v545
    %v588 = vunpack.c.l.s4 1934713408
    %v589 = vunpack.c.0.s8 %v588
    %v590 = vlaneseq
    %v591 = vshrl.u32 %v590, 7
    %v592 = vsub.s32 %v589, %v591
    %v593 = vrot.slane %v585, %v592
    %v595 = vunpack.c.l.s4 1934713408
    %v596 = vunpack.c.0.s8 %v595
    %v597 = vlaneseq
    %v598 = vshrl.u32 %v597, 7
    %v599 = vsub.s32 %v596, %v598
    %v600 = vrot.slane %v586, %v599
    %v601 = vcombine.low %v536, %v552
    %v602 = vcombine.high %v536, %v552
    %v604 = vunpack.c.l.s4 1934713408
    %v605 = vunpack.c.0.s8 %v604
    %v606 = vlaneseq
    %v607 = vshrl.u32 %v606, 7
    %v608 = vsub.s32 %v605, %v607
    %v609 = vrot.slane %v601, %v608
    %v611 = vunpack.c.l.s4 1934713408
    %v612 = vunpack.c.0.s8 %v611
    %v613 = vlaneseq
    %v614 = vshrl.u32 %v613, 7
    %v615 = vsub.s32 %v612, %v614
    %v616 = vrot.slane %v602, %v615
    %v617 = vcombine.low %v561, %v593
    %v618 = vcombine.high %v561, %v593
    %v619 = vcombine.low %v568, %v600
    %v620 = vcombine.high %v568, %v600
    %v621 = vcombine.low %v577, %v609
    %v622 = vcombine.high %v577, %v609
    %v623 = vcombine.low %v584, %v616
    %v624 = vcombine.high %v584, %v616
    %v625 = vcombine.low %v264, %v276
    %v626 = vcombine.high %v264, %v276
    %v628 = vunpack.c.l.s4 1983009808
    %v629 = vunpack.c.0.s8 %v628
    %v630 = vlaneseq
    %v631 = vshrl.u32 %v630, 7
    %v632 = vsub.s32 %v629, %v631
    %v633 = vrot.slane %v625, %v632
    %v635 = vunpack.c.l.s4 1983009808
    %v636 = vunpack.c.0.s8 %v635
    %v637 = vlaneseq
    %v638 = vshrl.u32 %v637, 7
    %v639 = vsub.s32 %v636, %v638
    %v640 = vrot.slane %v626, %v639
    %v641 = vcombine.low %v270, %v282
    %v642 = vcombine.high %v270, %v282
    %v644 = vunpack.c.l.s4 1983009808
    %v645 = vunpack.c.0.s8 %v644
    %v646 = vlaneseq
    %v647 = vshrl.u32 %v646, 7
    %v648 = vsub.s32 %v645, %v647
    %v649 = vrot.slane %v641, %v648
    %v651 = vunpack.c.l.s4 1983009808
    %v652 = vunpack.c.0.s8 %v651
    %v653 = vlaneseq
    %v654 = vshrl.u32 %v653, 7
    %v655 = vsub.s32 %v652, %v654
    %v656 = vrot.slane %v642, %v655
    %v657 = vcombine.low %v633, %v649
    %v658 = vcombine.high %v633, %v649
    %v660 = vunpack.c.l.s4 1934713408
    %v661 = vunpack.c.0.s8 %v660
    %v662 = vlaneseq
    %v663 = vshrl.u32 %v662, 7
    %v664 = vsub.s32 %v661, %v663
    %v665 = vrot.slane %v657, %v664
    %v667 = vunpack.c.l.s4 1934713408
    %v668 = vunpack.c.0.s8 %v667
    %v669 = vlaneseq
    %v670 = vshrl.u32 %v669, 7
    %v671 = vsub.s32 %v668, %v670
    %v672 = vrot.slane %v658, %v671
    %v673 = vcombine.low %v640, %v656
    %v674 = vcombine.high %v640, %v656
    %v676 = vunpack.c.l.s4 1934713408
    %v677 = vunpack.c.0.s8 %v676
    %v678 = vlaneseq
    %v679 = vshrl.u32 %v678, 7
    %v680 = vsub.s32 %v677, %v679
    %v681 = vrot.slane %v673, %v680
    %v683 = vunpack.c.l.s4 1934713408
    %v684 = vunpack.c.0.s8 %v683
    %v685 = vlaneseq
    %v686 = vshrl.u32 %v685, 7
    %v687 = vsub.s32 %v684, %v686
    %v688 = vrot.slane %v674, %v687
    %v689 = vcombine.high %v665, 0.0
    %v690 = vcombine.high %v672, 0.0
    %v691 = vcombine.high %v681, 0.0
    %v692 = vcombine.high %v688, 0.0
    %v693 = vcombine.low %v413, %v415
    %v694 = vcombine.high %v413, %v415
    %v696 = vunpack.c.l.s4 1983009808
    %v697 = vunpack.c.0.s8 %v696
    %v698 = vlaneseq
    %v699 = vshrl.u32 %v698, 7
    %v700 = vsub.s32 %v697, %v699
    %v701 = vrot.slane %v693, %v700
    %v703 = vunpack.c.l.s4 1983009808
    %v704 = vunpack.c.0.s8 %v703
    %v705 = vlaneseq
    %v706 = vshrl.u32 %v705, 7
    %v707 = vsub.s32 %v704, %v706
    %v708 = vrot.slane %v694, %v707
    %v709 = vcombine.low %v414, %v416
    %v710 = vcombine.high %v414, %v416
    %v712 = vunpack.c.l.s4 1983009808
    %v713 = vunpack.c.0.s8 %v712
    %v714 = vlaneseq
    %v715 = vshrl.u32 %v714, 7
    %v716 = vsub.s32 %v713, %v715
    %v717 = vrot.slane %v709, %v716
    %v719 = vunpack.c.l.s4 1983009808
    %v720 = vunpack.c.0.s8 %v719
    %v721 = vlaneseq
    %v722 = vshrl.u32 %v721, 7
    %v723 = vsub.s32 %v720, %v722
    %v724 = vrot.slane %v710, %v723
    %v725 = vcombine.low %v417, %v419
    %v726 = vcombine.high %v417, %v419
    %v728 = vunpack.c.l.s4 1983009808
    %v729 = vunpack.c.0.s8 %v728
    %v730 = vlaneseq
    %v731 = vshrl.u32 %v730, 7
    %v732 = vsub.s32 %v729, %v731
    %v733 = vrot.slane %v725, %v732
    %v735 = vunpack.c.l.s4 1983009808
    %v736 = vunpack.c.0.s8 %v735
    %v737 = vlaneseq
    %v738 = vshrl.u32 %v737, 7
    %v739 = vsub.s32 %v736, %v738
    %v740 = vrot.slane %v726, %v739
    %v741 = vcombine.low %v418, %v420
    %v742 = vcombine.high %v418, %v420
    %v744 = vunpack.c.l.s4 1983009808
    %v745 = vunpack.c.0.s8 %v744
    %v746 = vlaneseq
    %v747 = vshrl.u32 %v746, 7
    %v748 = vsub.s32 %v745, %v747
    %v749 = vrot.slane %v741, %v748
    %v751 = vunpack.c.l.s4 1983009808
    %v752 = vunpack.c.0.s8 %v751
    %v753 = vlaneseq
    %v754 = vshrl.u32 %v753, 7
    %v755 = vsub.s32 %v752, %v754
    %v756 = vrot.slane %v742, %v755
    %v757 = vcombine.low %v701, %v717
    %v758 = vcombine.high %v701, %v717
    %v760 = vunpack.c.l.s4 1934713408
    %v761 = vunpack.c.0.s8 %v760
    %v762 = vlaneseq
    %v763 = vshrl.u32 %v762, 7
    %v764 = vsub.s32 %v761, %v763
    %v765 = vrot.slane %v757, %v764
    %v767 = vunpack.c.l.s4 1934713408
    %v768 = vunpack.c.0.s8 %v767
    %v769 = vlaneseq
    %v770 = vshrl.u32 %v769, 7
    %v771 = vsub.s32 %v768, %v770
    %v772 = vrot.slane %v758, %v771
    %v773 = vcombine.low %v708, %v724
    %v774 = vcombine.high %v708, %v724
    %v776 = vunpack.c.l.s4 1934713408
    %v777 = vunpack.c.0.s8 %v776
    %v778 = vlaneseq
    %v779 = vshrl.u32 %v778, 7
    %v780 = vsub.s32 %v777, %v779
    %v781 = vrot.slane %v773, %v780
    %v783 = vunpack.c.l.s4 1934713408
    %v784 = vunpack.c.0.s8 %v783
    %v785 = vlaneseq
    %v786 = vshrl.u32 %v785, 7
    %v787 = vsub.s32 %v784, %v786
    %v788 = vrot.slane %v774, %v787
    %v789 = vcombine.low %v733, %v749
    %v790 = vcombine.high %v733, %v749
    %v792 = vunpack.c.l.s4 1934713408
    %v793 = vunpack.c.0.s8 %v792
    %v794 = vlaneseq
    %v795 = vshrl.u32 %v794, 7
    %v796 = vsub.s32 %v793, %v795
    %v797 = vrot.slane %v789, %v796
    %v799 = vunpack.c.l.s4 1934713408
    %v800 = vunpack.c.0.s8 %v799
    %v801 = vlaneseq
    %v802 = vshrl.u32 %v801, 7
    %v803 = vsub.s32 %v800, %v802
    %v804 = vrot.slane %v790, %v803
    %v805 = vcombine.low %v740, %v756
    %v806 = vcombine.high %v740, %v756
    %v808 = vunpack.c.l.s4 1934713408
    %v809 = vunpack.c.0.s8 %v808
    %v810 = vlaneseq
    %v811 = vshrl.u32 %v810, 7
    %v812 = vsub.s32 %v809, %v811
    %v813 = vrot.slane %v805, %v812
    %v815 = vunpack.c.l.s4 1934713408
    %v816 = vunpack.c.0.s8 %v815
    %v817 = vlaneseq
    %v818 = vshrl.u32 %v817, 7
    %v819 = vsub.s32 %v816, %v818
    %v820 = vrot.slane %v806, %v819
    %v821 = vcombine.low %v765, %v797
    %v822 = vcombine.high %v765, %v797
    %v823 = vcombine.low %v772, %v804
    %v824 = vcombine.high %v772, %v804
    %v825 = vcombine.low %v781, %v813
    %v826 = vcombine.high %v781, %v813
    %v827 = vcombine.low %v788, %v820
    %v828 = vcombine.high %v788, %v820
    %v829 = vcombine.low %v461, %v468
    %v831 = vunpack.c.l.s4 1983009808
    %v832 = vunpack.c.0.s8 %v831
    %v833 = vlaneseq
    %v834 = vshrl.u32 %v833, 7
    %v835 = vsub.s32 %v832, %v834
    %v836 = vrot.slane %v829, %v835
    %v837 = vcombine.low %v485, %v486
    %v839 = vunpack.c.l.s4 1983009808
    %v840 = vunpack.c.0.s8 %v839
    %v841 = vlaneseq
    %v842 = vshrl.u32 %v841, 7
    %v843 = vsub.s32 %v840, %v842
    %v844 = vrot.slane %v837, %v843
    %v845 = vcombine.low %v477, %v484
    %v847 = vunpack.c.l.s4 1983009808
    %v848 = vunpack.c.0.s8 %v847
    %v849 = vlaneseq
    %v850 = vshrl.u32 %v849, 7
    %v851 = vsub.s32 %v848, %v850
    %v852 = vrot.slane %v845, %v851
    %v853 = vcombine.low %v487, %v488
    %v855 = vunpack.c.l.s4 1983009808
    %v856 = vunpack.c.0.s8 %v855
    %v857 = vlaneseq
    %v858 = vshrl.u32 %v857, 7
    %v859 = vsub.s32 %v856, %v858
    %v860 = vrot.slane %v853, %v859
    %v861 = vcombine.low %v836, %v844
    %v862 = vcombine.high %v836, %v844
    %v864 = vunpack.c.l.s4 1934713408
    %v865 = vunpack.c.0.s8 %v864
    %v866 = vlaneseq
    %v867 = vshrl.u32 %v866, 7
    %v868 = vsub.s32 %v865, %v867
    %v869 = vrot.slane %v861, %v868
    %v871 = vunpack.c.l.s4 1934713408
    %v872 = vunpack.c.0.s8 %v871
    %v873 = vlaneseq
    %v874 = vshrl.u32 %v873, 7
    %v875 = vsub.s32 %v872, %v874
    %v876 = vrot.slane %v862, %v875
    %v877 = vcombine.low %v852, %v860
    %v878 = vcombine.high %v852, %v860
    %v880 = vunpack.c.l.s4 1934713408
    %v881 = vunpack.c.0.s8 %v880
    %v882 = vlaneseq
    %v883 = vshrl.u32 %v882, 7
    %v884 = vsub.s32 %v881, %v883
    %v885 = vrot.slane %v877, %v884
    %v887 = vunpack.c.l.s4 1934713408
    %v888 = vunpack.c.0.s8 %v887
    %v889 = vlaneseq
    %v890 = vshrl.u32 %v889, 7
    %v891 = vsub.s32 %v888, %v890
    %v892 = vrot.slane %v878, %v891
    %v893 = vcombine.low %v869, %v885
    %v894 = vcombine.high %v869, %v885
    %v895 = vcombine.low %v876, %v892
    %v896 = vcombine.high %v876, %v892
    %v897 = vcombine.low %v617, %v619
    %v898 = vcombine.high %v617, %v619
    %v900 = vunpack.c.l.s4 1983009808
    %v901 = vunpack.c.0.s8 %v900
    %v902 = vlaneseq
    %v903 = vshrl.u32 %v902, 7
    %v904 = vsub.s32 %v901, %v903
    %v905 = vrot.slane %v897, %v904
    %v907 = vunpack.c.l.s4 1983009808
    %v908 = vunpack.c.0.s8 %v907
    %v909 = vlaneseq
    %v910 = vshrl.u32 %v909, 7
    %v911 = vsub.s32 %v908, %v910
    %v912 = vrot.slane %v898, %v911
    %v913 = vcombine.low %v618, %v620
    %v914 = vcombine.high %v618, %v620
    %v916 = vunpack.c.l.s4 1983009808
    %v917 = vunpack.c.0.s8 %v916
    %v918 = vlaneseq
    %v919 = vshrl.u32 %v918, 7
    %v920 = vsub.s32 %v917, %v919
    %v921 = vrot.slane %v913, %v920
    %v923 = vunpack.c.l.s4 1983009808
    %v924 = vunpack.c.0.s8 %v923
    %v925 = vlaneseq
    %v926 = vshrl.u32 %v925, 7
    %v927 = vsub.s32 %v924, %v926
    %v928 = vrot.slane %v914, %v927
    %v929 = vcombine.low %v621, %v623
    %v930 = vcombine.high %v621, %v623
    %v932 = vunpack.c.l.s4 1983009808
    %v933 = vunpack.c.0.s8 %v932
    %v934 = vlaneseq
    %v935 = vshrl.u32 %v934, 7
    %v936 = vsub.s32 %v933, %v935
    %v937 = vrot.slane %v929, %v936
    %v939 = vunpack.c.l.s4 1983009808
    %v940 = vunpack.c.0.s8 %v939
    %v941 = vlaneseq
    %v942 = vshrl.u32 %v941, 7
    %v943 = vsub.s32 %v940, %v942
    %v944 = vrot.slane %v930, %v943
    %v945 = vcombine.low %v622, %v624
    %v946 = vcombine.high %v622, %v624
    %v948 = vunpack.c.l.s4 1983009808
    %v949 = vunpack.c.0.s8 %v948
    %v950 = vlaneseq
    %v951 = vshrl.u32 %v950, 7
    %v952 = vsub.s32 %v949, %v951
    %v953 = vrot.slane %v945, %v952
    %v955 = vunpack.c.l.s4 1983009808
    %v956 = vunpack.c.0.s8 %v955
    %v957 = vlaneseq
    %v958 = vshrl.u32 %v957, 7
    %v959 = vsub.s32 %v956, %v958
    %v960 = vrot.slane %v946, %v959
    %v961 = vcombine.low %v905, %v921
    %v962 = vcombine.high %v905, %v921
    %v964 = vunpack.c.l.s4 1934713408
    %v965 = vunpack.c.0.s8 %v964
    %v966 = vlaneseq
    %v967 = vshrl.u32 %v966, 7
    %v968 = vsub.s32 %v965, %v967
    %v969 = vrot.slane %v961, %v968
    %v971 = vunpack.c.l.s4 1934713408
    %v972 = vunpack.c.0.s8 %v971
    %v973 = vlaneseq
    %v974 = vshrl.u32 %v973, 7
    %v975 = vsub.s32 %v972, %v974
    %v976 = vrot.slane %v962, %v975
    %v977 = vcombine.low %v912, %v928
    %v978 = vcombine.high %v912, %v928
    %v980 = vunpack.c.l.s4 1934713408
    %v981 = vunpack.c.0.s8 %v980
    %v982 = vlaneseq
    %v983 = vshrl.u32 %v982, 7
    %v984 = vsub.s32 %v981, %v983
    %v985 = vrot.slane %v977, %v984
    %v987 = vunpack.c.l.s4 1934713408
    %v988 = vunpack.c.0.s8 %v987
    %v989 = vlaneseq
    %v990 = vshrl.u32 %v989, 7
    %v991 = vsub.s32 %v988, %v990
    %v992 = vrot.slane %v978, %v991
    %v993 = vcombine.low %v937, %v953
    %v994 = vcombine.high %v937, %v953
    %v996 = vunpack.c.l.s4 1934713408
    %v997 = vunpack.c.0.s8 %v996
    %v998 = vlaneseq
    %v999 = vshrl.u32 %v998, 7
    %v1000 = vsub.s32 %v997, %v999
    %v1001 = vrot.slane %v993, %v1000
    %v1003 = vunpack.c.l.s4 1934713408
    %v1004 = vunpack.c.0.s8 %v1003
    %v1005 = vlaneseq
    %v1006 = vshrl.u32 %v1005, 7
    %v1007 = vsub.s32 %v1004, %v1006
    %v1008 = vrot.slane %v994, %v1007
    %v1009 = vcombine.low %v944, %v960
    %v1010 = vcombine.high %v944, %v960
    %v1012 = vunpack.c.l.s4 1934713408
    %v1013 = vunpack.c.0.s8 %v1012
    %v1014 = vlaneseq
    %v1015 = vshrl.u32 %v1014, 7
    %v1016 = vsub.s32 %v1013, %v1015
    %v1017 = vrot.slane %v1009, %v1016
    %v1019 = vunpack.c.l.s4 1934713408
    %v1020 = vunpack.c.0.s8 %v1019
    %v1021 = vlaneseq
    %v1022 = vshrl.u32 %v1021, 7
    %v1023 = vsub.s32 %v1020, %v1022
    %v1024 = vrot.slane %v1010, %v1023
    %v1025 = vcombine.low %v969, %v1001
    %v1026 = vcombine.high %v969, %v1001
    %v1027 = vcombine.low %v976, %v1008
    %v1028 = vcombine.high %v976, %v1008
    %v1029 = vcombine.low %v985, %v1017
    %v1030 = vcombine.high %v985, %v1017
    %v1031 = vcombine.low %v992, %v1024
    %v1032 = vcombine.high %v992, %v1024
    %v1033 = vcombine.low %v665, %v672
    %v1035 = vunpack.c.l.s4 1983009808
    %v1036 = vunpack.c.0.s8 %v1035
    %v1037 = vlaneseq
    %v1038 = vshrl.u32 %v1037, 7
    %v1039 = vsub.s32 %v1036, %v1038
    %v1040 = vrot.slane %v1033, %v1039
    %v1041 = vcombine.low %v689, %v690
    %v1043 = vunpack.c.l.s4 1983009808
    %v1044 = vunpack.c.0.s8 %v1043
    %v1045 = vlaneseq
    %v1046 = vshrl.u32 %v1045, 7
    %v1047 = vsub.s32 %v1044, %v1046
    %v1048 = vrot.slane %v1041, %v1047
    %v1049 = vcombine.low %v681, %v688
    %v1051 = vunpack.c.l.s4 1983009808
    %v1052 = vunpack.c.0.s8 %v1051
    %v1053 = vlaneseq
    %v1054 = vshrl.u32 %v1053, 7
    %v1055 = vsub.s32 %v1052, %v1054
    %v1056 = vrot.slane %v1049, %v1055
    %v1057 = vcombine.low %v691, %v692
    %v1059 = vunpack.c.l.s4 1983009808
    %v1060 = vunpack.c.0.s8 %v1059
    %v1061 = vlaneseq
    %v1062 = vshrl.u32 %v1061, 7
    %v1063 = vsub.s32 %v1060, %v1062
    %v1064 = vrot.slane %v1057, %v1063
    %v1065 = vcombine.low %v1040, %v1048
    %v1066 = vcombine.high %v1040, %v1048
    %v1068 = vunpack.c.l.s4 1934713408
    %v1069 = vunpack.c.0.s8 %v1068
    %v1070 = vlaneseq
    %v1071 = vshrl.u32 %v1070, 7
    %v1072 = vsub.s32 %v1069, %v1071
    %v1073 = vrot.slane %v1065, %v1072
    %v1075 = vunpack.c.l.s4 1934713408
    %v1076 = vunpack.c.0.s8 %v1075
    %v1077 = vlaneseq
    %v1078 = vshrl.u32 %v1077, 7
    %v1079 = vsub.s32 %v1076, %v1078
    %v1080 = vrot.slane %v1066, %v1079
    %v1081 = vcombine.low %v1056, %v1064
    %v1082 = vcombine.high %v1056, %v1064
    %v1084 = vunpack.c.l.s4 1934713408
    %v1085 = vunpack.c.0.s8 %v1084
    %v1086 = vlaneseq
    %v1087 = vshrl.u32 %v1086, 7
    %v1088 = vsub.s32 %v1085, %v1087
    %v1089 = vrot.slane %v1081, %v1088
    %v1091 = vunpack.c.l.s4 1934713408
    %v1092 = vunpack.c.0.s8 %v1091
    %v1093 = vlaneseq
    %v1094 = vshrl.u32 %v1093, 7
    %v1095 = vsub.s32 %v1092, %v1094
    %v1096 = vrot.slane %v1082, %v1095
    %v1097 = vcombine.low %v1073, %v1089
    %v1098 = vcombine.high %v1073, %v1089
    %v1099 = vcombine.low %v1080, %v1096
    %v1100 = vcombine.high %v1080, %v1096
    %v1101 = vpack.c.bf16 %v821, %v821
    %v1102 = vpack.c.bf16 %v822, %v822
    %v1103 = vpack.c.bf16 %v823, %v823
    %v1104 = vpack.c.bf16 %v824, %v824
    %v1105 = vpack.c.bf16 %v1025, %v1025
    %v1106 = vpack.c.bf16 %v1026, %v1026
    %v1107 = vpack.c.bf16 %v1027, %v1027
    %v1108 = vpack.c.bf16 %v1028, %v1028
    %v1109 = vpack.c.bf16 %v825, %v825
    %v1110 = vpack.c.bf16 %v826, %v826
    %v1111 = vpack.c.bf16 %v827, %v827
    %v1112 = vpack.c.bf16 %v828, %v828
    %v1113 = vpack.c.bf16 %v1029, %v1029
    %v1114 = vpack.c.bf16 %v1030, %v1030
    %v1115 = vpack.c.bf16 %v1031, %v1031
    %v1116 = vpack.c.bf16 %v1032, %v1032
    %vm1117 = vcmask 64512
    %v1119 = vsel %vm1117, %v1101, 0
    %v1122 = vsel %vm1117, %v1109, 0
    %1124 = vmatprep.subr.bf16.mxu0 0
    %1125 = vmatpush1.bf16.xpose.msra.mxu0 %v1122
    %1126 = vmatprep.subr.bf16.mxu0 0
    %1127 = vmatpush1.bf16.xpose.msra.mxu0 0
    %1128 = vmatprep.subr.bf16.mxu0 0
    %1129 = vmatpush1.bf16.xpose.msra.mxu0 0
    %1130 = vmatprep.subr.bf16.mxu0 0
    %1131 = vmatpush1.bf16.xpose.msra.mxu0 0
    %1132 = vmatprep.subr.bf16.mxu0 0
    %1133 = vmatpush1.bf16.xpose.msra.mxu0 0
    %1134 = vmatprep.subr.bf16.mxu0 0
    %1135 = vmatpush1.bf16.xpose.msra.mxu0 0
    %1136 = vmatprep.subr.bf16.mxu0 0
    %1137 = vmatpush1.bf16.xpose.msra.mxu0 0
    %1138 = vmatprep.subr.bf16.mxu0 0
    %1139 = vmatpush1.bf16.xpose.msra.mxu0 0
    %1140 = vmatprep.subr.bf16.mxu0 0
    %1141 = vmatpush1.bf16.xpose.msra.mxu0 0
    %1142 = vmatprep.subr.bf16.mxu0 0
    %1143 = vmatpush1.bf16.xpose.msra.mxu0 0
    %1144 = vmatprep.subr.bf16.mxu0 0
    %1145 = vmatpush1.bf16.xpose.msra.mxu0 0
    %1146 = vmatprep.subr.bf16.mxu0 0
    %1147 = vmatpush1.bf16.xpose.msra.mxu0 0
    %1148 = vmatprep.subr.bf16.mxu0 0
    %1149 = vmatpush1.bf16.xpose.msra.mxu0 0
    %1150 = vmatprep.subr.bf16.mxu0 0
    %1151 = vmatpush1.bf16.xpose.msra.mxu0 0
    %1152 = vmatprep.subr.bf16.mxu0 0
    %1153 = vmatpush1.bf16.xpose.msra.mxu0 0
    %1154 = vmatprep.subr.bf16.mxu0 0
    %1155 = vmatpush1.bf16.xpose.msra.mxu0 0
    %1156 = vmatprep.mubr.bf16.mxu0 0
    %1157 = vmatmul.mubr.bf16.gmra.mrb[0].mxu0 %v1119
    %v1158 = vpop.f32.mrb[0].mxu0
    %v1159 = vadd.f32 0.0, %v1158
    %v1160 = vpop.f32.mrb[0].mxu0
    %v1161 = vpop.f32.mrb[0].mxu0
    %v1162 = vpop.f32.mrb[0].mxu0
    %1163 = vdwg.mxu0
    %v1165 = vsel %vm1117, %v1102, 0
    %v1168 = vsel %vm1117, %v1110, 0
    %1170 = vmatprep.subr.bf16.mxu0 0
    %1171 = vmatpush1.bf16.xpose.msra.mxu0 %v1168
    %1172 = vmatprep.subr.bf16.mxu0 0
    %1173 = vmatpush1.bf16.xpose.msra.mxu0 0
    %1174 = vmatprep.subr.bf16.mxu0 0
    %1175 = vmatpush1.bf16.xpose.msra.mxu0 0
    %1176 = vmatprep.subr.bf16.mxu0 0
    %1177 = vmatpush1.bf16.xpose.msra.mxu0 0
    %1178 = vmatprep.subr.bf16.mxu0 0
    %1179 = vmatpush1.bf16.xpose.msra.mxu0 0
    %1180 = vmatprep.subr.bf16.mxu0 0
    %1181 = vmatpush1.bf16.xpose.msra.mxu0 0
    %1182 = vmatprep.subr.bf16.mxu0 0
    %1183 = vmatpush1.bf16.xpose.msra.mxu0 0
    %1184 = vmatprep.subr.bf16.mxu0 0
    %1185 = vmatpush1.bf16.xpose.msra.mxu0 0
    %1186 = vmatprep.subr.bf16.mxu0 0
    %1187 = vmatpush1.bf16.xpose.msra.mxu0 0
    %1188 = vmatprep.subr.bf16.mxu0 0
    %1189 = vmatpush1.bf16.xpose.msra.mxu0 0
    %1190 = vmatprep.subr.bf16.mxu0 0
    %1191 = vmatpush1.bf16.xpose.msra.mxu0 0
    %1192 = vmatprep.subr.bf16.mxu0 0
    %1193 = vmatpush1.bf16.xpose.msra.mxu0 0
    %1194 = vmatprep.subr.bf16.mxu0 0
    %1195 = vmatpush1.bf16.xpose.msra.mxu0 0
    %1196 = vmatprep.subr.bf16.mxu0 0
    %1197 = vmatpush1.bf16.xpose.msra.mxu0 0
    %1198 = vmatprep.subr.bf16.mxu0 0
    %1199 = vmatpush1.bf16.xpose.msra.mxu0 0
    %1200 = vmatprep.subr.bf16.mxu0 0
    %1201 = vmatpush1.bf16.xpose.msra.mxu0 0
    %1202 = vmatprep.mubr.bf16.mxu0 0
    %1203 = vmatmul.mubr.bf16.gmra.mrb[0].mxu0 %v1165
    %v1204 = vpop.f32.mrb[0].mxu0
    %v1205 = vadd.f32 0.0, %v1204
    %v1206 = vpop.f32.mrb[0].mxu0
    %v1207 = vpop.f32.mrb[0].mxu0
    %v1208 = vpop.f32.mrb[0].mxu0
    %1209 = vdwg.mxu0
    %v1211 = vsel %vm1117, %v1103, 0
    %v1214 = vsel %vm1117, %v1111, 0
    %1216 = vmatprep.subr.bf16.mxu0 0
    %1217 = vmatpush1.bf16.xpose.msra.mxu0 %v1214
    %1218 = vmatprep.subr.bf16.mxu0 0
    %1219 = vmatpush1.bf16.xpose.msra.mxu0 0
    %1220 = vmatprep.subr.bf16.mxu0 0
    %1221 = vmatpush1.bf16.xpose.msra.mxu0 0
    %1222 = vmatprep.subr.bf16.mxu0 0
    %1223 = vmatpush1.bf16.xpose.msra.mxu0 0
    %1224 = vmatprep.subr.bf16.mxu0 0
    %1225 = vmatpush1.bf16.xpose.msra.mxu0 0
    %1226 = vmatprep.subr.bf16.mxu0 0
    %1227 = vmatpush1.bf16.xpose.msra.mxu0 0
    %1228 = vmatprep.subr.bf16.mxu0 0
    %1229 = vmatpush1.bf16.xpose.msra.mxu0 0
    %1230 = vmatprep.subr.bf16.mxu0 0
    %1231 = vmatpush1.bf16.xpose.msra.mxu0 0
    %1232 = vmatprep.subr.bf16.mxu0 0
    %1233 = vmatpush1.bf16.xpose.msra.mxu0 0
    %1234 = vmatprep.subr.bf16.mxu0 0
    %1235 = vmatpush1.bf16.xpose.msra.mxu0 0
    %1236 = vmatprep.subr.bf16.mxu0 0
    %1237 = vmatpush1.bf16.xpose.msra.mxu0 0
    %1238 = vmatprep.subr.bf16.mxu0 0
    %1239 = vmatpush1.bf16.xpose.msra.mxu0 0
    %1240 = vmatprep.subr.bf16.mxu0 0
    %1241 = vmatpush1.bf16.xpose.msra.mxu0 0
    %1242 = vmatprep.subr.bf16.mxu0 0
    %1243 = vmatpush1.bf16.xpose.msra.mxu0 0
    %1244 = vmatprep.subr.bf16.mxu0 0
    %1245 = vmatpush1.bf16.xpose.msra.mxu0 0
    %1246 = vmatprep.subr.bf16.mxu0 0
    %1247 = vmatpush1.bf16.xpose.msra.mxu0 0
    %1248 = vmatprep.mubr.bf16.mxu0 0
    %1249 = vmatmul.mubr.bf16.gmra.mrb[0].mxu0 %v1211
    %v1250 = vpop.f32.mrb[0].mxu0
    %v1251 = vadd.f32 0.0, %v1250
    %v1252 = vpop.f32.mrb[0].mxu0
    %v1253 = vpop.f32.mrb[0].mxu0
    %v1254 = vpop.f32.mrb[0].mxu0
    %1255 = vdwg.mxu0
    %v1257 = vsel %vm1117, %v1104, 0
    %v1260 = vsel %vm1117, %v1112, 0
    %1262 = vmatprep.subr.bf16.mxu0 0
    %1263 = vmatpush1.bf16.xpose.msra.mxu0 %v1260
    %1264 = vmatprep.subr.bf16.mxu0 0
    %1265 = vmatpush1.bf16.xpose.msra.mxu0 0
    %1266 = vmatprep.subr.bf16.mxu0 0
    %1267 = vmatpush1.bf16.xpose.msra.mxu0 0
    %1268 = vmatprep.subr.bf16.mxu0 0
    %1269 = vmatpush1.bf16.xpose.msra.mxu0 0
    %1270 = vmatprep.subr.bf16.mxu0 0
    %1271 = vmatpush1.bf16.xpose.msra.mxu0 0
    %1272 = vmatprep.subr.bf16.mxu0 0
    %1273 = vmatpush1.bf16.xpose.msra.mxu0 0
    %1274 = vmatprep.subr.bf16.mxu0 0
    %1275 = vmatpush1.bf16.xpose.msra.mxu0 0
    %1276 = vmatprep.subr.bf16.mxu0 0
    %1277 = vmatpush1.bf16.xpose.msra.mxu0 0
    %1278 = vmatprep.subr.bf16.mxu0 0
    %1279 = vmatpush1.bf16.xpose.msra.mxu0 0
    %1280 = vmatprep.subr.bf16.mxu0 0
    %1281 = vmatpush1.bf16.xpose.msra.mxu0 0
    %1282 = vmatprep.subr.bf16.mxu0 0
    %1283 = vmatpush1.bf16.xpose.msra.mxu0 0
    %1284 = vmatprep.subr.bf16.mxu0 0
    %1285 = vmatpush1.bf16.xpose.msra.mxu0 0
    %1286 = vmatprep.subr.bf16.mxu0 0
    %1287 = vmatpush1.bf16.xpose.msra.mxu0 0
    %1288 = vmatprep.subr.bf16.mxu0 0
    %1289 = vmatpush1.bf16.xpose.msra.mxu0 0
    %1290 = vmatprep.subr.bf16.mxu0 0
    %1291 = vmatpush1.bf16.xpose.msra.mxu0 0
    %1292 = vmatprep.subr.bf16.mxu0 0
    %1293 = vmatpush1.bf16.xpose.msra.mxu0 0
    %1294 = vmatprep.mubr.bf16.mxu0 0
    %1295 = vmatmul.mubr.bf16.gmra.mrb[0].mxu0 %v1257
    %v1296 = vpop.f32.mrb[0].mxu0
    %v1297 = vadd.f32 0.0, %v1296
    %v1298 = vpop.f32.mrb[0].mxu0
    %v1299 = vpop.f32.mrb[0].mxu0
    %v1300 = vpop.f32.mrb[0].mxu0
    %1301 = vdwg.mxu0
    %v1303 = vsel %vm1117, %v1105, 0
    %v1306 = vsel %vm1117, %v1113, 0
    %1308 = vmatprep.subr.bf16.mxu0 0
    %1309 = vmatpush1.bf16.xpose.msra.mxu0 %v1306
    %1310 = vmatprep.subr.bf16.mxu0 0
    %1311 = vmatpush1.bf16.xpose.msra.mxu0 0
    %1312 = vmatprep.subr.bf16.mxu0 0
    %1313 = vmatpush1.bf16.xpose.msra.mxu0 0
    %1314 = vmatprep.subr.bf16.mxu0 0
    %1315 = vmatpush1.bf16.xpose.msra.mxu0 0
    %1316 = vmatprep.subr.bf16.mxu0 0
    %1317 = vmatpush1.bf16.xpose.msra.mxu0 0
    %1318 = vmatprep.subr.bf16.mxu0 0
    %1319 = vmatpush1.bf16.xpose.msra.mxu0 0
    %1320 = vmatprep.subr.bf16.mxu0 0
    %1321 = vmatpush1.bf16.xpose.msra.mxu0 0
    %1322 = vmatprep.subr.bf16.mxu0 0
    %1323 = vmatpush1.bf16.xpose.msra.mxu0 0
    %1324 = vmatprep.subr.bf16.mxu0 0
    %1325 = vmatpush1.bf16.xpose.msra.mxu0 0
    %1326 = vmatprep.subr.bf16.mxu0 0
    %1327 = vmatpush1.bf16.xpose.msra.mxu0 0
    %1328 = vmatprep.subr.bf16.mxu0 0
    %1329 = vmatpush1.bf16.xpose.msra.mxu0 0
    %1330 = vmatprep.subr.bf16.mxu0 0
    %1331 = vmatpush1.bf16.xpose.msra.mxu0 0
    %1332 = vmatprep.subr.bf16.mxu0 0
    %1333 = vmatpush1.bf16.xpose.msra.mxu0 0
    %1334 = vmatprep.subr.bf16.mxu0 0
    %1335 = vmatpush1.bf16.xpose.msra.mxu0 0
    %1336 = vmatprep.subr.bf16.mxu0 0
    %1337 = vmatpush1.bf16.xpose.msra.mxu0 0
    %1338 = vmatprep.subr.bf16.mxu0 0
    %1339 = vmatpush1.bf16.xpose.msra.mxu0 0
    %1340 = vmatprep.mubr.bf16.mxu0 0
    %1341 = vmatmul.mubr.bf16.gmra.mrb[0].mxu0 %v1303
    %v1342 = vpop.f32.mrb[0].mxu0
    %v1343 = vadd.f32 0.0, %v1342
    %v1344 = vpop.f32.mrb[0].mxu0
    %v1345 = vpop.f32.mrb[0].mxu0
    %v1346 = vpop.f32.mrb[0].mxu0
    %1347 = vdwg.mxu0
    %v1349 = vsel %vm1117, %v1106, 0
    %v1352 = vsel %vm1117, %v1114, 0
    %1354 = vmatprep.subr.bf16.mxu0 0
    %1355 = vmatpush1.bf16.xpose.msra.mxu0 %v1352
    %1356 = vmatprep.subr.bf16.mxu0 0
    %1357 = vmatpush1.bf16.xpose.msra.mxu0 0
    %1358 = vmatprep.subr.bf16.mxu0 0
    %1359 = vmatpush1.bf16.xpose.msra.mxu0 0
    %1360 = vmatprep.subr.bf16.mxu0 0
    %1361 = vmatpush1.bf16.xpose.msra.mxu0 0
    %1362 = vmatprep.subr.bf16.mxu0 0
    %1363 = vmatpush1.bf16.xpose.msra.mxu0 0
    %1364 = vmatprep.subr.bf16.mxu0 0
    %1365 = vmatpush1.bf16.xpose.msra.mxu0 0
    %1366 = vmatprep.subr.bf16.mxu0 0
    %1367 = vmatpush1.bf16.xpose.msra.mxu0 0
    %1368 = vmatprep.subr.bf16.mxu0 0
    %1369 = vmatpush1.bf16.xpose.msra.mxu0 0
    %1370 = vmatprep.subr.bf16.mxu0 0
    %1371 = vmatpush1.bf16.xpose.msra.mxu0 0
    %1372 = vmatprep.subr.bf16.mxu0 0
    %1373 = vmatpush1.bf16.xpose.msra.mxu0 0
    %1374 = vmatprep.subr.bf16.mxu0 0
    %1375 = vmatpush1.bf16.xpose.msra.mxu0 0
    %1376 = vmatprep.subr.bf16.mxu0 0
    %1377 = vmatpush1.bf16.xpose.msra.mxu0 0
    %1378 = vmatprep.subr.bf16.mxu0 0
    %1379 = vmatpush1.bf16.xpose.msra.mxu0 0
    %1380 = vmatprep.subr.bf16.mxu0 0
    %1381 = vmatpush1.bf16.xpose.msra.mxu0 0
    %1382 = vmatprep.subr.bf16.mxu0 0
    %1383 = vmatpush1.bf16.xpose.msra.mxu0 0
    %1384 = vmatprep.subr.bf16.mxu0 0
    %1385 = vmatpush1.bf16.xpose.msra.mxu0 0
    %1386 = vmatprep.mubr.bf16.mxu0 0
    %1387 = vmatmul.mubr.bf16.gmra.mrb[0].mxu0 %v1349
    %v1388 = vpop.f32.mrb[0].mxu0
    %v1389 = vadd.f32 0.0, %v1388
    %v1390 = vpop.f32.mrb[0].mxu0
    %v1391 = vpop.f32.mrb[0].mxu0
    %v1392 = vpop.f32.mrb[0].mxu0
    %1393 = vdwg.mxu0
    %v1395 = vsel %vm1117, %v1107, 0
    %v1398 = vsel %vm1117, %v1115, 0
    %1400 = vmatprep.subr.bf16.mxu0 0
    %1401 = vmatpush1.bf16.xpose.msra.mxu0 %v1398
    %1402 = vmatprep.subr.bf16.mxu0 0
    %1403 = vmatpush1.bf16.xpose.msra.mxu0 0
    %1404 = vmatprep.subr.bf16.mxu0 0
    %1405 = vmatpush1.bf16.xpose.msra.mxu0 0
    %1406 = vmatprep.subr.bf16.mxu0 0
    %1407 = vmatpush1.bf16.xpose.msra.mxu0 0
    %1408 = vmatprep.subr.bf16.mxu0 0
    %1409 = vmatpush1.bf16.xpose.msra.mxu0 0
    %1410 = vmatprep.subr.bf16.mxu0 0
    %1411 = vmatpush1.bf16.xpose.msra.mxu0 0
    %1412 = vmatprep.subr.bf16.mxu0 0
    %1413 = vmatpush1.bf16.xpose.msra.mxu0 0
    %1414 = vmatprep.subr.bf16.mxu0 0
    %1415 = vmatpush1.bf16.xpose.msra.mxu0 0
    %1416 = vmatprep.subr.bf16.mxu0 0
    %1417 = vmatpush1.bf16.xpose.msra.mxu0 0
    %1418 = vmatprep.subr.bf16.mxu0 0
    %1419 = vmatpush1.bf16.xpose.msra.mxu0 0
    %1420 = vmatprep.subr.bf16.mxu0 0
    %1421 = vmatpush1.bf16.xpose.msra.mxu0 0
    %1422 = vmatprep.subr.bf16.mxu0 0
    %1423 = vmatpush1.bf16.xpose.msra.mxu0 0
    %1424 = vmatprep.subr.bf16.mxu0 0
    %1425 = vmatpush1.bf16.xpose.msra.mxu0 0
    %1426 = vmatprep.subr.bf16.mxu0 0
    %1427 = vmatpush1.bf16.xpose.msra.mxu0 0
    %1428 = vmatprep.subr.bf16.mxu0 0
    %1429 = vmatpush1.bf16.xpose.msra.mxu0 0
    %1430 = vmatprep.subr.bf16.mxu0 0
    %1431 = vmatpush1.bf16.xpose.msra.mxu0 0
    %1432 = vmatprep.mubr.bf16.mxu0 0
    %1433 = vmatmul.mubr.bf16.gmra.mrb[0].mxu0 %v1395
    %v1434 = vpop.f32.mrb[0].mxu0
    %v1435 = vadd.f32 0.0, %v1434
    %v1436 = vpop.f32.mrb[0].mxu0
    %v1437 = vpop.f32.mrb[0].mxu0
    %v1438 = vpop.f32.mrb[0].mxu0
    %1439 = vdwg.mxu0
    %v1441 = vsel %vm1117, %v1108, 0
    %v1444 = vsel %vm1117, %v1116, 0
    %1446 = vmatprep.subr.bf16.mxu0 0
    %1447 = vmatpush1.bf16.xpose.msra.mxu0 %v1444
    %1448 = vmatprep.subr.bf16.mxu0 0
    %1449 = vmatpush1.bf16.xpose.msra.mxu0 0
    %1450 = vmatprep.subr.bf16.mxu0 0
    %1451 = vmatpush1.bf16.xpose.msra.mxu0 0
    %1452 = vmatprep.subr.bf16.mxu0 0
    %1453 = vmatpush1.bf16.xpose.msra.mxu0 0
    %1454 = vmatprep.subr.bf16.mxu0 0
    %1455 = vmatpush1.bf16.xpose.msra.mxu0 0
    %1456 = vmatprep.subr.bf16.mxu0 0
    %1457 = vmatpush1.bf16.xpose.msra.mxu0 0
    %1458 = vmatprep.subr.bf16.mxu0 0
    %1459 = vmatpush1.bf16.xpose.msra.mxu0 0
    %1460 = vmatprep.subr.bf16.mxu0 0
    %1461 = vmatpush1.bf16.xpose.msra.mxu0 0
    %1462 = vmatprep.subr.bf16.mxu0 0
    %1463 = vmatpush1.bf16.xpose.msra.mxu0 0
    %1464 = vmatprep.subr.bf16.mxu0 0
    %1465 = vmatpush1.bf16.xpose.msra.mxu0 0
    %1466 = vmatprep.subr.bf16.mxu0 0
    %1467 = vmatpush1.bf16.xpose.msra.mxu0 0
    %1468 = vmatprep.subr.bf16.mxu0 0
    %1469 = vmatpush1.bf16.xpose.msra.mxu0 0
    %1470 = vmatprep.subr.bf16.mxu0 0
    %1471 = vmatpush1.bf16.xpose.msra.mxu0 0
    %1472 = vmatprep.subr.bf16.mxu0 0
    %1473 = vmatpush1.bf16.xpose.msra.mxu0 0
    %1474 = vmatprep.subr.bf16.mxu0 0
    %1475 = vmatpush1.bf16.xpose.msra.mxu0 0
    %1476 = vmatprep.subr.bf16.mxu0 0
    %1477 = vmatpush1.bf16.xpose.msra.mxu0 0
    %1478 = vmatprep.mubr.bf16.mxu0 0
    %1479 = vmatmul.mubr.bf16.gmra.mrb[0].mxu0 %v1441
    %v1480 = vpop.f32.mrb[0].mxu0
    %v1481 = vadd.f32 0.0, %v1480
    %v1482 = vpop.f32.mrb[0].mxu0
    %v1483 = vpop.f32.mrb[0].mxu0
    %v1484 = vpop.f32.mrb[0].mxu0
    %1485 = vdwg.mxu0
    %v1486 = vmul.f32 %v1159, 0.35355338
    %v1487 = vmul.f32 %v1205, 0.35355338
    %v1488 = vmul.f32 %v1251, 0.35355338
    %v1489 = vmul.f32 %v1297, 0.35355338
    %v1490 = vmul.f32 %v1343, 0.35355338
    %v1491 = vmul.f32 %v1389, 0.35355338
    %v1492 = vmul.f32 %v1435, 0.35355338
    %v1493 = vmul.f32 %v1481, 0.35355338
    %v1494 = vadd.f32 %v1486, %v100
    %v1495 = vadd.f32 %v1487, %v100
    %v1496 = vadd.f32 %v1488, %v100
    %v1497 = vadd.f32 %v1489, %v100
    %v1498 = vadd.f32 %v1490, %v104
    %v1499 = vadd.f32 %v1491, %v104
    %v1500 = vadd.f32 %v1492, %v104
    %v1501 = vadd.f32 %v1493, %v104
    %v1502 = vsel %vm1117, %v1494, -inf
    %1503 = vmax.xlane.f32.xlu0 %v1502
    %v1504 = vpop.xlane.xlu0 %1503
    %v1505 = vsel %vm1117, %v1495, -inf
    %1506 = vmax.xlane.f32.xlu0 %v1505
    %v1507 = vpop.xlane.xlu0 %1506
    %v1508 = vsel %vm1117, %v1496, -inf
    %1509 = vmax.xlane.f32.xlu0 %v1508
    %v1510 = vpop.xlane.xlu0 %1509
    %v1511 = vsel %vm1117, %v1497, -inf
    %1512 = vmax.xlane.f32.xlu0 %v1511
    %v1513 = vpop.xlane.xlu0 %1512
    %v1514 = vsel %vm1117, %v1498, -inf
    %1515 = vmax.xlane.f32.xlu0 %v1514
    %v1516 = vpop.xlane.xlu0 %1515
    %v1517 = vsel %vm1117, %v1499, -inf
    %1518 = vmax.xlane.f32.xlu0 %v1517
    %v1519 = vpop.xlane.xlu0 %1518
    %v1520 = vsel %vm1117, %v1500, -inf
    %1521 = vmax.xlane.f32.xlu0 %v1520
    %v1522 = vpop.xlane.xlu0 %1521
    %v1523 = vsel %vm1117, %v1501, -inf
    %1524 = vmax.xlane.f32.xlu0 %v1523
    %v1525 = vpop.xlane.xlu0 %1524
    %v1526 = vsub.f32 %v1494, %v1504
    %v1527 = vsub.f32 %v1495, %v1507
    %v1528 = vsub.f32 %v1496, %v1510
    %v1529 = vsub.f32 %v1497, %v1513
    %v1530 = vsub.f32 %v1498, %v1516
    %v1531 = vsub.f32 %v1499, %v1519
    %v1532 = vsub.f32 %v1500, %v1522
    %v1533 = vsub.f32 %v1501, %v1525
    %v1534 = vmul.f32 %v1526, 1.442695
    %v1535 = vpow.pop %v1534
    %v1536 = vmul.f32 %v1527, 1.442695
    %v1537 = vpow.pop %v1536
    %v1538 = vmul.f32 %v1528, 1.442695
    %v1539 = vpow.pop %v1538
    %v1540 = vmul.f32 %v1529, 1.442695
    %v1541 = vpow.pop %v1540
    %v1542 = vmul.f32 %v1530, 1.442695
    %v1543 = vpow.pop %v1542
    %v1544 = vmul.f32 %v1531, 1.442695
    %v1545 = vpow.pop %v1544
    %v1546 = vmul.f32 %v1532, 1.442695
    %v1547 = vpow.pop %v1546
    %v1548 = vmul.f32 %v1533, 1.442695
    %v1549 = vpow.pop %v1548
    %v1550 = vsel %vm1117, %v1535, 0.0
    %1551 = vadd.xlane.f32.xlu0 %v1550
    %v1552 = vpop.xlane.xlu0 %1551
    %v1553 = vsel %vm1117, %v1537, 0.0
    %1554 = vadd.xlane.f32.xlu0 %v1553
    %v1555 = vpop.xlane.xlu0 %1554
    %v1556 = vsel %vm1117, %v1539, 0.0
    %1557 = vadd.xlane.f32.xlu0 %v1556
    %v1558 = vpop.xlane.xlu0 %1557
    %v1559 = vsel %vm1117, %v1541, 0.0
    %1560 = vadd.xlane.f32.xlu0 %v1559
    %v1561 = vpop.xlane.xlu0 %1560
    %v1562 = vsel %vm1117, %v1543, 0.0
    %1563 = vadd.xlane.f32.xlu0 %v1562
    %v1564 = vpop.xlane.xlu0 %1563
    %v1565 = vsel %vm1117, %v1545, 0.0
    %1566 = vadd.xlane.f32.xlu0 %v1565
    %v1567 = vpop.xlane.xlu0 %1566
    %v1568 = vsel %vm1117, %v1547, 0.0
    %1569 = vadd.xlane.f32.xlu0 %v1568
    %v1570 = vpop.xlane.xlu0 %1569
    %v1571 = vsel %vm1117, %v1549, 0.0
    %1572 = vadd.xlane.f32.xlu0 %v1571
    %v1573 = vpop.xlane.xlu0 %1572
    %v1574 = vrcp.pop %v1552
    %v1575 = vrcp.pop %v1555
    %v1576 = vrcp.pop %v1558
    %v1577 = vrcp.pop %v1561
    %v1578 = vrcp.pop %v1564
    %v1579 = vrcp.pop %v1567
    %v1580 = vrcp.pop %v1570
    %v1581 = vrcp.pop %v1573
    %v1582 = vmul.f32 %v1535, %v1574
    %v1583 = vmul.f32 %v1537, %v1575
    %v1584 = vmul.f32 %v1539, %v1576
    %v1585 = vmul.f32 %v1541, %v1577
    %v1586 = vmul.f32 %v1543, %v1578
    %v1587 = vmul.f32 %v1545, %v1579
    %v1588 = vmul.f32 %v1547, %v1580
    %v1589 = vmul.f32 %v1549, %v1581
    %v1590 = vpack.c.bf16 %v1582, %v1582
    %v1591 = vpack.c.bf16 %v1583, %v1583
    %v1592 = vpack.c.bf16 %v1584, %v1584
    %v1593 = vpack.c.bf16 %v1585, %v1585
    %v1594 = vpack.c.bf16 %v1586, %v1586
    %v1595 = vpack.c.bf16 %v1587, %v1587
    %v1596 = vpack.c.bf16 %v1588, %v1588
    %v1597 = vpack.c.bf16 %v1589, %v1589
    %v1598 = vpack.c.bf16 %v893, %v893
    %v1599 = vpack.c.bf16 %v894, %v894
    %v1600 = vpack.c.bf16 %v895, %v895
    %v1601 = vpack.c.bf16 %v896, %v896
    %v1602 = vpack.c.bf16 %v1097, %v1097
    %v1603 = vpack.c.bf16 %v1098, %v1098
    %v1604 = vpack.c.bf16 %v1099, %v1099
    %v1605 = vpack.c.bf16 %v1100, %v1100
    %v1607 = vsel %vm1117, %v1590, 0
    %vm1609 = vcmask 1043456
    %v1611 = vsel %vm1609, %v1598, 0
    %1613 = vmatprep.subr.bf16.mxu0 0
    %1614 = vmatpush1.bf16.msra.mxu0 %v1611
    %1615 = vmatprep.subr.bf16.mxu0 0
    %1616 = vmatpush1.bf16.msra.mxu0 0
    %1617 = vmatprep.subr.bf16.mxu0 0
    %1618 = vmatpush1.bf16.msra.mxu0 0
    %1619 = vmatprep.subr.bf16.mxu0 0
    %1620 = vmatpush1.bf16.msra.mxu0 0
    %1621 = vmatprep.subr.bf16.mxu0 0
    %1622 = vmatpush1.bf16.msra.mxu0 0
    %1623 = vmatprep.subr.bf16.mxu0 0
    %1624 = vmatpush1.bf16.msra.mxu0 0
    %1625 = vmatprep.subr.bf16.mxu0 0
    %1626 = vmatpush1.bf16.msra.mxu0 0
    %1627 = vmatprep.subr.bf16.mxu0 0
    %1628 = vmatpush1.bf16.msra.mxu0 0
    %1629 = vmatprep.subr.bf16.mxu0 0
    %1630 = vmatpush1.bf16.msra.mxu0 0
    %1631 = vmatprep.subr.bf16.mxu0 0
    %1632 = vmatpush1.bf16.msra.mxu0 0
    %1633 = vmatprep.subr.bf16.mxu0 0
    %1634 = vmatpush1.bf16.msra.mxu0 0
    %1635 = vmatprep.subr.bf16.mxu0 0
    %1636 = vmatpush1.bf16.msra.mxu0 0
    %1637 = vmatprep.subr.bf16.mxu0 0
    %1638 = vmatpush1.bf16.msra.mxu0 0
    %1639 = vmatprep.subr.bf16.mxu0 0
    %1640 = vmatpush1.bf16.msra.mxu0 0
    %1641 = vmatprep.subr.bf16.mxu0 0
    %1642 = vmatpush1.bf16.msra.mxu0 0
    %1643 = vmatprep.subr.bf16.mxu0 0
    %1644 = vmatpush1.bf16.msra.mxu0 0
    %1645 = vmatprep.mubr.bf16.mxu0 0
    %1646 = vmatmul.mubr.bf16.gmra.mrb[0].mxu0 %v1607
    %v1647 = vpop.f32.mrb[0].mxu0
    %v1648 = vadd.f32 0.0, %v1647
    %v1649 = vpop.f32.mrb[0].mxu0
    %v1650 = vpop.f32.mrb[0].mxu0
    %v1651 = vpop.f32.mrb[0].mxu0
    %1652 = vdwg.mxu0
    %v1654 = vsel %vm1117, %v1591, 0
    %v1657 = vsel %vm1609, %v1599, 0
    %1659 = vmatprep.subr.bf16.mxu0 0
    %1660 = vmatpush1.bf16.msra.mxu0 %v1657
    %1661 = vmatprep.subr.bf16.mxu0 0
    %1662 = vmatpush1.bf16.msra.mxu0 0
    %1663 = vmatprep.subr.bf16.mxu0 0
    %1664 = vmatpush1.bf16.msra.mxu0 0
    %1665 = vmatprep.subr.bf16.mxu0 0
    %1666 = vmatpush1.bf16.msra.mxu0 0
    %1667 = vmatprep.subr.bf16.mxu0 0
    %1668 = vmatpush1.bf16.msra.mxu0 0
    %1669 = vmatprep.subr.bf16.mxu0 0
    %1670 = vmatpush1.bf16.msra.mxu0 0
    %1671 = vmatprep.subr.bf16.mxu0 0
    %1672 = vmatpush1.bf16.msra.mxu0 0
    %1673 = vmatprep.subr.bf16.mxu0 0
    %1674 = vmatpush1.bf16.msra.mxu0 0
    %1675 = vmatprep.subr.bf16.mxu0 0
    %1676 = vmatpush1.bf16.msra.mxu0 0
    %1677 = vmatprep.subr.bf16.mxu0 0
    %1678 = vmatpush1.bf16.msra.mxu0 0
    %1679 = vmatprep.subr.bf16.mxu0 0
    %1680 = vmatpush1.bf16.msra.mxu0 0
    %1681 = vmatprep.subr.bf16.mxu0 0
    %1682 = vmatpush1.bf16.msra.mxu0 0
    %1683 = vmatprep.subr.bf16.mxu0 0
    %1684 = vmatpush1.bf16.msra.mxu0 0
    %1685 = vmatprep.subr.bf16.mxu0 0
    %1686 = vmatpush1.bf16.msra.mxu0 0
    %1687 = vmatprep.subr.bf16.mxu0 0
    %1688 = vmatpush1.bf16.msra.mxu0 0
    %1689 = vmatprep.subr.bf16.mxu0 0
    %1690 = vmatpush1.bf16.msra.mxu0 0
    %1691 = vmatprep.mubr.bf16.mxu0 0
    %1692 = vmatmul.mubr.bf16.gmra.mrb[0].mxu0 %v1654
    %v1693 = vpop.f32.mrb[0].mxu0
    %v1694 = vadd.f32 0.0, %v1693
    %v1695 = vpop.f32.mrb[0].mxu0
    %v1696 = vpop.f32.mrb[0].mxu0
    %v1697 = vpop.f32.mrb[0].mxu0
    %1698 = vdwg.mxu0
    %v1700 = vsel %vm1117, %v1592, 0
    %v1703 = vsel %vm1609, %v1600, 0
    %1705 = vmatprep.subr.bf16.mxu0 0
    %1706 = vmatpush1.bf16.msra.mxu0 %v1703
    %1707 = vmatprep.subr.bf16.mxu0 0
    %1708 = vmatpush1.bf16.msra.mxu0 0
    %1709 = vmatprep.subr.bf16.mxu0 0
    %1710 = vmatpush1.bf16.msra.mxu0 0
    %1711 = vmatprep.subr.bf16.mxu0 0
    %1712 = vmatpush1.bf16.msra.mxu0 0
    %1713 = vmatprep.subr.bf16.mxu0 0
    %1714 = vmatpush1.bf16.msra.mxu0 0
    %1715 = vmatprep.subr.bf16.mxu0 0
    %1716 = vmatpush1.bf16.msra.mxu0 0
    %1717 = vmatprep.subr.bf16.mxu0 0
    %1718 = vmatpush1.bf16.msra.mxu0 0
    %1719 = vmatprep.subr.bf16.mxu0 0
    %1720 = vmatpush1.bf16.msra.mxu0 0
    %1721 = vmatprep.subr.bf16.mxu0 0
    %1722 = vmatpush1.bf16.msra.mxu0 0
    %1723 = vmatprep.subr.bf16.mxu0 0
    %1724 = vmatpush1.bf16.msra.mxu0 0
    %1725 = vmatprep.subr.bf16.mxu0 0
    %1726 = vmatpush1.bf16.msra.mxu0 0
    %1727 = vmatprep.subr.bf16.mxu0 0
    %1728 = vmatpush1.bf16.msra.mxu0 0
    %1729 = vmatprep.subr.bf16.mxu0 0
    %1730 = vmatpush1.bf16.msra.mxu0 0
    %1731 = vmatprep.subr.bf16.mxu0 0
    %1732 = vmatpush1.bf16.msra.mxu0 0
    %1733 = vmatprep.subr.bf16.mxu0 0
    %1734 = vmatpush1.bf16.msra.mxu0 0
    %1735 = vmatprep.subr.bf16.mxu0 0
    %1736 = vmatpush1.bf16.msra.mxu0 0
    %1737 = vmatprep.mubr.bf16.mxu0 0
    %1738 = vmatmul.mubr.bf16.gmra.mrb[0].mxu0 %v1700
    %v1739 = vpop.f32.mrb[0].mxu0
    %v1740 = vadd.f32 0.0, %v1739
    %v1741 = vpop.f32.mrb[0].mxu0
    %v1742 = vpop.f32.mrb[0].mxu0
    %v1743 = vpop.f32.mrb[0].mxu0
    %1744 = vdwg.mxu0
    %v1746 = vsel %vm1117, %v1593, 0
    %v1749 = vsel %vm1609, %v1601, 0
    %1751 = vmatprep.subr.bf16.mxu0 0
    %1752 = vmatpush1.bf16.msra.mxu0 %v1749
    %1753 = vmatprep.subr.bf16.mxu0 0
    %1754 = vmatpush1.bf16.msra.mxu0 0
    %1755 = vmatprep.subr.bf16.mxu0 0
    %1756 = vmatpush1.bf16.msra.mxu0 0
    %1757 = vmatprep.subr.bf16.mxu0 0
    %1758 = vmatpush1.bf16.msra.mxu0 0
    %1759 = vmatprep.subr.bf16.mxu0 0
    %1760 = vmatpush1.bf16.msra.mxu0 0
    %1761 = vmatprep.subr.bf16.mxu0 0
    %1762 = vmatpush1.bf16.msra.mxu0 0
    %1763 = vmatprep.subr.bf16.mxu0 0
    %1764 = vmatpush1.bf16.msra.mxu0 0
    %1765 = vmatprep.subr.bf16.mxu0 0
    %1766 = vmatpush1.bf16.msra.mxu0 0
    %1767 = vmatprep.subr.bf16.mxu0 0
    %1768 = vmatpush1.bf16.msra.mxu0 0
    %1769 = vmatprep.subr.bf16.mxu0 0
    %1770 = vmatpush1.bf16.msra.mxu0 0
    %1771 = vmatprep.subr.bf16.mxu0 0
    %1772 = vmatpush1.bf16.msra.mxu0 0
    %1773 = vmatprep.subr.bf16.mxu0 0
    %1774 = vmatpush1.bf16.msra.mxu0 0
    %1775 = vmatprep.subr.bf16.mxu0 0
    %1776 = vmatpush1.bf16.msra.mxu0 0
    %1777 = vmatprep.subr.bf16.mxu0 0
    %1778 = vmatpush1.bf16.msra.mxu0 0
    %1779 = vmatprep.subr.bf16.mxu0 0
    %1780 = vmatpush1.bf16.msra.mxu0 0
    %1781 = vmatprep.subr.bf16.mxu0 0
    %1782 = vmatpush1.bf16.msra.mxu0 0
    %1783 = vmatprep.mubr.bf16.mxu0 0
    %1784 = vmatmul.mubr.bf16.gmra.mrb[0].mxu0 %v1746
    %v1785 = vpop.f32.mrb[0].mxu0
    %v1786 = vadd.f32 0.0, %v1785
    %v1787 = vpop.f32.mrb[0].mxu0
    %v1788 = vpop.f32.mrb[0].mxu0
    %v1789 = vpop.f32.mrb[0].mxu0
    %1790 = vdwg.mxu0
    %v1792 = vsel %vm1117, %v1594, 0
    %v1795 = vsel %vm1609, %v1602, 0
    %1797 = vmatprep.subr.bf16.mxu0 0
    %1798 = vmatpush1.bf16.msra.mxu0 %v1795
    %1799 = vmatprep.subr.bf16.mxu0 0
    %1800 = vmatpush1.bf16.msra.mxu0 0
    %1801 = vmatprep.subr.bf16.mxu0 0
    %1802 = vmatpush1.bf16.msra.mxu0 0
    %1803 = vmatprep.subr.bf16.mxu0 0
    %1804 = vmatpush1.bf16.msra.mxu0 0
    %1805 = vmatprep.subr.bf16.mxu0 0
    %1806 = vmatpush1.bf16.msra.mxu0 0
    %1807 = vmatprep.subr.bf16.mxu0 0
    %1808 = vmatpush1.bf16.msra.mxu0 0
    %1809 = vmatprep.subr.bf16.mxu0 0
    %1810 = vmatpush1.bf16.msra.mxu0 0
    %1811 = vmatprep.subr.bf16.mxu0 0
    %1812 = vmatpush1.bf16.msra.mxu0 0
    %1813 = vmatprep.subr.bf16.mxu0 0
    %1814 = vmatpush1.bf16.msra.mxu0 0
    %1815 = vmatprep.subr.bf16.mxu0 0
    %1816 = vmatpush1.bf16.msra.mxu0 0
    %1817 = vmatprep.subr.bf16.mxu0 0
    %1818 = vmatpush1.bf16.msra.mxu0 0
    %1819 = vmatprep.subr.bf16.mxu0 0
    %1820 = vmatpush1.bf16.msra.mxu0 0
    %1821 = vmatprep.subr.bf16.mxu0 0
    %1822 = vmatpush1.bf16.msra.mxu0 0
    %1823 = vmatprep.subr.bf16.mxu0 0
    %1824 = vmatpush1.bf16.msra.mxu0 0
    %1825 = vmatprep.subr.bf16.mxu0 0
    %1826 = vmatpush1.bf16.msra.mxu0 0
    %1827 = vmatprep.subr.bf16.mxu0 0
    %1828 = vmatpush1.bf16.msra.mxu0 0
    %1829 = vmatprep.mubr.bf16.mxu0 0
    %1830 = vmatmul.mubr.bf16.gmra.mrb[0].mxu0 %v1792
    %v1831 = vpop.f32.mrb[0].mxu0
    %v1832 = vadd.f32 0.0, %v1831
    %v1833 = vpop.f32.mrb[0].mxu0
    %v1834 = vpop.f32.mrb[0].mxu0
    %v1835 = vpop.f32.mrb[0].mxu0
    %1836 = vdwg.mxu0
    %v1838 = vsel %vm1117, %v1595, 0
    %v1841 = vsel %vm1609, %v1603, 0
    %1843 = vmatprep.subr.bf16.mxu0 0
    %1844 = vmatpush1.bf16.msra.mxu0 %v1841
    %1845 = vmatprep.subr.bf16.mxu0 0
    %1846 = vmatpush1.bf16.msra.mxu0 0
    %1847 = vmatprep.subr.bf16.mxu0 0
    %1848 = vmatpush1.bf16.msra.mxu0 0
    %1849 = vmatprep.subr.bf16.mxu0 0
    %1850 = vmatpush1.bf16.msra.mxu0 0
    %1851 = vmatprep.subr.bf16.mxu0 0
    %1852 = vmatpush1.bf16.msra.mxu0 0
    %1853 = vmatprep.subr.bf16.mxu0 0
    %1854 = vmatpush1.bf16.msra.mxu0 0
    %1855 = vmatprep.subr.bf16.mxu0 0
    %1856 = vmatpush1.bf16.msra.mxu0 0
    %1857 = vmatprep.subr.bf16.mxu0 0
    %1858 = vmatpush1.bf16.msra.mxu0 0
    %1859 = vmatprep.subr.bf16.mxu0 0
    %1860 = vmatpush1.bf16.msra.mxu0 0
    %1861 = vmatprep.subr.bf16.mxu0 0
    %1862 = vmatpush1.bf16.msra.mxu0 0
    %1863 = vmatprep.subr.bf16.mxu0 0
    %1864 = vmatpush1.bf16.msra.mxu0 0
    %1865 = vmatprep.subr.bf16.mxu0 0
    %1866 = vmatpush1.bf16.msra.mxu0 0
    %1867 = vmatprep.subr.bf16.mxu0 0
    %1868 = vmatpush1.bf16.msra.mxu0 0
    %1869 = vmatprep.subr.bf16.mxu0 0
    %1870 = vmatpush1.bf16.msra.mxu0 0
    %1871 = vmatprep.subr.bf16.mxu0 0
    %1872 = vmatpush1.bf16.msra.mxu0 0
    %1873 = vmatprep.subr.bf16.mxu0 0
    %1874 = vmatpush1.bf16.msra.mxu0 0
    %1875 = vmatprep.mubr.bf16.mxu0 0
    %1876 = vmatmul.mubr.bf16.gmra.mrb[0].mxu0 %v1838
    %v1877 = vpop.f32.mrb[0].mxu0
    %v1878 = vadd.f32 0.0, %v1877
    %v1879 = vpop.f32.mrb[0].mxu0
    %v1880 = vpop.f32.mrb[0].mxu0
    %v1881 = vpop.f32.mrb[0].mxu0
    %1882 = vdwg.mxu0
    %v1884 = vsel %vm1117, %v1596, 0
    %v1887 = vsel %vm1609, %v1604, 0
    %1889 = vmatprep.subr.bf16.mxu0 0
    %1890 = vmatpush1.bf16.msra.mxu0 %v1887
    %1891 = vmatprep.subr.bf16.mxu0 0
    %1892 = vmatpush1.bf16.msra.mxu0 0
    %1893 = vmatprep.subr.bf16.mxu0 0
    %1894 = vmatpush1.bf16.msra.mxu0 0
    %1895 = vmatprep.subr.bf16.mxu0 0
    %1896 = vmatpush1.bf16.msra.mxu0 0
    %1897 = vmatprep.subr.bf16.mxu0 0
    %1898 = vmatpush1.bf16.msra.mxu0 0
    %1899 = vmatprep.subr.bf16.mxu0 0
    %1900 = vmatpush1.bf16.msra.mxu0 0
    %1901 = vmatprep.subr.bf16.mxu0 0
    %1902 = vmatpush1.bf16.msra.mxu0 0
    %1903 = vmatprep.subr.bf16.mxu0 0
    %1904 = vmatpush1.bf16.msra.mxu0 0
    %1905 = vmatprep.subr.bf16.mxu0 0
    %1906 = vmatpush1.bf16.msra.mxu0 0
    %1907 = vmatprep.subr.bf16.mxu0 0
    %1908 = vmatpush1.bf16.msra.mxu0 0
    %1909 = vmatprep.subr.bf16.mxu0 0
    %1910 = vmatpush1.bf16.msra.mxu0 0
    %1911 = vmatprep.subr.bf16.mxu0 0
    %1912 = vmatpush1.bf16.msra.mxu0 0
    %1913 = vmatprep.subr.bf16.mxu0 0
    %1914 = vmatpush1.bf16.msra.mxu0 0
    %1915 = vmatprep.subr.bf16.mxu0 0
    %1916 = vmatpush1.bf16.msra.mxu0 0
    %1917 = vmatprep.subr.bf16.mxu0 0
    %1918 = vmatpush1.bf16.msra.mxu0 0
    %1919 = vmatprep.subr.bf16.mxu0 0
    %1920 = vmatpush1.bf16.msra.mxu0 0
    %1921 = vmatprep.mubr.bf16.mxu0 0
    %1922 = vmatmul.mubr.bf16.gmra.mrb[0].mxu0 %v1884
    %v1923 = vpop.f32.mrb[0].mxu0
    %v1924 = vadd.f32 0.0, %v1923
    %v1925 = vpop.f32.mrb[0].mxu0
    %v1926 = vpop.f32.mrb[0].mxu0
    %v1927 = vpop.f32.mrb[0].mxu0
    %1928 = vdwg.mxu0
    %v1930 = vsel %vm1117, %v1597, 0
    %v1933 = vsel %vm1609, %v1605, 0
    %1935 = vmatprep.subr.bf16.mxu0 0
    %1936 = vmatpush1.bf16.msra.mxu0 %v1933
    %1937 = vmatprep.subr.bf16.mxu0 0
    %1938 = vmatpush1.bf16.msra.mxu0 0
    %1939 = vmatprep.subr.bf16.mxu0 0
    %1940 = vmatpush1.bf16.msra.mxu0 0
    %1941 = vmatprep.subr.bf16.mxu0 0
    %1942 = vmatpush1.bf16.msra.mxu0 0
    %1943 = vmatprep.subr.bf16.mxu0 0
    %1944 = vmatpush1.bf16.msra.mxu0 0
    %1945 = vmatprep.subr.bf16.mxu0 0
    %1946 = vmatpush1.bf16.msra.mxu0 0
    %1947 = vmatprep.subr.bf16.mxu0 0
    %1948 = vmatpush1.bf16.msra.mxu0 0
    %1949 = vmatprep.subr.bf16.mxu0 0
    %1950 = vmatpush1.bf16.msra.mxu0 0
    %1951 = vmatprep.subr.bf16.mxu0 0
    %1952 = vmatpush1.bf16.msra.mxu0 0
    %1953 = vmatprep.subr.bf16.mxu0 0
    %1954 = vmatpush1.bf16.msra.mxu0 0
    %1955 = vmatprep.subr.bf16.mxu0 0
    %1956 = vmatpush1.bf16.msra.mxu0 0
    %1957 = vmatprep.subr.bf16.mxu0 0
    %1958 = vmatpush1.bf16.msra.mxu0 0
    %1959 = vmatprep.subr.bf16.mxu0 0
    %1960 = vmatpush1.bf16.msra.mxu0 0
    %1961 = vmatprep.subr.bf16.mxu0 0
    %1962 = vmatpush1.bf16.msra.mxu0 0
    %1963 = vmatprep.subr.bf16.mxu0 0
    %1964 = vmatpush1.bf16.msra.mxu0 0
    %1965 = vmatprep.subr.bf16.mxu0 0
    %1966 = vmatpush1.bf16.msra.mxu0 0
    %1967 = vmatprep.mubr.bf16.mxu0 0
    %1968 = vmatmul.mubr.bf16.gmra.mrb[0].mxu0 %v1930
    %v1969 = vpop.f32.mrb[0].mxu0
    %v1970 = vadd.f32 0.0, %v1969
    %v1971 = vpop.f32.mrb[0].mxu0
    %v1972 = vpop.f32.mrb[0].mxu0
    %v1973 = vpop.f32.mrb[0].mxu0
    %1974 = vdwg.mxu0
    %v1975 = vcombine.low %v1648, %v1740
    %v1976 = vcombine.high %v1648, %v1740
    %v1978 = vunpack.c.l.s4 1983009808
    %v1979 = vunpack.c.0.s8 %v1978
    %v1980 = vlaneseq
    %v1981 = vshrl.u32 %v1980, 7
    %v1982 = vsub.s32 %v1979, %v1981
    %v1983 = vrot.slane %v1975, %v1982
    %v1985 = vunpack.c.l.s4 1983009808
    %v1986 = vunpack.c.0.s8 %v1985
    %v1987 = vlaneseq
    %v1988 = vshrl.u32 %v1987, 7
    %v1989 = vsub.s32 %v1986, %v1988
    %v1990 = vrot.slane %v1976, %v1989
    %v1991 = vcombine.low %v1694, %v1786
    %v1992 = vcombine.high %v1694, %v1786
    %v1994 = vunpack.c.l.s4 1983009808
    %v1995 = vunpack.c.0.s8 %v1994
    %v1996 = vlaneseq
    %v1997 = vshrl.u32 %v1996, 7
    %v1998 = vsub.s32 %v1995, %v1997
    %v1999 = vrot.slane %v1991, %v1998
    %v2001 = vunpack.c.l.s4 1983009808
    %v2002 = vunpack.c.0.s8 %v2001
    %v2003 = vlaneseq
    %v2004 = vshrl.u32 %v2003, 7
    %v2005 = vsub.s32 %v2002, %v2004
    %v2006 = vrot.slane %v1992, %v2005
    %v2007 = vcombine.low %v1983, %v1999
    %v2008 = vcombine.high %v1983, %v1999
    %v2010 = vunpack.c.l.s4 1934713408
    %v2011 = vunpack.c.0.s8 %v2010
    %v2012 = vlaneseq
    %v2013 = vshrl.u32 %v2012, 7
    %v2014 = vsub.s32 %v2011, %v2013
    %v2015 = vrot.slane %v2007, %v2014
    %v2017 = vunpack.c.l.s4 1934713408
    %v2018 = vunpack.c.0.s8 %v2017
    %v2019 = vlaneseq
    %v2020 = vshrl.u32 %v2019, 7
    %v2021 = vsub.s32 %v2018, %v2020
    %v2022 = vrot.slane %v2008, %v2021
    %v2023 = vcombine.low %v1990, %v2006
    %v2024 = vcombine.high %v1990, %v2006
    %v2026 = vunpack.c.l.s4 1934713408
    %v2027 = vunpack.c.0.s8 %v2026
    %v2028 = vlaneseq
    %v2029 = vshrl.u32 %v2028, 7
    %v2030 = vsub.s32 %v2027, %v2029
    %v2031 = vrot.slane %v2023, %v2030
    %v2033 = vunpack.c.l.s4 1934713408
    %v2034 = vunpack.c.0.s8 %v2033
    %v2035 = vlaneseq
    %v2036 = vshrl.u32 %v2035, 7
    %v2037 = vsub.s32 %v2034, %v2036
    %v2038 = vrot.slane %v2024, %v2037
    %v2039 = vcombine.high %v2015, 0.0
    %v2040 = vcombine.high %v2022, 0.0
    %v2041 = vcombine.high %v2031, 0.0
    %v2042 = vcombine.high %v2038, 0.0
    %v2043 = vcombine.low %v1832, %v1924
    %v2044 = vcombine.high %v1832, %v1924
    %v2046 = vunpack.c.l.s4 1983009808
    %v2047 = vunpack.c.0.s8 %v2046
    %v2048 = vlaneseq
    %v2049 = vshrl.u32 %v2048, 7
    %v2050 = vsub.s32 %v2047, %v2049
    %v2051 = vrot.slane %v2043, %v2050
    %v2053 = vunpack.c.l.s4 1983009808
    %v2054 = vunpack.c.0.s8 %v2053
    %v2055 = vlaneseq
    %v2056 = vshrl.u32 %v2055, 7
    %v2057 = vsub.s32 %v2054, %v2056
    %v2058 = vrot.slane %v2044, %v2057
    %v2059 = vcombine.low %v1878, %v1970
    %v2060 = vcombine.high %v1878, %v1970
    %v2062 = vunpack.c.l.s4 1983009808
    %v2063 = vunpack.c.0.s8 %v2062
    %v2064 = vlaneseq
    %v2065 = vshrl.u32 %v2064, 7
    %v2066 = vsub.s32 %v2063, %v2065
    %v2067 = vrot.slane %v2059, %v2066
    %v2069 = vunpack.c.l.s4 1983009808
    %v2070 = vunpack.c.0.s8 %v2069
    %v2071 = vlaneseq
    %v2072 = vshrl.u32 %v2071, 7
    %v2073 = vsub.s32 %v2070, %v2072
    %v2074 = vrot.slane %v2060, %v2073
    %v2075 = vcombine.low %v2051, %v2067
    %v2076 = vcombine.high %v2051, %v2067
    %v2078 = vunpack.c.l.s4 1934713408
    %v2079 = vunpack.c.0.s8 %v2078
    %v2080 = vlaneseq
    %v2081 = vshrl.u32 %v2080, 7
    %v2082 = vsub.s32 %v2079, %v2081
    %v2083 = vrot.slane %v2075, %v2082
    %v2085 = vunpack.c.l.s4 1934713408
    %v2086 = vunpack.c.0.s8 %v2085
    %v2087 = vlaneseq
    %v2088 = vshrl.u32 %v2087, 7
    %v2089 = vsub.s32 %v2086, %v2088
    %v2090 = vrot.slane %v2076, %v2089
    %v2091 = vcombine.low %v2058, %v2074
    %v2092 = vcombine.high %v2058, %v2074
    %v2094 = vunpack.c.l.s4 1934713408
    %v2095 = vunpack.c.0.s8 %v2094
    %v2096 = vlaneseq
    %v2097 = vshrl.u32 %v2096, 7
    %v2098 = vsub.s32 %v2095, %v2097
    %v2099 = vrot.slane %v2091, %v2098
    %v2101 = vunpack.c.l.s4 1934713408
    %v2102 = vunpack.c.0.s8 %v2101
    %v2103 = vlaneseq
    %v2104 = vshrl.u32 %v2103, 7
    %v2105 = vsub.s32 %v2102, %v2104
    %v2106 = vrot.slane %v2092, %v2105
    %v2107 = vcombine.high %v2083, 0.0
    %v2108 = vcombine.high %v2090, 0.0
    %v2109 = vcombine.high %v2099, 0.0
    %v2110 = vcombine.high %v2106, 0.0
    %v2111 = vcombine.low %v2015, %v2022
    %v2113 = vunpack.c.l.s4 1983009808
    %v2114 = vunpack.c.0.s8 %v2113
    %v2115 = vlaneseq
    %v2116 = vshrl.u32 %v2115, 7
    %v2117 = vsub.s32 %v2114, %v2116
    %v2118 = vrot.slane %v2111, %v2117
    %v2119 = vcombine.low %v2039, %v2040
    %v2121 = vunpack.c.l.s4 1983009808
    %v2122 = vunpack.c.0.s8 %v2121
    %v2123 = vlaneseq
    %v2124 = vshrl.u32 %v2123, 7
    %v2125 = vsub.s32 %v2122, %v2124
    %v2126 = vrot.slane %v2119, %v2125
    %v2127 = vcombine.low %v2031, %v2038
    %v2129 = vunpack.c.l.s4 1983009808
    %v2130 = vunpack.c.0.s8 %v2129
    %v2131 = vlaneseq
    %v2132 = vshrl.u32 %v2131, 7
    %v2133 = vsub.s32 %v2130, %v2132
    %v2134 = vrot.slane %v2127, %v2133
    %v2135 = vcombine.low %v2041, %v2042
    %v2137 = vunpack.c.l.s4 1983009808
    %v2138 = vunpack.c.0.s8 %v2137
    %v2139 = vlaneseq
    %v2140 = vshrl.u32 %v2139, 7
    %v2141 = vsub.s32 %v2138, %v2140
    %v2142 = vrot.slane %v2135, %v2141
    %v2143 = vcombine.low %v2118, %v2126
    %v2144 = vcombine.high %v2118, %v2126
    %v2146 = vunpack.c.l.s4 1934713408
    %v2147 = vunpack.c.0.s8 %v2146
    %v2148 = vlaneseq
    %v2149 = vshrl.u32 %v2148, 7
    %v2150 = vsub.s32 %v2147, %v2149
    %v2151 = vrot.slane %v2143, %v2150
    %v2153 = vunpack.c.l.s4 1934713408
    %v2154 = vunpack.c.0.s8 %v2153
    %v2155 = vlaneseq
    %v2156 = vshrl.u32 %v2155, 7
    %v2157 = vsub.s32 %v2154, %v2156
    %v2158 = vrot.slane %v2144, %v2157
    %v2159 = vcombine.low %v2134, %v2142
    %v2160 = vcombine.high %v2134, %v2142
    %v2162 = vunpack.c.l.s4 1934713408
    %v2163 = vunpack.c.0.s8 %v2162
    %v2164 = vlaneseq
    %v2165 = vshrl.u32 %v2164, 7
    %v2166 = vsub.s32 %v2163, %v2165
    %v2167 = vrot.slane %v2159, %v2166
    %v2169 = vunpack.c.l.s4 1934713408
    %v2170 = vunpack.c.0.s8 %v2169
    %v2171 = vlaneseq
    %v2172 = vshrl.u32 %v2171, 7
    %v2173 = vsub.s32 %v2170, %v2172
    %v2174 = vrot.slane %v2160, %v2173
    %v2175 = vcombine.low %v2151, %v2167
    %v2176 = vcombine.high %v2151, %v2167
    %v2177 = vcombine.low %v2158, %v2174
    %v2178 = vcombine.high %v2158, %v2174
    %v2179 = vcombine.low %v2083, %v2090
    %v2181 = vunpack.c.l.s4 1983009808
    %v2182 = vunpack.c.0.s8 %v2181
    %v2183 = vlaneseq
    %v2184 = vshrl.u32 %v2183, 7
    %v2185 = vsub.s32 %v2182, %v2184
    %v2186 = vrot.slane %v2179, %v2185
    %v2187 = vcombine.low %v2107, %v2108
    %v2189 = vunpack.c.l.s4 1983009808
    %v2190 = vunpack.c.0.s8 %v2189
    %v2191 = vlaneseq
    %v2192 = vshrl.u32 %v2191, 7
    %v2193 = vsub.s32 %v2190, %v2192
    %v2194 = vrot.slane %v2187, %v2193
    %v2195 = vcombine.low %v2099, %v2106
    %v2197 = vunpack.c.l.s4 1983009808
    %v2198 = vunpack.c.0.s8 %v2197
    %v2199 = vlaneseq
    %v2200 = vshrl.u32 %v2199, 7
    %v2201 = vsub.s32 %v2198, %v2200
    %v2202 = vrot.slane %v2195, %v2201
    %v2203 = vcombine.low %v2109, %v2110
    %v2205 = vunpack.c.l.s4 1983009808
    %v2206 = vunpack.c.0.s8 %v2205
    %v2207 = vlaneseq
    %v2208 = vshrl.u32 %v2207, 7
    %v2209 = vsub.s32 %v2206, %v2208
    %v2210 = vrot.slane %v2203, %v2209
    %v2211 = vcombine.low %v2186, %v2194
    %v2212 = vcombine.high %v2186, %v2194
    %v2214 = vunpack.c.l.s4 1934713408
    %v2215 = vunpack.c.0.s8 %v2214
    %v2216 = vlaneseq
    %v2217 = vshrl.u32 %v2216, 7
    %v2218 = vsub.s32 %v2215, %v2217
    %v2219 = vrot.slane %v2211, %v2218
    %v2221 = vunpack.c.l.s4 1934713408
    %v2222 = vunpack.c.0.s8 %v2221
    %v2223 = vlaneseq
    %v2224 = vshrl.u32 %v2223, 7
    %v2225 = vsub.s32 %v2222, %v2224
    %v2226 = vrot.slane %v2212, %v2225
    %v2227 = vcombine.low %v2202, %v2210
    %v2228 = vcombine.high %v2202, %v2210
    %v2230 = vunpack.c.l.s4 1934713408
    %v2231 = vunpack.c.0.s8 %v2230
    %v2232 = vlaneseq
    %v2233 = vshrl.u32 %v2232, 7
    %v2234 = vsub.s32 %v2231, %v2233
    %v2235 = vrot.slane %v2227, %v2234
    %v2237 = vunpack.c.l.s4 1934713408
    %v2238 = vunpack.c.0.s8 %v2237
    %v2239 = vlaneseq
    %v2240 = vshrl.u32 %v2239, 7
    %v2241 = vsub.s32 %v2238, %v2240
    %v2242 = vrot.slane %v2228, %v2241
    %v2243 = vcombine.low %v2219, %v2235
    %v2244 = vcombine.high %v2219, %v2235
    %v2245 = vcombine.low %v2226, %v2242
    %v2246 = vcombine.high %v2226, %v2242
    %2249 = vrot.lane.b32.xlu0 %v2176, 8
    %v2250 = vpop.permute.xlu0 %2249
    %2251 = vrot.lane.b32.xlu0 %v2244, 8
    %v2252 = vpop.permute.xlu0 %2251
    %2257 = vrot.lane.b32.xlu0 %v2177, 16
    %v2258 = vpop.permute.xlu0 %2257
    %2259 = vrot.lane.b32.xlu0 %v2245, 16
    %v2260 = vpop.permute.xlu0 %2259
    %2265 = vrot.lane.b32.xlu0 %v2178, 24
    %v2266 = vpop.permute.xlu0 %2265
    %2267 = vrot.lane.b32.xlu0 %v2246, 24
    %v2268 = vpop.permute.xlu0 %2267
    %v2271 = vsel %vm1117, %v2175, %v2250
    %v2272 = vsel %vm1117, %v2243, %v2252
    %vm2273 = vcmask 130048
    %v2274 = vsel %vm2273, %v2271, %v2258
    %v2275 = vsel %vm2273, %v2272, %v2260
    %vm2276 = vcmask 195584
    %v2277 = vsel %vm2276, %v2274, %v2266
    %v2278 = vsel %vm2276, %v2275, %v2268
    %v2279 = vpack.c.bf16 %v2278, %v2277
    %v2280 = vld [vmem:[%s4] sm:$0xf]
    %v2281 = vld [vmem:[%s4 + $0x4] sm:$0xf]
    %v2282 = vld [vmem:[%s4 + $0x8] sm:$0xf]
    %v2283 = vld [vmem:[%s4 + $0xc] sm:$0xf]
    %v2284 = vld [vmem:[%s5 + $0x1] sm:$0x1]
    %v2285 = vlaneseq
    %v2286 = vshrl.u32 %v2285, 7
    %v2287 = vsub.s32 0, %v2286
    %v2288 = vrot.slane %v2284, %v2287
    %v2293 = vunpack.c.l.b16 %v2280
    %v2294 = vunpack.c.l.b16 %v2281
    %v2295 = vunpack.c.l.b16 %v2282
    %v2296 = vunpack.c.l.b16 %v2283
    %v2297 = vpack.c.b16 %v2294, %v2293
    %v2298 = vpack.c.b16 %v2296, %v2295
    %v2302 = vsel %vm111, %v2279, 0
    %2304 = vmatprep.subr.bf16.mxu0 0
    %2305 = vmatpush1.bf16.msra.mxu0 %v2297
    %2306 = vmatprep.subr.bf16.mxu0 0
    %2307 = vmatpush1.bf16.msra.mxu0 %v2298
    %2308 = vmatprep.subr.bf16.mxu0 0
    %2309 = vmatpush1.bf16.msra.mxu0 0
    %2310 = vmatprep.subr.bf16.mxu0 0
    %2311 = vmatpush1.bf16.msra.mxu0 0
    %2312 = vmatprep.subr.bf16.mxu0 0
    %2313 = vmatpush1.bf16.msra.mxu0 0
    %2314 = vmatprep.subr.bf16.mxu0 0
    %2315 = vmatpush1.bf16.msra.mxu0 0
    %2316 = vmatprep.subr.bf16.mxu0 0
    %2317 = vmatpush1.bf16.msra.mxu0 0
    %2318 = vmatprep.subr.bf16.mxu0 0
    %2319 = vmatpush1.bf16.msra.mxu0 0
    %2320 = vmatprep.subr.bf16.mxu0 0
    %2321 = vmatpush1.bf16.msra.mxu0 0
    %2322 = vmatprep.subr.bf16.mxu0 0
    %2323 = vmatpush1.bf16.msra.mxu0 0
    %2324 = vmatprep.subr.bf16.mxu0 0
    %2325 = vmatpush1.bf16.msra.mxu0 0
    %2326 = vmatprep.subr.bf16.mxu0 0
    %2327 = vmatpush1.bf16.msra.mxu0 0
    %2328 = vmatprep.subr.bf16.mxu0 0
    %2329 = vmatpush1.bf16.msra.mxu0 0
    %2330 = vmatprep.subr.bf16.mxu0 0
    %2331 = vmatpush1.bf16.msra.mxu0 0
    %2332 = vmatprep.subr.bf16.mxu0 0
    %2333 = vmatpush1.bf16.msra.mxu0 0
    %2334 = vmatprep.subr.bf16.mxu0 0
    %2335 = vmatpush1.bf16.msra.mxu0 0
    %2336 = vmatprep.mubr.bf16.mxu0 0
    %2337 = vmatmul.mubr.bf16.gmra.mrb[0].mxu0 %v2302
    %v2338 = vpop.f32.mrb[0].mxu0
    %v2339 = vadd.f32 %v2288, %v2338
    %v2340 = vpop.f32.mrb[0].mxu0
    %v2341 = vpop.f32.mrb[0].mxu0
    %v2342 = vadd.f32 %v2288, %v2341
    %v2343 = vpop.f32.mrb[0].mxu0
    %2344 = vdwg.mxu0
    %v2345 = vadd.f32 %v149, %v2339
    %v2346 = vadd.f32 %v150, %v2342
    %v2347 = vld [vmem:[%s5 + $0x2] sm:$0x1]
    %v2348 = vld [vmem:[%s5 + $0x3] sm:$0x1]
    %v2349 = vsel %vm111, %v2345, 0.0
    %2350 = vadd.xlane.f32.xlu0 %v2349
    %v2351 = vpop.xlane.xlu0 %2350
    %v2352 = vsel %vm111, %v2346, 0.0
    %2353 = vadd.xlane.f32.xlu0 %v2352
    %v2354 = vpop.xlane.xlu0 %2353
    %v2355 = vmul.f32 %v2351, %v118
    %v2356 = vmul.f32 %v2354, %v118
    %v2357 = vsub.f32 %v2345, %v2355
    %v2358 = vsub.f32 %v2346, %v2356
    %v2359 = vmul.f32 %v2357, %v2357
    %v2360 = vmul.f32 %v2358, %v2358
    %v2361 = vsel %vm111, %v2359, 0.0
    %2362 = vadd.xlane.f32.xlu0 %v2361
    %v2363 = vpop.xlane.xlu0 %2362
    %v2364 = vsel %vm111, %v2360, 0.0
    %2365 = vadd.xlane.f32.xlu0 %v2364
    %v2366 = vpop.xlane.xlu0 %2365
    %v2367 = vmul.f32 %v2363, %v118
    %v2368 = vmul.f32 %v2366, %v118
    %v2369 = vadd.f32 %v2367, 1e-12
    %v2370 = vadd.f32 %v2368, 1e-12
    %v2371 = vrsqrt.pop %v2369
    %v2372 = vrsqrt.pop %v2370
    %v2373 = vmul.f32 %v2357, %v2371
    %v2374 = vmul.f32 %v2358, %v2372
    %v2375 = vlaneseq
    %v2376 = vshrl.u32 %v2375, 7
    %v2377 = vsub.s32 0, %v2376
    %v2378 = vrot.slane %v2347, %v2377
    %v2379 = vmul.f32 %v2373, %v2378
    %v2380 = vmul.f32 %v2374, %v2378
    %v2381 = vlaneseq
    %v2382 = vshrl.u32 %v2381, 7
    %v2383 = vsub.s32 0, %v2382
    %v2384 = vrot.slane %v2348, %v2383
    %v2385 = vadd.f32 %v2379, %v2384
    %v2386 = vadd.f32 %v2380, %v2384
    %v2387 = vpack.c.bf16 %v2386, %v2385
    %v2388 = vld [vmem:[%s6] sm:$0xf]
    %v2389 = vld [vmem:[%s6 + $0x4] sm:$0xf]
    %v2390 = vld [vmem:[%s6 + $0x8] sm:$0xf]
    %v2391 = vld [vmem:[%s6 + $0xc] sm:$0xf]
    %v2392 = vld [vmem:[%s5 + $0x4] sm:$0x1]
    %v2393 = vlaneseq
    %v2394 = vshrl.u32 %v2393, 7
    %v2395 = vsub.s32 0, %v2394
    %v2396 = vrot.slane %v2392, %v2395
    %v2401 = vunpack.c.l.b16 %v2388
    %v2402 = vunpack.c.l.b16 %v2389
    %v2403 = vunpack.c.l.b16 %v2390
    %v2404 = vunpack.c.l.b16 %v2391
    %v2405 = vpack.c.b16 %v2402, %v2401
    %v2406 = vpack.c.b16 %v2404, %v2403
    %v2410 = vsel %vm111, %v2387, 0
    %2412 = vmatprep.subr.bf16.mxu0 0
    %2413 = vmatpush1.bf16.msra.mxu0 %v2405
    %2414 = vmatprep.subr.bf16.mxu0 0
    %2415 = vmatpush1.bf16.msra.mxu0 %v2406
    %2416 = vmatprep.subr.bf16.mxu0 0
    %2417 = vmatpush1.bf16.msra.mxu0 0
    %2418 = vmatprep.subr.bf16.mxu0 0
    %2419 = vmatpush1.bf16.msra.mxu0 0
    %2420 = vmatprep.subr.bf16.mxu0 0
    %2421 = vmatpush1.bf16.msra.mxu0 0
    %2422 = vmatprep.subr.bf16.mxu0 0
    %2423 = vmatpush1.bf16.msra.mxu0 0
    %2424 = vmatprep.subr.bf16.mxu0 0
    %2425 = vmatpush1.bf16.msra.mxu0 0
    %2426 = vmatprep.subr.bf16.mxu0 0
    %2427 = vmatpush1.bf16.msra.mxu0 0
    %2428 = vmatprep.subr.bf16.mxu0 0
    %2429 = vmatpush1.bf16.msra.mxu0 0
    %2430 = vmatprep.subr.bf16.mxu0 0
    %2431 = vmatpush1.bf16.msra.mxu0 0
    %2432 = vmatprep.subr.bf16.mxu0 0
    %2433 = vmatpush1.bf16.msra.mxu0 0
    %2434 = vmatprep.subr.bf16.mxu0 0
    %2435 = vmatpush1.bf16.msra.mxu0 0
    %2436 = vmatprep.subr.bf16.mxu0 0
    %2437 = vmatpush1.bf16.msra.mxu0 0
    %2438 = vmatprep.subr.bf16.mxu0 0
    %2439 = vmatpush1.bf16.msra.mxu0 0
    %2440 = vmatprep.subr.bf16.mxu0 0
    %2441 = vmatpush1.bf16.msra.mxu0 0
    %2442 = vmatprep.subr.bf16.mxu0 0
    %2443 = vmatpush1.bf16.msra.mxu0 0
    %2444 = vmatprep.mubr.bf16.mxu0 0
    %2445 = vmatmul.mubr.bf16.gmra.mrb[0].mxu0 %v2410
    %v2446 = vpop.f32.mrb[0].mxu0
    %v2447 = vadd.f32 %v2396, %v2446
    %v2448 = vpop.f32.mrb[0].mxu0
    %v2449 = vpop.f32.mrb[0].mxu0
    %v2450 = vadd.f32 %v2396, %v2449
    %v2451 = vpop.f32.mrb[0].mxu0
    %2452 = vdwg.mxu0
    %v2453 = vmul.f32 %v2447, 0.5
    %v2454 = vmul.f32 %v2450, 0.5
    %v2455 = vmul.f32 %v2447, 0.044715
    %v2456 = vmul.f32 %v2450, 0.044715
    %v2457 = vmul.f32 %v2455, %v2447
    %v2458 = vmul.f32 %v2456, %v2450
    %v2459 = vmul.f32 %v2457, %v2447
    %v2460 = vmul.f32 %v2458, %v2450
    %v2461 = vadd.f32 %v2447, %v2459
    %v2462 = vadd.f32 %v2450, %v2460
    %v2463 = vmul.f32 %v2461, 0.7978846
    %v2464 = vmul.f32 %v2462, 0.7978846
    %v2465 = vtanh.pop %v2463
    %v2466 = vtanh.pop %v2464
    %v2467 = vadd.f32 %v2465, 1.0
    %v2468 = vadd.f32 %v2466, 1.0
    %v2469 = vmul.f32 %v2453, %v2467
    %v2470 = vmul.f32 %v2454, %v2468
    %v2471 = vpack.c.bf16 %v2470, %v2469
    %v2472 = vld [vmem:[%s7] sm:$0xf]
    %v2473 = vld [vmem:[%s7 + $0x4] sm:$0xf]
    %v2474 = vld [vmem:[%s7 + $0x8] sm:$0xf]
    %v2475 = vld [vmem:[%s7 + $0xc] sm:$0xf]
    %v2476 = vld [vmem:[%s7 + $0x10] sm:$0xf]
    %v2477 = vld [vmem:[%s7 + $0x14] sm:$0xf]
    %v2478 = vld [vmem:[%s7 + $0x18] sm:$0xf]
    %v2479 = vld [vmem:[%s7 + $0x1c] sm:$0xf]
    %v2480 = vld [vmem:[%s5 + $0x5] sm:$0x1]
    %v2481 = vlaneseq
    %v2482 = vshrl.u32 %v2481, 7
    %v2483 = vsub.s32 0, %v2482
    %v2484 = vrot.slane %v2480, %v2483
    %v2493 = vunpack.c.l.b16 %v2472
    %v2494 = vunpack.c.l.b16 %v2473
    %v2495 = vunpack.c.l.b16 %v2474
    %v2496 = vunpack.c.l.b16 %v2475
    %v2497 = vunpack.c.l.b16 %v2476
    %v2498 = vunpack.c.l.b16 %v2477
    %v2499 = vunpack.c.l.b16 %v2478
    %v2500 = vunpack.c.l.b16 %v2479
    %v2501 = vpack.c.b16 %v2494, %v2493
    %v2502 = vpack.c.b16 %v2496, %v2495
    %v2503 = vpack.c.b16 %v2498, %v2497
    %v2504 = vpack.c.b16 %v2500, %v2499
    %vm2509 = vcmask 523264
    %v2511 = vsel %vm2509, %v2471, 0
    %2513 = vmatprep.subr.bf16.mxu0 0
    %2514 = vmatpush1.bf16.msra.mxu0 %v2501
    %2515 = vmatprep.subr.bf16.mxu0 0
    %2516 = vmatpush1.bf16.msra.mxu0 %v2502
    %2517 = vmatprep.subr.bf16.mxu0 0
    %2518 = vmatpush1.bf16.msra.mxu0 %v2503
    %2519 = vmatprep.subr.bf16.mxu0 0
    %2520 = vmatpush1.bf16.msra.mxu0 %v2504
    %2521 = vmatprep.subr.bf16.mxu0 0
    %2522 = vmatpush1.bf16.msra.mxu0 0
    %2523 = vmatprep.subr.bf16.mxu0 0
    %2524 = vmatpush1.bf16.msra.mxu0 0
    %2525 = vmatprep.subr.bf16.mxu0 0
    %2526 = vmatpush1.bf16.msra.mxu0 0
    %2527 = vmatprep.subr.bf16.mxu0 0
    %2528 = vmatpush1.bf16.msra.mxu0 0
    %2529 = vmatprep.subr.bf16.mxu0 0
    %2530 = vmatpush1.bf16.msra.mxu0 0
    %2531 = vmatprep.subr.bf16.mxu0 0
    %2532 = vmatpush1.bf16.msra.mxu0 0
    %2533 = vmatprep.subr.bf16.mxu0 0
    %2534 = vmatpush1.bf16.msra.mxu0 0
    %2535 = vmatprep.subr.bf16.mxu0 0
    %2536 = vmatpush1.bf16.msra.mxu0 0
    %2537 = vmatprep.subr.bf16.mxu0 0
    %2538 = vmatpush1.bf16.msra.mxu0 0
    %2539 = vmatprep.subr.bf16.mxu0 0
    %2540 = vmatpush1.bf16.msra.mxu0 0
    %2541 = vmatprep.subr.bf16.mxu0 0
    %2542 = vmatpush1.bf16.msra.mxu0 0
    %2543 = vmatprep.subr.bf16.mxu0 0
    %2544 = vmatpush1.bf16.msra.mxu0 0
    %2545 = vmatprep.mubr.bf16.mxu0 0
    %2546 = vmatmul.mubr.bf16.gmra.mrb[0].mxu0 %v2511
    %v2547 = vpop.f32.mrb[0].mxu0
    %v2548 = vadd.f32 %v2484, %v2547
    %v2549 = vpop.f32.mrb[0].mxu0
    %v2550 = vpop.f32.mrb[0].mxu0
    %v2551 = vadd.f32 %v2484, %v2550
    %v2552 = vpop.f32.mrb[0].mxu0
    %2553 = vdwg.mxu0
    %v2554 = vadd.f32 %v2385, %v2548
    %v2555 = vadd.f32 %v2386, %v2551
    %v2556 = vld [vmem:[%s5 + $0x6] sm:$0x1]
    %v2557 = vld [vmem:[%s5 + $0x7] sm:$0x1]
    %v2558 = vsel %vm111, %v2554, 0.0
    %2559 = vadd.xlane.f32.xlu0 %v2558
    %v2560 = vpop.xlane.xlu0 %2559
    %v2561 = vsel %vm111, %v2555, 0.0
    %2562 = vadd.xlane.f32.xlu0 %v2561
    %v2563 = vpop.xlane.xlu0 %2562
    %v2564 = vmul.f32 %v2560, %v118
    %v2565 = vmul.f32 %v2563, %v118
    %v2566 = vsub.f32 %v2554, %v2564
    %v2567 = vsub.f32 %v2555, %v2565
    %v2568 = vmul.f32 %v2566, %v2566
    %v2569 = vmul.f32 %v2567, %v2567
    %v2570 = vsel %vm111, %v2568, 0.0
    %2571 = vadd.xlane.f32.xlu0 %v2570
    %v2572 = vpop.xlane.xlu0 %2571
    %v2573 = vsel %vm111, %v2569, 0.0
    %2574 = vadd.xlane.f32.xlu0 %v2573
    %v2575 = vpop.xlane.xlu0 %2574
    %v2576 = vmul.f32 %v2572, %v118
    %v2577 = vmul.f32 %v2575, %v118
    %v2578 = vadd.f32 %v2576, 1e-12
    %v2579 = vadd.f32 %v2577, 1e-12
    %v2580 = vrsqrt.pop %v2578
    %v2581 = vrsqrt.pop %v2579
    %v2582 = vmul.f32 %v2566, %v2580
    %v2583 = vmul.f32 %v2567, %v2581
    %v2584 = vlaneseq
    %v2585 = vshrl.u32 %v2584, 7
    %v2586 = vsub.s32 0, %v2585
    %v2587 = vrot.slane %v2556, %v2586
    %v2588 = vmul.f32 %v2582, %v2587
    %v2589 = vmul.f32 %v2583, %v2587
    %v2590 = vlaneseq
    %v2591 = vshrl.u32 %v2590, 7
    %v2592 = vsub.s32 0, %v2591
    %v2593 = vrot.slane %v2557, %v2592
    %v2594 = vadd.f32 %v2588, %v2593
    %v2595 = vadd.f32 %v2589, %v2593
    %v2596 = vpack.c.bf16 %v2595, %v2594
    %s2597 = scalar_lea.vmem %s3, 16
    %v2598 = vld [vmem:[%s2597] sm:$0xf]
    %v2599 = vld [vmem:[%s2597 + $0x4] sm:$0xf]
    %v2600 = vld [vmem:[%s2597 + $0x8] sm:$0xf]
    %v2601 = vld [vmem:[%s2597 + $0xc] sm:$0xf]
    %s2602 = scalar_lea.vmem %s5, 8
    %v2603 = vld [vmem:[%s2602] sm:$0x1]
    %v2604 = vlaneseq
    %v2605 = vshrl.u32 %v2604, 7
    %v2606 = vsub.s32 0, %v2605
    %v2607 = vrot.slane %v2603, %v2606
    %v2612 = vunpack.c.l.b16 %v2598
    %v2613 = vunpack.c.l.b16 %v2599
    %v2614 = vunpack.c.l.b16 %v2600
    %v2615 = vunpack.c.l.b16 %v2601
    %v2616 = vpack.c.b16 %v2613, %v2612
    %v2617 = vpack.c.b16 %v2615, %v2614
    %v2621 = vsel %vm111, %v2596, 0
    %2623 = vmatprep.subr.bf16.mxu0 0
    %2624 = vmatpush1.bf16.msra.mxu0 %v2616
    %2625 = vmatprep.subr.bf16.mxu0 0
    %2626 = vmatpush1.bf16.msra.mxu0 %v2617
    %2627 = vmatprep.subr.bf16.mxu0 0
    %2628 = vmatpush1.bf16.msra.mxu0 0
    %2629 = vmatprep.subr.bf16.mxu0 0
    %2630 = vmatpush1.bf16.msra.mxu0 0
    %2631 = vmatprep.subr.bf16.mxu0 0
    %2632 = vmatpush1.bf16.msra.mxu0 0
    %2633 = vmatprep.subr.bf16.mxu0 0
    %2634 = vmatpush1.bf16.msra.mxu0 0
    %2635 = vmatprep.subr.bf16.mxu0 0
    %2636 = vmatpush1.bf16.msra.mxu0 0
    %2637 = vmatprep.subr.bf16.mxu0 0
    %2638 = vmatpush1.bf16.msra.mxu0 0
    %2639 = vmatprep.subr.bf16.mxu0 0
    %2640 = vmatpush1.bf16.msra.mxu0 0
    %2641 = vmatprep.subr.bf16.mxu0 0
    %2642 = vmatpush1.bf16.msra.mxu0 0
    %2643 = vmatprep.subr.bf16.mxu0 0
    %2644 = vmatpush1.bf16.msra.mxu0 0
    %2645 = vmatprep.subr.bf16.mxu0 0
    %2646 = vmatpush1.bf16.msra.mxu0 0
    %2647 = vmatprep.subr.bf16.mxu0 0
    %2648 = vmatpush1.bf16.msra.mxu0 0
    %2649 = vmatprep.subr.bf16.mxu0 0
    %2650 = vmatpush1.bf16.msra.mxu0 0
    %2651 = vmatprep.subr.bf16.mxu0 0
    %2652 = vmatpush1.bf16.msra.mxu0 0
    %2653 = vmatprep.subr.bf16.mxu0 0
    %2654 = vmatpush1.bf16.msra.mxu0 0
    %2655 = vmatprep.mubr.bf16.mxu0 0
    %2656 = vmatmul.mubr.bf16.gmra.mrb[0].mxu0 %v2621
    %v2657 = vpop.f32.mrb[0].mxu0
    %v2658 = vadd.f32 %v2607, %v2657
    %v2659 = vpop.f32.mrb[0].mxu0
    %v2660 = vpop.f32.mrb[0].mxu0
    %v2661 = vadd.f32 %v2607, %v2660
    %v2662 = vpop.f32.mrb[0].mxu0
    %2663 = vdwg.mxu0
    %2666 = vrot.lane.b32.xlu0 %v2658, 120
    %v2667 = vpop.permute.xlu0 %2666
    %2668 = vrot.lane.b32.xlu0 %v2661, 120
    %v2669 = vpop.permute.xlu0 %2668
    %2672 = vrot.lane.b32.xlu0 %v2658, 112
    %v2673 = vpop.permute.xlu0 %2672
    %2674 = vrot.lane.b32.xlu0 %v2661, 112
    %v2675 = vpop.permute.xlu0 %2674
    %2678 = vrot.lane.b32.xlu0 %v2658, 104
    %v2679 = vpop.permute.xlu0 %2678
    %2680 = vrot.lane.b32.xlu0 %v2661, 104
    %v2681 = vpop.permute.xlu0 %2680
    %2684 = vrot.lane.b32.xlu0 %v2658, 96
    %v2685 = vpop.permute.xlu0 %2684
    %2686 = vrot.lane.b32.xlu0 %v2661, 96
    %v2687 = vpop.permute.xlu0 %2686
    %2690 = vrot.lane.b32.xlu0 %v2658, 88
    %v2691 = vpop.permute.xlu0 %2690
    %2692 = vrot.lane.b32.xlu0 %v2661, 88
    %v2693 = vpop.permute.xlu0 %2692
    %2696 = vrot.lane.b32.xlu0 %v2658, 80
    %v2697 = vpop.permute.xlu0 %2696
    %2698 = vrot.lane.b32.xlu0 %v2661, 80
    %v2699 = vpop.permute.xlu0 %2698
    %2702 = vrot.lane.b32.xlu0 %v2658, 72
    %v2703 = vpop.permute.xlu0 %2702
    %2704 = vrot.lane.b32.xlu0 %v2661, 72
    %v2705 = vpop.permute.xlu0 %2704
    %2708 = vrot.lane.b32.xlu0 %v2658, 64
    %v2709 = vpop.permute.xlu0 %2708
    %2710 = vrot.lane.b32.xlu0 %v2661, 64
    %v2711 = vpop.permute.xlu0 %2710
    %2714 = vrot.lane.b32.xlu0 %v2658, 56
    %v2715 = vpop.permute.xlu0 %2714
    %2716 = vrot.lane.b32.xlu0 %v2661, 56
    %v2717 = vpop.permute.xlu0 %2716
    %2720 = vrot.lane.b32.xlu0 %v2658, 48
    %v2721 = vpop.permute.xlu0 %2720
    %2722 = vrot.lane.b32.xlu0 %v2661, 48
    %v2723 = vpop.permute.xlu0 %2722
    %2726 = vrot.lane.b32.xlu0 %v2658, 40
    %v2727 = vpop.permute.xlu0 %2726
    %2728 = vrot.lane.b32.xlu0 %v2661, 40
    %v2729 = vpop.permute.xlu0 %2728
    %v2732 = vcombine.low %v2658, %v2673
    %v2733 = vcombine.high %v2658, %v2673
    %v2735 = vunpack.c.l.s4 1983009808
    %v2736 = vunpack.c.0.s8 %v2735
    %v2737 = vlaneseq
    %v2738 = vshrl.u32 %v2737, 7
    %v2739 = vsub.s32 %v2736, %v2738
    %v2740 = vrot.slane %v2732, %v2739
    %v2742 = vunpack.c.l.s4 1983009808
    %v2743 = vunpack.c.0.s8 %v2742
    %v2744 = vlaneseq
    %v2745 = vshrl.u32 %v2744, 7
    %v2746 = vsub.s32 %v2743, %v2745
    %v2747 = vrot.slane %v2733, %v2746
    %v2748 = vcombine.low %v2667, %v2679
    %v2749 = vcombine.high %v2667, %v2679
    %v2751 = vunpack.c.l.s4 1983009808
    %v2752 = vunpack.c.0.s8 %v2751
    %v2753 = vlaneseq
    %v2754 = vshrl.u32 %v2753, 7
    %v2755 = vsub.s32 %v2752, %v2754
    %v2756 = vrot.slane %v2748, %v2755
    %v2758 = vunpack.c.l.s4 1983009808
    %v2759 = vunpack.c.0.s8 %v2758
    %v2760 = vlaneseq
    %v2761 = vshrl.u32 %v2760, 7
    %v2762 = vsub.s32 %v2759, %v2761
    %v2763 = vrot.slane %v2749, %v2762
    %v2764 = vcombine.low %v2685, %v2697
    %v2765 = vcombine.high %v2685, %v2697
    %v2767 = vunpack.c.l.s4 1983009808
    %v2768 = vunpack.c.0.s8 %v2767
    %v2769 = vlaneseq
    %v2770 = vshrl.u32 %v2769, 7
    %v2771 = vsub.s32 %v2768, %v2770
    %v2772 = vrot.slane %v2764, %v2771
    %v2774 = vunpack.c.l.s4 1983009808
    %v2775 = vunpack.c.0.s8 %v2774
    %v2776 = vlaneseq
    %v2777 = vshrl.u32 %v2776, 7
    %v2778 = vsub.s32 %v2775, %v2777
    %v2779 = vrot.slane %v2765, %v2778
    %v2780 = vcombine.low %v2691, %v2703
    %v2781 = vcombine.high %v2691, %v2703
    %v2783 = vunpack.c.l.s4 1983009808
    %v2784 = vunpack.c.0.s8 %v2783
    %v2785 = vlaneseq
    %v2786 = vshrl.u32 %v2785, 7
    %v2787 = vsub.s32 %v2784, %v2786
    %v2788 = vrot.slane %v2780, %v2787
    %v2790 = vunpack.c.l.s4 1983009808
    %v2791 = vunpack.c.0.s8 %v2790
    %v2792 = vlaneseq
    %v2793 = vshrl.u32 %v2792, 7
    %v2794 = vsub.s32 %v2791, %v2793
    %v2795 = vrot.slane %v2781, %v2794
    %v2796 = vcombine.low %v2740, %v2756
    %v2797 = vcombine.high %v2740, %v2756
    %v2799 = vunpack.c.l.s4 1934713408
    %v2800 = vunpack.c.0.s8 %v2799
    %v2801 = vlaneseq
    %v2802 = vshrl.u32 %v2801, 7
    %v2803 = vsub.s32 %v2800, %v2802
    %v2804 = vrot.slane %v2796, %v2803
    %v2806 = vunpack.c.l.s4 1934713408
    %v2807 = vunpack.c.0.s8 %v2806
    %v2808 = vlaneseq
    %v2809 = vshrl.u32 %v2808, 7
    %v2810 = vsub.s32 %v2807, %v2809
    %v2811 = vrot.slane %v2797, %v2810
    %v2812 = vcombine.low %v2747, %v2763
    %v2813 = vcombine.high %v2747, %v2763
    %v2815 = vunpack.c.l.s4 1934713408
    %v2816 = vunpack.c.0.s8 %v2815
    %v2817 = vlaneseq
    %v2818 = vshrl.u32 %v2817, 7
    %v2819 = vsub.s32 %v2816, %v2818
    %v2820 = vrot.slane %v2812, %v2819
    %v2822 = vunpack.c.l.s4 1934713408
    %v2823 = vunpack.c.0.s8 %v2822
    %v2824 = vlaneseq
    %v2825 = vshrl.u32 %v2824, 7
    %v2826 = vsub.s32 %v2823, %v2825
    %v2827 = vrot.slane %v2813, %v2826
    %v2828 = vcombine.low %v2772, %v2788
    %v2829 = vcombine.high %v2772, %v2788
    %v2831 = vunpack.c.l.s4 1934713408
    %v2832 = vunpack.c.0.s8 %v2831
    %v2833 = vlaneseq
    %v2834 = vshrl.u32 %v2833, 7
    %v2835 = vsub.s32 %v2832, %v2834
    %v2836 = vrot.slane %v2828, %v2835
    %v2838 = vunpack.c.l.s4 1934713408
    %v2839 = vunpack.c.0.s8 %v2838
    %v2840 = vlaneseq
    %v2841 = vshrl.u32 %v2840, 7
    %v2842 = vsub.s32 %v2839, %v2841
    %v2843 = vrot.slane %v2829, %v2842
    %v2844 = vcombine.low %v2779, %v2795
    %v2845 = vcombine.high %v2779, %v2795
    %v2847 = vunpack.c.l.s4 1934713408
    %v2848 = vunpack.c.0.s8 %v2847
    %v2849 = vlaneseq
    %v2850 = vshrl.u32 %v2849, 7
    %v2851 = vsub.s32 %v2848, %v2850
    %v2852 = vrot.slane %v2844, %v2851
    %v2854 = vunpack.c.l.s4 1934713408
    %v2855 = vunpack.c.0.s8 %v2854
    %v2856 = vlaneseq
    %v2857 = vshrl.u32 %v2856, 7
    %v2858 = vsub.s32 %v2855, %v2857
    %v2859 = vrot.slane %v2845, %v2858
    %v2860 = vcombine.low %v2804, %v2836
    %v2861 = vcombine.high %v2804, %v2836
    %v2862 = vcombine.low %v2811, %v2843
    %v2863 = vcombine.high %v2811, %v2843
    %v2864 = vcombine.low %v2820, %v2852
    %v2865 = vcombine.high %v2820, %v2852
    %v2866 = vcombine.low %v2827, %v2859
    %v2867 = vcombine.high %v2827, %v2859
    %v2868 = vcombine.low %v2709, %v2721
    %v2869 = vcombine.high %v2709, %v2721
    %v2871 = vunpack.c.l.s4 1983009808
    %v2872 = vunpack.c.0.s8 %v2871
    %v2873 = vlaneseq
    %v2874 = vshrl.u32 %v2873, 7
    %v2875 = vsub.s32 %v2872, %v2874
    %v2876 = vrot.slane %v2868, %v2875
    %v2878 = vunpack.c.l.s4 1983009808
    %v2879 = vunpack.c.0.s8 %v2878
    %v2880 = vlaneseq
    %v2881 = vshrl.u32 %v2880, 7
    %v2882 = vsub.s32 %v2879, %v2881
    %v2883 = vrot.slane %v2869, %v2882
    %v2884 = vcombine.low %v2715, %v2727
    %v2885 = vcombine.high %v2715, %v2727
    %v2887 = vunpack.c.l.s4 1983009808
    %v2888 = vunpack.c.0.s8 %v2887
    %v2889 = vlaneseq
    %v2890 = vshrl.u32 %v2889, 7
    %v2891 = vsub.s32 %v2888, %v2890
    %v2892 = vrot.slane %v2884, %v2891
    %v2894 = vunpack.c.l.s4 1983009808
    %v2895 = vunpack.c.0.s8 %v2894
    %v2896 = vlaneseq
    %v2897 = vshrl.u32 %v2896, 7
    %v2898 = vsub.s32 %v2895, %v2897
    %v2899 = vrot.slane %v2885, %v2898
    %v2900 = vcombine.low %v2876, %v2892
    %v2901 = vcombine.high %v2876, %v2892
    %v2903 = vunpack.c.l.s4 1934713408
    %v2904 = vunpack.c.0.s8 %v2903
    %v2905 = vlaneseq
    %v2906 = vshrl.u32 %v2905, 7
    %v2907 = vsub.s32 %v2904, %v2906
    %v2908 = vrot.slane %v2900, %v2907
    %v2910 = vunpack.c.l.s4 1934713408
    %v2911 = vunpack.c.0.s8 %v2910
    %v2912 = vlaneseq
    %v2913 = vshrl.u32 %v2912, 7
    %v2914 = vsub.s32 %v2911, %v2913
    %v2915 = vrot.slane %v2901, %v2914
    %v2916 = vcombine.low %v2883, %v2899
    %v2917 = vcombine.high %v2883, %v2899
    %v2919 = vunpack.c.l.s4 1934713408
    %v2920 = vunpack.c.0.s8 %v2919
    %v2921 = vlaneseq
    %v2922 = vshrl.u32 %v2921, 7
    %v2923 = vsub.s32 %v2920, %v2922
    %v2924 = vrot.slane %v2916, %v2923
    %v2926 = vunpack.c.l.s4 1934713408
    %v2927 = vunpack.c.0.s8 %v2926
    %v2928 = vlaneseq
    %v2929 = vshrl.u32 %v2928, 7
    %v2930 = vsub.s32 %v2927, %v2929
    %v2931 = vrot.slane %v2917, %v2930
    %v2932 = vcombine.high %v2908, 0.0
    %v2933 = vcombine.high %v2915, 0.0
    %v2934 = vcombine.high %v2924, 0.0
    %v2935 = vcombine.high %v2931, 0.0
    %v2936 = vcombine.low %v2661, %v2675
    %v2937 = vcombine.high %v2661, %v2675
    %v2939 = vunpack.c.l.s4 1983009808
    %v2940 = vunpack.c.0.s8 %v2939
    %v2941 = vlaneseq
    %v2942 = vshrl.u32 %v2941, 7
    %v2943 = vsub.s32 %v2940, %v2942
    %v2944 = vrot.slane %v2936, %v2943
    %v2946 = vunpack.c.l.s4 1983009808
    %v2947 = vunpack.c.0.s8 %v2946
    %v2948 = vlaneseq
    %v2949 = vshrl.u32 %v2948, 7
    %v2950 = vsub.s32 %v2947, %v2949
    %v2951 = vrot.slane %v2937, %v2950
    %v2952 = vcombine.low %v2669, %v2681
    %v2953 = vcombine.high %v2669, %v2681
    %v2955 = vunpack.c.l.s4 1983009808
    %v2956 = vunpack.c.0.s8 %v2955
    %v2957 = vlaneseq
    %v2958 = vshrl.u32 %v2957, 7
    %v2959 = vsub.s32 %v2956, %v2958
    %v2960 = vrot.slane %v2952, %v2959
    %v2962 = vunpack.c.l.s4 1983009808
    %v2963 = vunpack.c.0.s8 %v2962
    %v2964 = vlaneseq
    %v2965 = vshrl.u32 %v2964, 7
    %v2966 = vsub.s32 %v2963, %v2965
    %v2967 = vrot.slane %v2953, %v2966
    %v2968 = vcombine.low %v2687, %v2699
    %v2969 = vcombine.high %v2687, %v2699
    %v2971 = vunpack.c.l.s4 1983009808
    %v2972 = vunpack.c.0.s8 %v2971
    %v2973 = vlaneseq
    %v2974 = vshrl.u32 %v2973, 7
    %v2975 = vsub.s32 %v2972, %v2974
    %v2976 = vrot.slane %v2968, %v2975
    %v2978 = vunpack.c.l.s4 1983009808
    %v2979 = vunpack.c.0.s8 %v2978
    %v2980 = vlaneseq
    %v2981 = vshrl.u32 %v2980, 7
    %v2982 = vsub.s32 %v2979, %v2981
    %v2983 = vrot.slane %v2969, %v2982
    %v2984 = vcombine.low %v2693, %v2705
    %v2985 = vcombine.high %v2693, %v2705
    %v2987 = vunpack.c.l.s4 1983009808
    %v2988 = vunpack.c.0.s8 %v2987
    %v2989 = vlaneseq
    %v2990 = vshrl.u32 %v2989, 7
    %v2991 = vsub.s32 %v2988, %v2990
    %v2992 = vrot.slane %v2984, %v2991
    %v2994 = vunpack.c.l.s4 1983009808
    %v2995 = vunpack.c.0.s8 %v2994
    %v2996 = vlaneseq
    %v2997 = vshrl.u32 %v2996, 7
    %v2998 = vsub.s32 %v2995, %v2997
    %v2999 = vrot.slane %v2985, %v2998
    %v3000 = vcombine.low %v2944, %v2960
    %v3001 = vcombine.high %v2944, %v2960
    %v3003 = vunpack.c.l.s4 1934713408
    %v3004 = vunpack.c.0.s8 %v3003
    %v3005 = vlaneseq
    %v3006 = vshrl.u32 %v3005, 7
    %v3007 = vsub.s32 %v3004, %v3006
    %v3008 = vrot.slane %v3000, %v3007
    %v3010 = vunpack.c.l.s4 1934713408
    %v3011 = vunpack.c.0.s8 %v3010
    %v3012 = vlaneseq
    %v3013 = vshrl.u32 %v3012, 7
    %v3014 = vsub.s32 %v3011, %v3013
    %v3015 = vrot.slane %v3001, %v3014
    %v3016 = vcombine.low %v2951, %v2967
    %v3017 = vcombine.high %v2951, %v2967
    %v3019 = vunpack.c.l.s4 1934713408
    %v3020 = vunpack.c.0.s8 %v3019
    %v3021 = vlaneseq
    %v3022 = vshrl.u32 %v3021, 7
    %v3023 = vsub.s32 %v3020, %v3022
    %v3024 = vrot.slane %v3016, %v3023
    %v3026 = vunpack.c.l.s4 1934713408
    %v3027 = vunpack.c.0.s8 %v3026
    %v3028 = vlaneseq
    %v3029 = vshrl.u32 %v3028, 7
    %v3030 = vsub.s32 %v3027, %v3029
    %v3031 = vrot.slane %v3017, %v3030
    %v3032 = vcombine.low %v2976, %v2992
    %v3033 = vcombine.high %v2976, %v2992
    %v3035 = vunpack.c.l.s4 1934713408
    %v3036 = vunpack.c.0.s8 %v3035
    %v3037 = vlaneseq
    %v3038 = vshrl.u32 %v3037, 7
    %v3039 = vsub.s32 %v3036, %v3038
    %v3040 = vrot.slane %v3032, %v3039
    %v3042 = vunpack.c.l.s4 1934713408
    %v3043 = vunpack.c.0.s8 %v3042
    %v3044 = vlaneseq
    %v3045 = vshrl.u32 %v3044, 7
    %v3046 = vsub.s32 %v3043, %v3045
    %v3047 = vrot.slane %v3033, %v3046
    %v3048 = vcombine.low %v2983, %v2999
    %v3049 = vcombine.high %v2983, %v2999
    %v3051 = vunpack.c.l.s4 1934713408
    %v3052 = vunpack.c.0.s8 %v3051
    %v3053 = vlaneseq
    %v3054 = vshrl.u32 %v3053, 7
    %v3055 = vsub.s32 %v3052, %v3054
    %v3056 = vrot.slane %v3048, %v3055
    %v3058 = vunpack.c.l.s4 1934713408
    %v3059 = vunpack.c.0.s8 %v3058
    %v3060 = vlaneseq
    %v3061 = vshrl.u32 %v3060, 7
    %v3062 = vsub.s32 %v3059, %v3061
    %v3063 = vrot.slane %v3049, %v3062
    %v3064 = vcombine.low %v3008, %v3040
    %v3065 = vcombine.high %v3008, %v3040
    %v3066 = vcombine.low %v3015, %v3047
    %v3067 = vcombine.high %v3015, %v3047
    %v3068 = vcombine.low %v3024, %v3056
    %v3069 = vcombine.high %v3024, %v3056
    %v3070 = vcombine.low %v3031, %v3063
    %v3071 = vcombine.high %v3031, %v3063
    %v3072 = vcombine.low %v2711, %v2723
    %v3073 = vcombine.high %v2711, %v2723
    %v3075 = vunpack.c.l.s4 1983009808
    %v3076 = vunpack.c.0.s8 %v3075
    %v3077 = vlaneseq
    %v3078 = vshrl.u32 %v3077, 7
    %v3079 = vsub.s32 %v3076, %v3078
    %v3080 = vrot.slane %v3072, %v3079
    %v3082 = vunpack.c.l.s4 1983009808
    %v3083 = vunpack.c.0.s8 %v3082
    %v3084 = vlaneseq
    %v3085 = vshrl.u32 %v3084, 7
    %v3086 = vsub.s32 %v3083, %v3085
    %v3087 = vrot.slane %v3073, %v3086
    %v3088 = vcombine.low %v2717, %v2729
    %v3089 = vcombine.high %v2717, %v2729
    %v3091 = vunpack.c.l.s4 1983009808
    %v3092 = vunpack.c.0.s8 %v3091
    %v3093 = vlaneseq
    %v3094 = vshrl.u32 %v3093, 7
    %v3095 = vsub.s32 %v3092, %v3094
    %v3096 = vrot.slane %v3088, %v3095
    %v3098 = vunpack.c.l.s4 1983009808
    %v3099 = vunpack.c.0.s8 %v3098
    %v3100 = vlaneseq
    %v3101 = vshrl.u32 %v3100, 7
    %v3102 = vsub.s32 %v3099, %v3101
    %v3103 = vrot.slane %v3089, %v3102
    %v3104 = vcombine.low %v3080, %v3096
    %v3105 = vcombine.high %v3080, %v3096
    %v3107 = vunpack.c.l.s4 1934713408
    %v3108 = vunpack.c.0.s8 %v3107
    %v3109 = vlaneseq
    %v3110 = vshrl.u32 %v3109, 7
    %v3111 = vsub.s32 %v3108, %v3110
    %v3112 = vrot.slane %v3104, %v3111
    %v3114 = vunpack.c.l.s4 1934713408
    %v3115 = vunpack.c.0.s8 %v3114
    %v3116 = vlaneseq
    %v3117 = vshrl.u32 %v3116, 7
    %v3118 = vsub.s32 %v3115, %v3117
    %v3119 = vrot.slane %v3105, %v3118
    %v3120 = vcombine.low %v3087, %v3103
    %v3121 = vcombine.high %v3087, %v3103
    %v3123 = vunpack.c.l.s4 1934713408
    %v3124 = vunpack.c.0.s8 %v3123
    %v3125 = vlaneseq
    %v3126 = vshrl.u32 %v3125, 7
    %v3127 = vsub.s32 %v3124, %v3126
    %v3128 = vrot.slane %v3120, %v3127
    %v3130 = vunpack.c.l.s4 1934713408
    %v3131 = vunpack.c.0.s8 %v3130
    %v3132 = vlaneseq
    %v3133 = vshrl.u32 %v3132, 7
    %v3134 = vsub.s32 %v3131, %v3133
    %v3135 = vrot.slane %v3121, %v3134
    %v3136 = vcombine.high %v3112, 0.0
    %v3137 = vcombine.high %v3119, 0.0
    %v3138 = vcombine.high %v3128, 0.0
    %v3139 = vcombine.high %v3135, 0.0
    %v3140 = vcombine.low %v2860, %v2862
    %v3141 = vcombine.high %v2860, %v2862
    %v3143 = vunpack.c.l.s4 1983009808
    %v3144 = vunpack.c.0.s8 %v3143
    %v3145 = vlaneseq
    %v3146 = vshrl.u32 %v3145, 7
    %v3147 = vsub.s32 %v3144, %v3146
    %v3148 = vrot.slane %v3140, %v3147
    %v3150 = vunpack.c.l.s4 1983009808
    %v3151 = vunpack.c.0.s8 %v3150
    %v3152 = vlaneseq
    %v3153 = vshrl.u32 %v3152, 7
    %v3154 = vsub.s32 %v3151, %v3153
    %v3155 = vrot.slane %v3141, %v3154
    %v3156 = vcombine.low %v2861, %v2863
    %v3157 = vcombine.high %v2861, %v2863
    %v3159 = vunpack.c.l.s4 1983009808
    %v3160 = vunpack.c.0.s8 %v3159
    %v3161 = vlaneseq
    %v3162 = vshrl.u32 %v3161, 7
    %v3163 = vsub.s32 %v3160, %v3162
    %v3164 = vrot.slane %v3156, %v3163
    %v3166 = vunpack.c.l.s4 1983009808
    %v3167 = vunpack.c.0.s8 %v3166
    %v3168 = vlaneseq
    %v3169 = vshrl.u32 %v3168, 7
    %v3170 = vsub.s32 %v3167, %v3169
    %v3171 = vrot.slane %v3157, %v3170
    %v3172 = vcombine.low %v2864, %v2866
    %v3173 = vcombine.high %v2864, %v2866
    %v3175 = vunpack.c.l.s4 1983009808
    %v3176 = vunpack.c.0.s8 %v3175
    %v3177 = vlaneseq
    %v3178 = vshrl.u32 %v3177, 7
    %v3179 = vsub.s32 %v3176, %v3178
    %v3180 = vrot.slane %v3172, %v3179
    %v3182 = vunpack.c.l.s4 1983009808
    %v3183 = vunpack.c.0.s8 %v3182
    %v3184 = vlaneseq
    %v3185 = vshrl.u32 %v3184, 7
    %v3186 = vsub.s32 %v3183, %v3185
    %v3187 = vrot.slane %v3173, %v3186
    %v3188 = vcombine.low %v2865, %v2867
    %v3189 = vcombine.high %v2865, %v2867
    %v3191 = vunpack.c.l.s4 1983009808
    %v3192 = vunpack.c.0.s8 %v3191
    %v3193 = vlaneseq
    %v3194 = vshrl.u32 %v3193, 7
    %v3195 = vsub.s32 %v3192, %v3194
    %v3196 = vrot.slane %v3188, %v3195
    %v3198 = vunpack.c.l.s4 1983009808
    %v3199 = vunpack.c.0.s8 %v3198
    %v3200 = vlaneseq
    %v3201 = vshrl.u32 %v3200, 7
    %v3202 = vsub.s32 %v3199, %v3201
    %v3203 = vrot.slane %v3189, %v3202
    %v3204 = vcombine.low %v3148, %v3164
    %v3205 = vcombine.high %v3148, %v3164
    %v3207 = vunpack.c.l.s4 1934713408
    %v3208 = vunpack.c.0.s8 %v3207
    %v3209 = vlaneseq
    %v3210 = vshrl.u32 %v3209, 7
    %v3211 = vsub.s32 %v3208, %v3210
    %v3212 = vrot.slane %v3204, %v3211
    %v3214 = vunpack.c.l.s4 1934713408
    %v3215 = vunpack.c.0.s8 %v3214
    %v3216 = vlaneseq
    %v3217 = vshrl.u32 %v3216, 7
    %v3218 = vsub.s32 %v3215, %v3217
    %v3219 = vrot.slane %v3205, %v3218
    %v3220 = vcombine.low %v3155, %v3171
    %v3221 = vcombine.high %v3155, %v3171
    %v3223 = vunpack.c.l.s4 1934713408
    %v3224 = vunpack.c.0.s8 %v3223
    %v3225 = vlaneseq
    %v3226 = vshrl.u32 %v3225, 7
    %v3227 = vsub.s32 %v3224, %v3226
    %v3228 = vrot.slane %v3220, %v3227
    %v3230 = vunpack.c.l.s4 1934713408
    %v3231 = vunpack.c.0.s8 %v3230
    %v3232 = vlaneseq
    %v3233 = vshrl.u32 %v3232, 7
    %v3234 = vsub.s32 %v3231, %v3233
    %v3235 = vrot.slane %v3221, %v3234
    %v3236 = vcombine.low %v3180, %v3196
    %v3237 = vcombine.high %v3180, %v3196
    %v3239 = vunpack.c.l.s4 1934713408
    %v3240 = vunpack.c.0.s8 %v3239
    %v3241 = vlaneseq
    %v3242 = vshrl.u32 %v3241, 7
    %v3243 = vsub.s32 %v3240, %v3242
    %v3244 = vrot.slane %v3236, %v3243
    %v3246 = vunpack.c.l.s4 1934713408
    %v3247 = vunpack.c.0.s8 %v3246
    %v3248 = vlaneseq
    %v3249 = vshrl.u32 %v3248, 7
    %v3250 = vsub.s32 %v3247, %v3249
    %v3251 = vrot.slane %v3237, %v3250
    %v3252 = vcombine.low %v3187, %v3203
    %v3253 = vcombine.high %v3187, %v3203
    %v3255 = vunpack.c.l.s4 1934713408
    %v3256 = vunpack.c.0.s8 %v3255
    %v3257 = vlaneseq
    %v3258 = vshrl.u32 %v3257, 7
    %v3259 = vsub.s32 %v3256, %v3258
    %v3260 = vrot.slane %v3252, %v3259
    %v3262 = vunpack.c.l.s4 1934713408
    %v3263 = vunpack.c.0.s8 %v3262
    %v3264 = vlaneseq
    %v3265 = vshrl.u32 %v3264, 7
    %v3266 = vsub.s32 %v3263, %v3265
    %v3267 = vrot.slane %v3253, %v3266
    %v3268 = vcombine.low %v3212, %v3244
    %v3269 = vcombine.high %v3212, %v3244
    %v3270 = vcombine.low %v3219, %v3251
    %v3271 = vcombine.high %v3219, %v3251
    %v3272 = vcombine.low %v3228, %v3260
    %v3273 = vcombine.high %v3228, %v3260
    %v3274 = vcombine.low %v3235, %v3267
    %v3275 = vcombine.high %v3235, %v3267
    %v3276 = vcombine.low %v2908, %v2915
    %v3278 = vunpack.c.l.s4 1983009808
    %v3279 = vunpack.c.0.s8 %v3278
    %v3280 = vlaneseq
    %v3281 = vshrl.u32 %v3280, 7
    %v3282 = vsub.s32 %v3279, %v3281
    %v3283 = vrot.slane %v3276, %v3282
    %v3284 = vcombine.low %v2932, %v2933
    %v3286 = vunpack.c.l.s4 1983009808
    %v3287 = vunpack.c.0.s8 %v3286
    %v3288 = vlaneseq
    %v3289 = vshrl.u32 %v3288, 7
    %v3290 = vsub.s32 %v3287, %v3289
    %v3291 = vrot.slane %v3284, %v3290
    %v3292 = vcombine.low %v2924, %v2931
    %v3294 = vunpack.c.l.s4 1983009808
    %v3295 = vunpack.c.0.s8 %v3294
    %v3296 = vlaneseq
    %v3297 = vshrl.u32 %v3296, 7
    %v3298 = vsub.s32 %v3295, %v3297
    %v3299 = vrot.slane %v3292, %v3298
    %v3300 = vcombine.low %v2934, %v2935
    %v3302 = vunpack.c.l.s4 1983009808
    %v3303 = vunpack.c.0.s8 %v3302
    %v3304 = vlaneseq
    %v3305 = vshrl.u32 %v3304, 7
    %v3306 = vsub.s32 %v3303, %v3305
    %v3307 = vrot.slane %v3300, %v3306
    %v3308 = vcombine.low %v3283, %v3291
    %v3309 = vcombine.high %v3283, %v3291
    %v3311 = vunpack.c.l.s4 1934713408
    %v3312 = vunpack.c.0.s8 %v3311
    %v3313 = vlaneseq
    %v3314 = vshrl.u32 %v3313, 7
    %v3315 = vsub.s32 %v3312, %v3314
    %v3316 = vrot.slane %v3308, %v3315
    %v3318 = vunpack.c.l.s4 1934713408
    %v3319 = vunpack.c.0.s8 %v3318
    %v3320 = vlaneseq
    %v3321 = vshrl.u32 %v3320, 7
    %v3322 = vsub.s32 %v3319, %v3321
    %v3323 = vrot.slane %v3309, %v3322
    %v3324 = vcombine.low %v3299, %v3307
    %v3325 = vcombine.high %v3299, %v3307
    %v3327 = vunpack.c.l.s4 1934713408
    %v3328 = vunpack.c.0.s8 %v3327
    %v3329 = vlaneseq
    %v3330 = vshrl.u32 %v3329, 7
    %v3331 = vsub.s32 %v3328, %v3330
    %v3332 = vrot.slane %v3324, %v3331
    %v3334 = vunpack.c.l.s4 1934713408
    %v3335 = vunpack.c.0.s8 %v3334
    %v3336 = vlaneseq
    %v3337 = vshrl.u32 %v3336, 7
    %v3338 = vsub.s32 %v3335, %v3337
    %v3339 = vrot.slane %v3325, %v3338
    %v3340 = vcombine.low %v3316, %v3332
    %v3341 = vcombine.high %v3316, %v3332
    %v3342 = vcombine.low %v3323, %v3339
    %v3343 = vcombine.high %v3323, %v3339
    %v3344 = vcombine.low %v3064, %v3066
    %v3345 = vcombine.high %v3064, %v3066
    %v3347 = vunpack.c.l.s4 1983009808
    %v3348 = vunpack.c.0.s8 %v3347
    %v3349 = vlaneseq
    %v3350 = vshrl.u32 %v3349, 7
    %v3351 = vsub.s32 %v3348, %v3350
    %v3352 = vrot.slane %v3344, %v3351
    %v3354 = vunpack.c.l.s4 1983009808
    %v3355 = vunpack.c.0.s8 %v3354
    %v3356 = vlaneseq
    %v3357 = vshrl.u32 %v3356, 7
    %v3358 = vsub.s32 %v3355, %v3357
    %v3359 = vrot.slane %v3345, %v3358
    %v3360 = vcombine.low %v3065, %v3067
    %v3361 = vcombine.high %v3065, %v3067
    %v3363 = vunpack.c.l.s4 1983009808
    %v3364 = vunpack.c.0.s8 %v3363
    %v3365 = vlaneseq
    %v3366 = vshrl.u32 %v3365, 7
    %v3367 = vsub.s32 %v3364, %v3366
    %v3368 = vrot.slane %v3360, %v3367
    %v3370 = vunpack.c.l.s4 1983009808
    %v3371 = vunpack.c.0.s8 %v3370
    %v3372 = vlaneseq
    %v3373 = vshrl.u32 %v3372, 7
    %v3374 = vsub.s32 %v3371, %v3373
    %v3375 = vrot.slane %v3361, %v3374
    %v3376 = vcombine.low %v3068, %v3070
    %v3377 = vcombine.high %v3068, %v3070
    %v3379 = vunpack.c.l.s4 1983009808
    %v3380 = vunpack.c.0.s8 %v3379
    %v3381 = vlaneseq
    %v3382 = vshrl.u32 %v3381, 7
    %v3383 = vsub.s32 %v3380, %v3382
    %v3384 = vrot.slane %v3376, %v3383
    %v3386 = vunpack.c.l.s4 1983009808
    %v3387 = vunpack.c.0.s8 %v3386
    %v3388 = vlaneseq
    %v3389 = vshrl.u32 %v3388, 7
    %v3390 = vsub.s32 %v3387, %v3389
    %v3391 = vrot.slane %v3377, %v3390
    %v3392 = vcombine.low %v3069, %v3071
    %v3393 = vcombine.high %v3069, %v3071
    %v3395 = vunpack.c.l.s4 1983009808
    %v3396 = vunpack.c.0.s8 %v3395
    %v3397 = vlaneseq
    %v3398 = vshrl.u32 %v3397, 7
    %v3399 = vsub.s32 %v3396, %v3398
    %v3400 = vrot.slane %v3392, %v3399
    %v3402 = vunpack.c.l.s4 1983009808
    %v3403 = vunpack.c.0.s8 %v3402
    %v3404 = vlaneseq
    %v3405 = vshrl.u32 %v3404, 7
    %v3406 = vsub.s32 %v3403, %v3405
    %v3407 = vrot.slane %v3393, %v3406
    %v3408 = vcombine.low %v3352, %v3368
    %v3409 = vcombine.high %v3352, %v3368
    %v3411 = vunpack.c.l.s4 1934713408
    %v3412 = vunpack.c.0.s8 %v3411
    %v3413 = vlaneseq
    %v3414 = vshrl.u32 %v3413, 7
    %v3415 = vsub.s32 %v3412, %v3414
    %v3416 = vrot.slane %v3408, %v3415
    %v3418 = vunpack.c.l.s4 1934713408
    %v3419 = vunpack.c.0.s8 %v3418
    %v3420 = vlaneseq
    %v3421 = vshrl.u32 %v3420, 7
    %v3422 = vsub.s32 %v3419, %v3421
    %v3423 = vrot.slane %v3409, %v3422
    %v3424 = vcombine.low %v3359, %v3375
    %v3425 = vcombine.high %v3359, %v3375
    %v3427 = vunpack.c.l.s4 1934713408
    %v3428 = vunpack.c.0.s8 %v3427
    %v3429 = vlaneseq
    %v3430 = vshrl.u32 %v3429, 7
    %v3431 = vsub.s32 %v3428, %v3430
    %v3432 = vrot.slane %v3424, %v3431
    %v3434 = vunpack.c.l.s4 1934713408
    %v3435 = vunpack.c.0.s8 %v3434
    %v3436 = vlaneseq
    %v3437 = vshrl.u32 %v3436, 7
    %v3438 = vsub.s32 %v3435, %v3437
    %v3439 = vrot.slane %v3425, %v3438
    %v3440 = vcombine.low %v3384, %v3400
    %v3441 = vcombine.high %v3384, %v3400
    %v3443 = vunpack.c.l.s4 1934713408
    %v3444 = vunpack.c.0.s8 %v3443
    %v3445 = vlaneseq
    %v3446 = vshrl.u32 %v3445, 7
    %v3447 = vsub.s32 %v3444, %v3446
    %v3448 = vrot.slane %v3440, %v3447
    %v3450 = vunpack.c.l.s4 1934713408
    %v3451 = vunpack.c.0.s8 %v3450
    %v3452 = vlaneseq
    %v3453 = vshrl.u32 %v3452, 7
    %v3454 = vsub.s32 %v3451, %v3453
    %v3455 = vrot.slane %v3441, %v3454
    %v3456 = vcombine.low %v3391, %v3407
    %v3457 = vcombine.high %v3391, %v3407
    %v3459 = vunpack.c.l.s4 1934713408
    %v3460 = vunpack.c.0.s8 %v3459
    %v3461 = vlaneseq
    %v3462 = vshrl.u32 %v3461, 7
    %v3463 = vsub.s32 %v3460, %v3462
    %v3464 = vrot.slane %v3456, %v3463
    %v3466 = vunpack.c.l.s4 1934713408
    %v3467 = vunpack.c.0.s8 %v3466
    %v3468 = vlaneseq
    %v3469 = vshrl.u32 %v3468, 7
    %v3470 = vsub.s32 %v3467, %v3469
    %v3471 = vrot.slane %v3457, %v3470
    %v3472 = vcombine.low %v3416, %v3448
    %v3473 = vcombine.high %v3416, %v3448
    %v3474 = vcombine.low %v3423, %v3455
    %v3475 = vcombine.high %v3423, %v3455
    %v3476 = vcombine.low %v3432, %v3464
    %v3477 = vcombine.high %v3432, %v3464
    %v3478 = vcombine.low %v3439, %v3471
    %v3479 = vcombine.high %v3439, %v3471
    %v3480 = vcombine.low %v3112, %v3119
    %v3482 = vunpack.c.l.s4 1983009808
    %v3483 = vunpack.c.0.s8 %v3482
    %v3484 = vlaneseq
    %v3485 = vshrl.u32 %v3484, 7
    %v3486 = vsub.s32 %v3483, %v3485
    %v3487 = vrot.slane %v3480, %v3486
    %v3488 = vcombine.low %v3136, %v3137
    %v3490 = vunpack.c.l.s4 1983009808
    %v3491 = vunpack.c.0.s8 %v3490
    %v3492 = vlaneseq
    %v3493 = vshrl.u32 %v3492, 7
    %v3494 = vsub.s32 %v3491, %v3493
    %v3495 = vrot.slane %v3488, %v3494
    %v3496 = vcombine.low %v3128, %v3135
    %v3498 = vunpack.c.l.s4 1983009808
    %v3499 = vunpack.c.0.s8 %v3498
    %v3500 = vlaneseq
    %v3501 = vshrl.u32 %v3500, 7
    %v3502 = vsub.s32 %v3499, %v3501
    %v3503 = vrot.slane %v3496, %v3502
    %v3504 = vcombine.low %v3138, %v3139
    %v3506 = vunpack.c.l.s4 1983009808
    %v3507 = vunpack.c.0.s8 %v3506
    %v3508 = vlaneseq
    %v3509 = vshrl.u32 %v3508, 7
    %v3510 = vsub.s32 %v3507, %v3509
    %v3511 = vrot.slane %v3504, %v3510
    %v3512 = vcombine.low %v3487, %v3495
    %v3513 = vcombine.high %v3487, %v3495
    %v3515 = vunpack.c.l.s4 1934713408
    %v3516 = vunpack.c.0.s8 %v3515
    %v3517 = vlaneseq
    %v3518 = vshrl.u32 %v3517, 7
    %v3519 = vsub.s32 %v3516, %v3518
    %v3520 = vrot.slane %v3512, %v3519
    %v3522 = vunpack.c.l.s4 1934713408
    %v3523 = vunpack.c.0.s8 %v3522
    %v3524 = vlaneseq
    %v3525 = vshrl.u32 %v3524, 7
    %v3526 = vsub.s32 %v3523, %v3525
    %v3527 = vrot.slane %v3513, %v3526
    %v3528 = vcombine.low %v3503, %v3511
    %v3529 = vcombine.high %v3503, %v3511
    %v3531 = vunpack.c.l.s4 1934713408
    %v3532 = vunpack.c.0.s8 %v3531
    %v3533 = vlaneseq
    %v3534 = vshrl.u32 %v3533, 7
    %v3535 = vsub.s32 %v3532, %v3534
    %v3536 = vrot.slane %v3528, %v3535
    %v3538 = vunpack.c.l.s4 1934713408
    %v3539 = vunpack.c.0.s8 %v3538
    %v3540 = vlaneseq
    %v3541 = vshrl.u32 %v3540, 7
    %v3542 = vsub.s32 %v3539, %v3541
    %v3543 = vrot.slane %v3529, %v3542
    %v3544 = vcombine.low %v3520, %v3536
    %v3545 = vcombine.high %v3520, %v3536
    %v3546 = vcombine.low %v3527, %v3543
    %v3547 = vcombine.high %v3527, %v3543
    %v3548 = vpack.c.bf16 %v3268, %v3268
    %v3549 = vpack.c.bf16 %v3269, %v3269
    %v3550 = vpack.c.bf16 %v3270, %v3270
    %v3551 = vpack.c.bf16 %v3271, %v3271
    %v3552 = vpack.c.bf16 %v3472, %v3472
    %v3553 = vpack.c.bf16 %v3473, %v3473
    %v3554 = vpack.c.bf16 %v3474, %v3474
    %v3555 = vpack.c.bf16 %v3475, %v3475
    %v3556 = vpack.c.bf16 %v3272, %v3272
    %v3557 = vpack.c.bf16 %v3273, %v3273
    %v3558 = vpack.c.bf16 %v3274, %v3274
    %v3559 = vpack.c.bf16 %v3275, %v3275
    %v3560 = vpack.c.bf16 %v3476, %v3476
    %v3561 = vpack.c.bf16 %v3477, %v3477
    %v3562 = vpack.c.bf16 %v3478, %v3478
    %v3563 = vpack.c.bf16 %v3479, %v3479
    %v3565 = vsel %vm1117, %v3548, 0
    %v3568 = vsel %vm1117, %v3556, 0
    %3570 = vmatprep.subr.bf16.mxu0 0
    %3571 = vmatpush1.bf16.xpose.msra.mxu0 %v3568
    %3572 = vmatprep.subr.bf16.mxu0 0
    %3573 = vmatpush1.bf16.xpose.msra.mxu0 0
    %3574 = vmatprep.subr.bf16.mxu0 0
    %3575 = vmatpush1.bf16.xpose.msra.mxu0 0
    %3576 = vmatprep.subr.bf16.mxu0 0
    %3577 = vmatpush1.bf16.xpose.msra.mxu0 0
    %3578 = vmatprep.subr.bf16.mxu0 0
    %3579 = vmatpush1.bf16.xpose.msra.mxu0 0
    %3580 = vmatprep.subr.bf16.mxu0 0
    %3581 = vmatpush1.bf16.xpose.msra.mxu0 0
    %3582 = vmatprep.subr.bf16.mxu0 0
    %3583 = vmatpush1.bf16.xpose.msra.mxu0 0
    %3584 = vmatprep.subr.bf16.mxu0 0
    %3585 = vmatpush1.bf16.xpose.msra.mxu0 0
    %3586 = vmatprep.subr.bf16.mxu0 0
    %3587 = vmatpush1.bf16.xpose.msra.mxu0 0
    %3588 = vmatprep.subr.bf16.mxu0 0
    %3589 = vmatpush1.bf16.xpose.msra.mxu0 0
    %3590 = vmatprep.subr.bf16.mxu0 0
    %3591 = vmatpush1.bf16.xpose.msra.mxu0 0
    %3592 = vmatprep.subr.bf16.mxu0 0
    %3593 = vmatpush1.bf16.xpose.msra.mxu0 0
    %3594 = vmatprep.subr.bf16.mxu0 0
    %3595 = vmatpush1.bf16.xpose.msra.mxu0 0
    %3596 = vmatprep.subr.bf16.mxu0 0
    %3597 = vmatpush1.bf16.xpose.msra.mxu0 0
    %3598 = vmatprep.subr.bf16.mxu0 0
    %3599 = vmatpush1.bf16.xpose.msra.mxu0 0
    %3600 = vmatprep.subr.bf16.mxu0 0
    %3601 = vmatpush1.bf16.xpose.msra.mxu0 0
    %3602 = vmatprep.mubr.bf16.mxu0 0
    %3603 = vmatmul.mubr.bf16.gmra.mrb[0].mxu0 %v3565
    %v3604 = vpop.f32.mrb[0].mxu0
    %v3605 = vadd.f32 0.0, %v3604
    %v3606 = vpop.f32.mrb[0].mxu0
    %v3607 = vpop.f32.mrb[0].mxu0
    %v3608 = vpop.f32.mrb[0].mxu0
    %3609 = vdwg.mxu0
    %v3611 = vsel %vm1117, %v3549, 0
    %v3614 = vsel %vm1117, %v3557, 0
    %3616 = vmatprep.subr.bf16.mxu0 0
    %3617 = vmatpush1.bf16.xpose.msra.mxu0 %v3614
    %3618 = vmatprep.subr.bf16.mxu0 0
    %3619 = vmatpush1.bf16.xpose.msra.mxu0 0
    %3620 = vmatprep.subr.bf16.mxu0 0
    %3621 = vmatpush1.bf16.xpose.msra.mxu0 0
    %3622 = vmatprep.subr.bf16.mxu0 0
    %3623 = vmatpush1.bf16.xpose.msra.mxu0 0
    %3624 = vmatprep.subr.bf16.mxu0 0
    %3625 = vmatpush1.bf16.xpose.msra.mxu0 0
    %3626 = vmatprep.subr.bf16.mxu0 0
    %3627 = vmatpush1.bf16.xpose.msra.mxu0 0
    %3628 = vmatprep.subr.bf16.mxu0 0
    %3629 = vmatpush1.bf16.xpose.msra.mxu0 0
    %3630 = vmatprep.subr.bf16.mxu0 0
    %3631 = vmatpush1.bf16.xpose.msra.mxu0 0
    %3632 = vmatprep.subr.bf16.mxu0 0
    %3633 = vmatpush1.bf16.xpose.msra.mxu0 0
    %3634 = vmatprep.subr.bf16.mxu0 0
    %3635 = vmatpush1.bf16.xpose.msra.mxu0 0
    %3636 = vmatprep.subr.bf16.mxu0 0
    %3637 = vmatpush1.bf16.xpose.msra.mxu0 0
    %3638 = vmatprep.subr.bf16.mxu0 0
    %3639 = vmatpush1.bf16.xpose.msra.mxu0 0
    %3640 = vmatprep.subr.bf16.mxu0 0
    %3641 = vmatpush1.bf16.xpose.msra.mxu0 0
    %3642 = vmatprep.subr.bf16.mxu0 0
    %3643 = vmatpush1.bf16.xpose.msra.mxu0 0
    %3644 = vmatprep.subr.bf16.mxu0 0
    %3645 = vmatpush1.bf16.xpose.msra.mxu0 0
    %3646 = vmatprep.subr.bf16.mxu0 0
    %3647 = vmatpush1.bf16.xpose.msra.mxu0 0
    %3648 = vmatprep.mubr.bf16.mxu0 0
    %3649 = vmatmul.mubr.bf16.gmra.mrb[0].mxu0 %v3611
    %v3650 = vpop.f32.mrb[0].mxu0
    %v3651 = vadd.f32 0.0, %v3650
    %v3652 = vpop.f32.mrb[0].mxu0
    %v3653 = vpop.f32.mrb[0].mxu0
    %v3654 = vpop.f32.mrb[0].mxu0
    %3655 = vdwg.mxu0
    %v3657 = vsel %vm1117, %v3550, 0
    %v3660 = vsel %vm1117, %v3558, 0
    %3662 = vmatprep.subr.bf16.mxu0 0
    %3663 = vmatpush1.bf16.xpose.msra.mxu0 %v3660
    %3664 = vmatprep.subr.bf16.mxu0 0
    %3665 = vmatpush1.bf16.xpose.msra.mxu0 0
    %3666 = vmatprep.subr.bf16.mxu0 0
    %3667 = vmatpush1.bf16.xpose.msra.mxu0 0
    %3668 = vmatprep.subr.bf16.mxu0 0
    %3669 = vmatpush1.bf16.xpose.msra.mxu0 0
    %3670 = vmatprep.subr.bf16.mxu0 0
    %3671 = vmatpush1.bf16.xpose.msra.mxu0 0
    %3672 = vmatprep.subr.bf16.mxu0 0
    %3673 = vmatpush1.bf16.xpose.msra.mxu0 0
    %3674 = vmatprep.subr.bf16.mxu0 0
    %3675 = vmatpush1.bf16.xpose.msra.mxu0 0
    %3676 = vmatprep.subr.bf16.mxu0 0
    %3677 = vmatpush1.bf16.xpose.msra.mxu0 0
    %3678 = vmatprep.subr.bf16.mxu0 0
    %3679 = vmatpush1.bf16.xpose.msra.mxu0 0
    %3680 = vmatprep.subr.bf16.mxu0 0
    %3681 = vmatpush1.bf16.xpose.msra.mxu0 0
    %3682 = vmatprep.subr.bf16.mxu0 0
    %3683 = vmatpush1.bf16.xpose.msra.mxu0 0
    %3684 = vmatprep.subr.bf16.mxu0 0
    %3685 = vmatpush1.bf16.xpose.msra.mxu0 0
    %3686 = vmatprep.subr.bf16.mxu0 0
    %3687 = vmatpush1.bf16.xpose.msra.mxu0 0
    %3688 = vmatprep.subr.bf16.mxu0 0
    %3689 = vmatpush1.bf16.xpose.msra.mxu0 0
    %3690 = vmatprep.subr.bf16.mxu0 0
    %3691 = vmatpush1.bf16.xpose.msra.mxu0 0
    %3692 = vmatprep.subr.bf16.mxu0 0
    %3693 = vmatpush1.bf16.xpose.msra.mxu0 0
    %3694 = vmatprep.mubr.bf16.mxu0 0
    %3695 = vmatmul.mubr.bf16.gmra.mrb[0].mxu0 %v3657
    %v3696 = vpop.f32.mrb[0].mxu0
    %v3697 = vadd.f32 0.0, %v3696
    %v3698 = vpop.f32.mrb[0].mxu0
    %v3699 = vpop.f32.mrb[0].mxu0
    %v3700 = vpop.f32.mrb[0].mxu0
    %3701 = vdwg.mxu0
    %v3703 = vsel %vm1117, %v3551, 0
    %v3706 = vsel %vm1117, %v3559, 0
    %3708 = vmatprep.subr.bf16.mxu0 0
    %3709 = vmatpush1.bf16.xpose.msra.mxu0 %v3706
    %3710 = vmatprep.subr.bf16.mxu0 0
    %3711 = vmatpush1.bf16.xpose.msra.mxu0 0
    %3712 = vmatprep.subr.bf16.mxu0 0
    %3713 = vmatpush1.bf16.xpose.msra.mxu0 0
    %3714 = vmatprep.subr.bf16.mxu0 0
    %3715 = vmatpush1.bf16.xpose.msra.mxu0 0
    %3716 = vmatprep.subr.bf16.mxu0 0
    %3717 = vmatpush1.bf16.xpose.msra.mxu0 0
    %3718 = vmatprep.subr.bf16.mxu0 0
    %3719 = vmatpush1.bf16.xpose.msra.mxu0 0
    %3720 = vmatprep.subr.bf16.mxu0 0
    %3721 = vmatpush1.bf16.xpose.msra.mxu0 0
    %3722 = vmatprep.subr.bf16.mxu0 0
    %3723 = vmatpush1.bf16.xpose.msra.mxu0 0
    %3724 = vmatprep.subr.bf16.mxu0 0
    %3725 = vmatpush1.bf16.xpose.msra.mxu0 0
    %3726 = vmatprep.subr.bf16.mxu0 0
    %3727 = vmatpush1.bf16.xpose.msra.mxu0 0
    %3728 = vmatprep.subr.bf16.mxu0 0
    %3729 = vmatpush1.bf16.xpose.msra.mxu0 0
    %3730 = vmatprep.subr.bf16.mxu0 0
    %3731 = vmatpush1.bf16.xpose.msra.mxu0 0
    %3732 = vmatprep.subr.bf16.mxu0 0
    %3733 = vmatpush1.bf16.xpose.msra.mxu0 0
    %3734 = vmatprep.subr.bf16.mxu0 0
    %3735 = vmatpush1.bf16.xpose.msra.mxu0 0
    %3736 = vmatprep.subr.bf16.mxu0 0
    %3737 = vmatpush1.bf16.xpose.msra.mxu0 0
    %3738 = vmatprep.subr.bf16.mxu0 0
    %3739 = vmatpush1.bf16.xpose.msra.mxu0 0
    %3740 = vmatprep.mubr.bf16.mxu0 0
    %3741 = vmatmul.mubr.bf16.gmra.mrb[0].mxu0 %v3703
    %v3742 = vpop.f32.mrb[0].mxu0
    %v3743 = vadd.f32 0.0, %v3742
    %v3744 = vpop.f32.mrb[0].mxu0
    %v3745 = vpop.f32.mrb[0].mxu0
    %v3746 = vpop.f32.mrb[0].mxu0
    %3747 = vdwg.mxu0
    %v3749 = vsel %vm1117, %v3552, 0
    %v3752 = vsel %vm1117, %v3560, 0
    %3754 = vmatprep.subr.bf16.mxu0 0
    %3755 = vmatpush1.bf16.xpose.msra.mxu0 %v3752
    %3756 = vmatprep.subr.bf16.mxu0 0
    %3757 = vmatpush1.bf16.xpose.msra.mxu0 0
    %3758 = vmatprep.subr.bf16.mxu0 0
    %3759 = vmatpush1.bf16.xpose.msra.mxu0 0
    %3760 = vmatprep.subr.bf16.mxu0 0
    %3761 = vmatpush1.bf16.xpose.msra.mxu0 0
    %3762 = vmatprep.subr.bf16.mxu0 0
    %3763 = vmatpush1.bf16.xpose.msra.mxu0 0
    %3764 = vmatprep.subr.bf16.mxu0 0
    %3765 = vmatpush1.bf16.xpose.msra.mxu0 0
    %3766 = vmatprep.subr.bf16.mxu0 0
    %3767 = vmatpush1.bf16.xpose.msra.mxu0 0
    %3768 = vmatprep.subr.bf16.mxu0 0
    %3769 = vmatpush1.bf16.xpose.msra.mxu0 0
    %3770 = vmatprep.subr.bf16.mxu0 0
    %3771 = vmatpush1.bf16.xpose.msra.mxu0 0
    %3772 = vmatprep.subr.bf16.mxu0 0
    %3773 = vmatpush1.bf16.xpose.msra.mxu0 0
    %3774 = vmatprep.subr.bf16.mxu0 0
    %3775 = vmatpush1.bf16.xpose.msra.mxu0 0
    %3776 = vmatprep.subr.bf16.mxu0 0
    %3777 = vmatpush1.bf16.xpose.msra.mxu0 0
    %3778 = vmatprep.subr.bf16.mxu0 0
    %3779 = vmatpush1.bf16.xpose.msra.mxu0 0
    %3780 = vmatprep.subr.bf16.mxu0 0
    %3781 = vmatpush1.bf16.xpose.msra.mxu0 0
    %3782 = vmatprep.subr.bf16.mxu0 0
    %3783 = vmatpush1.bf16.xpose.msra.mxu0 0
    %3784 = vmatprep.subr.bf16.mxu0 0
    %3785 = vmatpush1.bf16.xpose.msra.mxu0 0
    %3786 = vmatprep.mubr.bf16.mxu0 0
    %3787 = vmatmul.mubr.bf16.gmra.mrb[0].mxu0 %v3749
    %v3788 = vpop.f32.mrb[0].mxu0
    %v3789 = vadd.f32 0.0, %v3788
    %v3790 = vpop.f32.mrb[0].mxu0
    %v3791 = vpop.f32.mrb[0].mxu0
    %v3792 = vpop.f32.mrb[0].mxu0
    %3793 = vdwg.mxu0
    %v3795 = vsel %vm1117, %v3553, 0
    %v3798 = vsel %vm1117, %v3561, 0
    %3800 = vmatprep.subr.bf16.mxu0 0
    %3801 = vmatpush1.bf16.xpose.msra.mxu0 %v3798
    %3802 = vmatprep.subr.bf16.mxu0 0
    %3803 = vmatpush1.bf16.xpose.msra.mxu0 0
    %3804 = vmatprep.subr.bf16.mxu0 0
    %3805 = vmatpush1.bf16.xpose.msra.mxu0 0
    %3806 = vmatprep.subr.bf16.mxu0 0
    %3807 = vmatpush1.bf16.xpose.msra.mxu0 0
    %3808 = vmatprep.subr.bf16.mxu0 0
    %3809 = vmatpush1.bf16.xpose.msra.mxu0 0
    %3810 = vmatprep.subr.bf16.mxu0 0
    %3811 = vmatpush1.bf16.xpose.msra.mxu0 0
    %3812 = vmatprep.subr.bf16.mxu0 0
    %3813 = vmatpush1.bf16.xpose.msra.mxu0 0
    %3814 = vmatprep.subr.bf16.mxu0 0
    %3815 = vmatpush1.bf16.xpose.msra.mxu0 0
    %3816 = vmatprep.subr.bf16.mxu0 0
    %3817 = vmatpush1.bf16.xpose.msra.mxu0 0
    %3818 = vmatprep.subr.bf16.mxu0 0
    %3819 = vmatpush1.bf16.xpose.msra.mxu0 0
    %3820 = vmatprep.subr.bf16.mxu0 0
    %3821 = vmatpush1.bf16.xpose.msra.mxu0 0
    %3822 = vmatprep.subr.bf16.mxu0 0
    %3823 = vmatpush1.bf16.xpose.msra.mxu0 0
    %3824 = vmatprep.subr.bf16.mxu0 0
    %3825 = vmatpush1.bf16.xpose.msra.mxu0 0
    %3826 = vmatprep.subr.bf16.mxu0 0
    %3827 = vmatpush1.bf16.xpose.msra.mxu0 0
    %3828 = vmatprep.subr.bf16.mxu0 0
    %3829 = vmatpush1.bf16.xpose.msra.mxu0 0
    %3830 = vmatprep.subr.bf16.mxu0 0
    %3831 = vmatpush1.bf16.xpose.msra.mxu0 0
    %3832 = vmatprep.mubr.bf16.mxu0 0
    %3833 = vmatmul.mubr.bf16.gmra.mrb[0].mxu0 %v3795
    %v3834 = vpop.f32.mrb[0].mxu0
    %v3835 = vadd.f32 0.0, %v3834
    %v3836 = vpop.f32.mrb[0].mxu0
    %v3837 = vpop.f32.mrb[0].mxu0
    %v3838 = vpop.f32.mrb[0].mxu0
    %3839 = vdwg.mxu0
    %v3841 = vsel %vm1117, %v3554, 0
    %v3844 = vsel %vm1117, %v3562, 0
    %3846 = vmatprep.subr.bf16.mxu0 0
    %3847 = vmatpush1.bf16.xpose.msra.mxu0 %v3844
    %3848 = vmatprep.subr.bf16.mxu0 0
    %3849 = vmatpush1.bf16.xpose.msra.mxu0 0
    %3850 = vmatprep.subr.bf16.mxu0 0
    %3851 = vmatpush1.bf16.xpose.msra.mxu0 0
    %3852 = vmatprep.subr.bf16.mxu0 0
    %3853 = vmatpush1.bf16.xpose.msra.mxu0 0
    %3854 = vmatprep.subr.bf16.mxu0 0
    %3855 = vmatpush1.bf16.xpose.msra.mxu0 0
    %3856 = vmatprep.subr.bf16.mxu0 0
    %3857 = vmatpush1.bf16.xpose.msra.mxu0 0
    %3858 = vmatprep.subr.bf16.mxu0 0
    %3859 = vmatpush1.bf16.xpose.msra.mxu0 0
    %3860 = vmatprep.subr.bf16.mxu0 0
    %3861 = vmatpush1.bf16.xpose.msra.mxu0 0
    %3862 = vmatprep.subr.bf16.mxu0 0
    %3863 = vmatpush1.bf16.xpose.msra.mxu0 0
    %3864 = vmatprep.subr.bf16.mxu0 0
    %3865 = vmatpush1.bf16.xpose.msra.mxu0 0
    %3866 = vmatprep.subr.bf16.mxu0 0
    %3867 = vmatpush1.bf16.xpose.msra.mxu0 0
    %3868 = vmatprep.subr.bf16.mxu0 0
    %3869 = vmatpush1.bf16.xpose.msra.mxu0 0
    %3870 = vmatprep.subr.bf16.mxu0 0
    %3871 = vmatpush1.bf16.xpose.msra.mxu0 0
    %3872 = vmatprep.subr.bf16.mxu0 0
    %3873 = vmatpush1.bf16.xpose.msra.mxu0 0
    %3874 = vmatprep.subr.bf16.mxu0 0
    %3875 = vmatpush1.bf16.xpose.msra.mxu0 0
    %3876 = vmatprep.subr.bf16.mxu0 0
    %3877 = vmatpush1.bf16.xpose.msra.mxu0 0
    %3878 = vmatprep.mubr.bf16.mxu0 0
    %3879 = vmatmul.mubr.bf16.gmra.mrb[0].mxu0 %v3841
    %v3880 = vpop.f32.mrb[0].mxu0
    %v3881 = vadd.f32 0.0, %v3880
    %v3882 = vpop.f32.mrb[0].mxu0
    %v3883 = vpop.f32.mrb[0].mxu0
    %v3884 = vpop.f32.mrb[0].mxu0
    %3885 = vdwg.mxu0
    %v3887 = vsel %vm1117, %v3555, 0
    %v3890 = vsel %vm1117, %v3563, 0
    %3892 = vmatprep.subr.bf16.mxu0 0
    %3893 = vmatpush1.bf16.xpose.msra.mxu0 %v3890
    %3894 = vmatprep.subr.bf16.mxu0 0
    %3895 = vmatpush1.bf16.xpose.msra.mxu0 0
    %3896 = vmatprep.subr.bf16.mxu0 0
    %3897 = vmatpush1.bf16.xpose.msra.mxu0 0
    %3898 = vmatprep.subr.bf16.mxu0 0
    %3899 = vmatpush1.bf16.xpose.msra.mxu0 0
    %3900 = vmatprep.subr.bf16.mxu0 0
    %3901 = vmatpush1.bf16.xpose.msra.mxu0 0
    %3902 = vmatprep.subr.bf16.mxu0 0
    %3903 = vmatpush1.bf16.xpose.msra.mxu0 0
    %3904 = vmatprep.subr.bf16.mxu0 0
    %3905 = vmatpush1.bf16.xpose.msra.mxu0 0
    %3906 = vmatprep.subr.bf16.mxu0 0
    %3907 = vmatpush1.bf16.xpose.msra.mxu0 0
    %3908 = vmatprep.subr.bf16.mxu0 0
    %3909 = vmatpush1.bf16.xpose.msra.mxu0 0
    %3910 = vmatprep.subr.bf16.mxu0 0
    %3911 = vmatpush1.bf16.xpose.msra.mxu0 0
    %3912 = vmatprep.subr.bf16.mxu0 0
    %3913 = vmatpush1.bf16.xpose.msra.mxu0 0
    %3914 = vmatprep.subr.bf16.mxu0 0
    %3915 = vmatpush1.bf16.xpose.msra.mxu0 0
    %3916 = vmatprep.subr.bf16.mxu0 0
    %3917 = vmatpush1.bf16.xpose.msra.mxu0 0
    %3918 = vmatprep.subr.bf16.mxu0 0
    %3919 = vmatpush1.bf16.xpose.msra.mxu0 0
    %3920 = vmatprep.subr.bf16.mxu0 0
    %3921 = vmatpush1.bf16.xpose.msra.mxu0 0
    %3922 = vmatprep.subr.bf16.mxu0 0
    %3923 = vmatpush1.bf16.xpose.msra.mxu0 0
    %3924 = vmatprep.mubr.bf16.mxu0 0
    %3925 = vmatmul.mubr.bf16.gmra.mrb[0].mxu0 %v3887
    %v3926 = vpop.f32.mrb[0].mxu0
    %v3927 = vadd.f32 0.0, %v3926
    %v3928 = vpop.f32.mrb[0].mxu0
    %v3929 = vpop.f32.mrb[0].mxu0
    %v3930 = vpop.f32.mrb[0].mxu0
    %3931 = vdwg.mxu0
    %v3932 = vmul.f32 %v3605, 0.35355338
    %v3933 = vmul.f32 %v3651, 0.35355338
    %v3934 = vmul.f32 %v3697, 0.35355338
    %v3935 = vmul.f32 %v3743, 0.35355338
    %v3936 = vmul.f32 %v3789, 0.35355338
    %v3937 = vmul.f32 %v3835, 0.35355338
    %v3938 = vmul.f32 %v3881, 0.35355338
    %v3939 = vmul.f32 %v3927, 0.35355338
    %v3940 = vadd.f32 %v3932, %v100
    %v3941 = vadd.f32 %v3933, %v100
    %v3942 = vadd.f32 %v3934, %v100
    %v3943 = vadd.f32 %v3935, %v100
    %v3944 = vadd.f32 %v3936, %v104
    %v3945 = vadd.f32 %v3937, %v104
    %v3946 = vadd.f32 %v3938, %v104
    %v3947 = vadd.f32 %v3939, %v104
    %v3948 = vsel %vm1117, %v3940, -inf
    %3949 = vmax.xlane.f32.xlu0 %v3948
    %v3950 = vpop.xlane.xlu0 %3949
    %v3951 = vsel %vm1117, %v3941, -inf
    %3952 = vmax.xlane.f32.xlu0 %v3951
    %v3953 = vpop.xlane.xlu0 %3952
    %v3954 = vsel %vm1117, %v3942, -inf
    %3955 = vmax.xlane.f32.xlu0 %v3954
    %v3956 = vpop.xlane.xlu0 %3955
    %v3957 = vsel %vm1117, %v3943, -inf
    %3958 = vmax.xlane.f32.xlu0 %v3957
    %v3959 = vpop.xlane.xlu0 %3958
    %v3960 = vsel %vm1117, %v3944, -inf
    %3961 = vmax.xlane.f32.xlu0 %v3960
    %v3962 = vpop.xlane.xlu0 %3961
    %v3963 = vsel %vm1117, %v3945, -inf
    %3964 = vmax.xlane.f32.xlu0 %v3963
    %v3965 = vpop.xlane.xlu0 %3964
    %v3966 = vsel %vm1117, %v3946, -inf
    %3967 = vmax.xlane.f32.xlu0 %v3966
    %v3968 = vpop.xlane.xlu0 %3967
    %v3969 = vsel %vm1117, %v3947, -inf
    %3970 = vmax.xlane.f32.xlu0 %v3969
    %v3971 = vpop.xlane.xlu0 %3970
    %v3972 = vsub.f32 %v3940, %v3950
    %v3973 = vsub.f32 %v3941, %v3953
    %v3974 = vsub.f32 %v3942, %v3956
    %v3975 = vsub.f32 %v3943, %v3959
    %v3976 = vsub.f32 %v3944, %v3962
    %v3977 = vsub.f32 %v3945, %v3965
    %v3978 = vsub.f32 %v3946, %v3968
    %v3979 = vsub.f32 %v3947, %v3971
    %v3980 = vmul.f32 %v3972, 1.442695
    %v3981 = vpow.pop %v3980
    %v3982 = vmul.f32 %v3973, 1.442695
    %v3983 = vpow.pop %v3982
    %v3984 = vmul.f32 %v3974, 1.442695
    %v3985 = vpow.pop %v3984
    %v3986 = vmul.f32 %v3975, 1.442695
    %v3987 = vpow.pop %v3986
    %v3988 = vmul.f32 %v3976, 1.442695
    %v3989 = vpow.pop %v3988
    %v3990 = vmul.f32 %v3977, 1.442695
    %v3991 = vpow.pop %v3990
    %v3992 = vmul.f32 %v3978, 1.442695
    %v3993 = vpow.pop %v3992
    %v3994 = vmul.f32 %v3979, 1.442695
    %v3995 = vpow.pop %v3994
    %v3996 = vsel %vm1117, %v3981, 0.0
    %3997 = vadd.xlane.f32.xlu0 %v3996
    %v3998 = vpop.xlane.xlu0 %3997
    %v3999 = vsel %vm1117, %v3983, 0.0
    %4000 = vadd.xlane.f32.xlu0 %v3999
    %v4001 = vpop.xlane.xlu0 %4000
    %v4002 = vsel %vm1117, %v3985, 0.0
    %4003 = vadd.xlane.f32.xlu0 %v4002
    %v4004 = vpop.xlane.xlu0 %4003
    %v4005 = vsel %vm1117, %v3987, 0.0
    %4006 = vadd.xlane.f32.xlu0 %v4005
    %v4007 = vpop.xlane.xlu0 %4006
    %v4008 = vsel %vm1117, %v3989, 0.0
    %4009 = vadd.xlane.f32.xlu0 %v4008
    %v4010 = vpop.xlane.xlu0 %4009
    %v4011 = vsel %vm1117, %v3991, 0.0
    %4012 = vadd.xlane.f32.xlu0 %v4011
    %v4013 = vpop.xlane.xlu0 %4012
    %v4014 = vsel %vm1117, %v3993, 0.0
    %4015 = vadd.xlane.f32.xlu0 %v4014
    %v4016 = vpop.xlane.xlu0 %4015
    %v4017 = vsel %vm1117, %v3995, 0.0
    %4018 = vadd.xlane.f32.xlu0 %v4017
    %v4019 = vpop.xlane.xlu0 %4018
    %v4020 = vrcp.pop %v3998
    %v4021 = vrcp.pop %v4001
    %v4022 = vrcp.pop %v4004
    %v4023 = vrcp.pop %v4007
    %v4024 = vrcp.pop %v4010
    %v4025 = vrcp.pop %v4013
    %v4026 = vrcp.pop %v4016
    %v4027 = vrcp.pop %v4019
    %v4028 = vmul.f32 %v3981, %v4020
    %v4029 = vmul.f32 %v3983, %v4021
    %v4030 = vmul.f32 %v3985, %v4022
    %v4031 = vmul.f32 %v3987, %v4023
    %v4032 = vmul.f32 %v3989, %v4024
    %v4033 = vmul.f32 %v3991, %v4025
    %v4034 = vmul.f32 %v3993, %v4026
    %v4035 = vmul.f32 %v3995, %v4027
    %v4036 = vpack.c.bf16 %v4028, %v4028
    %v4037 = vpack.c.bf16 %v4029, %v4029
    %v4038 = vpack.c.bf16 %v4030, %v4030
    %v4039 = vpack.c.bf16 %v4031, %v4031
    %v4040 = vpack.c.bf16 %v4032, %v4032
    %v4041 = vpack.c.bf16 %v4033, %v4033
    %v4042 = vpack.c.bf16 %v4034, %v4034
    %v4043 = vpack.c.bf16 %v4035, %v4035
    %v4044 = vpack.c.bf16 %v3340, %v3340
    %v4045 = vpack.c.bf16 %v3341, %v3341
    %v4046 = vpack.c.bf16 %v3342, %v3342
    %v4047 = vpack.c.bf16 %v3343, %v3343
    %v4048 = vpack.c.bf16 %v3544, %v3544
    %v4049 = vpack.c.bf16 %v3545, %v3545
    %v4050 = vpack.c.bf16 %v3546, %v3546
    %v4051 = vpack.c.bf16 %v3547, %v3547
    %v4053 = vsel %vm1117, %v4036, 0
    %v4056 = vsel %vm1609, %v4044, 0
    %4058 = vmatprep.subr.bf16.mxu0 0
    %4059 = vmatpush1.bf16.msra.mxu0 %v4056
    %4060 = vmatprep.subr.bf16.mxu0 0
    %4061 = vmatpush1.bf16.msra.mxu0 0
    %4062 = vmatprep.subr.bf16.mxu0 0
    %4063 = vmatpush1.bf16.msra.mxu0 0
    %4064 = vmatprep.subr.bf16.mxu0 0
    %4065 = vmatpush1.bf16.msra.mxu0 0
    %4066 = vmatprep.subr.bf16.mxu0 0
    %4067 = vmatpush1.bf16.msra.mxu0 0
    %4068 = vmatprep.subr.bf16.mxu0 0
    %4069 = vmatpush1.bf16.msra.mxu0 0
    %4070 = vmatprep.subr.bf16.mxu0 0
    %4071 = vmatpush1.bf16.msra.mxu0 0
    %4072 = vmatprep.subr.bf16.mxu0 0
    %4073 = vmatpush1.bf16.msra.mxu0 0
    %4074 = vmatprep.subr.bf16.mxu0 0
    %4075 = vmatpush1.bf16.msra.mxu0 0
    %4076 = vmatprep.subr.bf16.mxu0 0
    %4077 = vmatpush1.bf16.msra.mxu0 0
    %4078 = vmatprep.subr.bf16.mxu0 0
    %4079 = vmatpush1.bf16.msra.mxu0 0
    %4080 = vmatprep.subr.bf16.mxu0 0
    %4081 = vmatpush1.bf16.msra.mxu0 0
    %4082 = vmatprep.subr.bf16.mxu0 0
    %4083 = vmatpush1.bf16.msra.mxu0 0
    %4084 = vmatprep.subr.bf16.mxu0 0
    %4085 = vmatpush1.bf16.msra.mxu0 0
    %4086 = vmatprep.subr.bf16.mxu0 0
    %4087 = vmatpush1.bf16.msra.mxu0 0
    %4088 = vmatprep.subr.bf16.mxu0 0
    %4089 = vmatpush1.bf16.msra.mxu0 0
    %4090 = vmatprep.mubr.bf16.mxu0 0
    %4091 = vmatmul.mubr.bf16.gmra.mrb[0].mxu0 %v4053
    %v4092 = vpop.f32.mrb[0].mxu0
    %v4093 = vadd.f32 0.0, %v4092
    %v4094 = vpop.f32.mrb[0].mxu0
    %v4095 = vpop.f32.mrb[0].mxu0
    %v4096 = vpop.f32.mrb[0].mxu0
    %4097 = vdwg.mxu0
    %v4099 = vsel %vm1117, %v4037, 0
    %v4102 = vsel %vm1609, %v4045, 0
    %4104 = vmatprep.subr.bf16.mxu0 0
    %4105 = vmatpush1.bf16.msra.mxu0 %v4102
    %4106 = vmatprep.subr.bf16.mxu0 0
    %4107 = vmatpush1.bf16.msra.mxu0 0
    %4108 = vmatprep.subr.bf16.mxu0 0
    %4109 = vmatpush1.bf16.msra.mxu0 0
    %4110 = vmatprep.subr.bf16.mxu0 0
    %4111 = vmatpush1.bf16.msra.mxu0 0
    %4112 = vmatprep.subr.bf16.mxu0 0
    %4113 = vmatpush1.bf16.msra.mxu0 0
    %4114 = vmatprep.subr.bf16.mxu0 0
    %4115 = vmatpush1.bf16.msra.mxu0 0
    %4116 = vmatprep.subr.bf16.mxu0 0
    %4117 = vmatpush1.bf16.msra.mxu0 0
    %4118 = vmatprep.subr.bf16.mxu0 0
    %4119 = vmatpush1.bf16.msra.mxu0 0
    %4120 = vmatprep.subr.bf16.mxu0 0
    %4121 = vmatpush1.bf16.msra.mxu0 0
    %4122 = vmatprep.subr.bf16.mxu0 0
    %4123 = vmatpush1.bf16.msra.mxu0 0
    %4124 = vmatprep.subr.bf16.mxu0 0
    %4125 = vmatpush1.bf16.msra.mxu0 0
    %4126 = vmatprep.subr.bf16.mxu0 0
    %4127 = vmatpush1.bf16.msra.mxu0 0
    %4128 = vmatprep.subr.bf16.mxu0 0
    %4129 = vmatpush1.bf16.msra.mxu0 0
    %4130 = vmatprep.subr.bf16.mxu0 0
    %4131 = vmatpush1.bf16.msra.mxu0 0
    %4132 = vmatprep.subr.bf16.mxu0 0
    %4133 = vmatpush1.bf16.msra.mxu0 0
    %4134 = vmatprep.subr.bf16.mxu0 0
    %4135 = vmatpush1.bf16.msra.mxu0 0
    %4136 = vmatprep.mubr.bf16.mxu0 0
    %4137 = vmatmul.mubr.bf16.gmra.mrb[0].mxu0 %v4099
    %v4138 = vpop.f32.mrb[0].mxu0
    %v4139 = vadd.f32 0.0, %v4138
    %v4140 = vpop.f32.mrb[0].mxu0
    %v4141 = vpop.f32.mrb[0].mxu0
    %v4142 = vpop.f32.mrb[0].mxu0
    %4143 = vdwg.mxu0
    %v4145 = vsel %vm1117, %v4038, 0
    %v4148 = vsel %vm1609, %v4046, 0
    %4150 = vmatprep.subr.bf16.mxu0 0
    %4151 = vmatpush1.bf16.msra.mxu0 %v4148
    %4152 = vmatprep.subr.bf16.mxu0 0
    %4153 = vmatpush1.bf16.msra.mxu0 0
    %4154 = vmatprep.subr.bf16.mxu0 0
    %4155 = vmatpush1.bf16.msra.mxu0 0
    %4156 = vmatprep.subr.bf16.mxu0 0
    %4157 = vmatpush1.bf16.msra.mxu0 0
    %4158 = vmatprep.subr.bf16.mxu0 0
    %4159 = vmatpush1.bf16.msra.mxu0 0
    %4160 = vmatprep.subr.bf16.mxu0 0
    %4161 = vmatpush1.bf16.msra.mxu0 0
    %4162 = vmatprep.subr.bf16.mxu0 0
    %4163 = vmatpush1.bf16.msra.mxu0 0
    %4164 = vmatprep.subr.bf16.mxu0 0
    %4165 = vmatpush1.bf16.msra.mxu0 0
    %4166 = vmatprep.subr.bf16.mxu0 0
    %4167 = vmatpush1.bf16.msra.mxu0 0
    %4168 = vmatprep.subr.bf16.mxu0 0
    %4169 = vmatpush1.bf16.msra.mxu0 0
    %4170 = vmatprep.subr.bf16.mxu0 0
    %4171 = vmatpush1.bf16.msra.mxu0 0
    %4172 = vmatprep.subr.bf16.mxu0 0
    %4173 = vmatpush1.bf16.msra.mxu0 0
    %4174 = vmatprep.subr.bf16.mxu0 0
    %4175 = vmatpush1.bf16.msra.mxu0 0
    %4176 = vmatprep.subr.bf16.mxu0 0
    %4177 = vmatpush1.bf16.msra.mxu0 0
    %4178 = vmatprep.subr.bf16.mxu0 0
    %4179 = vmatpush1.bf16.msra.mxu0 0
    %4180 = vmatprep.subr.bf16.mxu0 0
    %4181 = vmatpush1.bf16.msra.mxu0 0
    %4182 = vmatprep.mubr.bf16.mxu0 0
    %4183 = vmatmul.mubr.bf16.gmra.mrb[0].mxu0 %v4145
    %v4184 = vpop.f32.mrb[0].mxu0
    %v4185 = vadd.f32 0.0, %v4184
    %v4186 = vpop.f32.mrb[0].mxu0
    %v4187 = vpop.f32.mrb[0].mxu0
    %v4188 = vpop.f32.mrb[0].mxu0
    %4189 = vdwg.mxu0
    %v4191 = vsel %vm1117, %v4039, 0
    %v4194 = vsel %vm1609, %v4047, 0
    %4196 = vmatprep.subr.bf16.mxu0 0
    %4197 = vmatpush1.bf16.msra.mxu0 %v4194
    %4198 = vmatprep.subr.bf16.mxu0 0
    %4199 = vmatpush1.bf16.msra.mxu0 0
    %4200 = vmatprep.subr.bf16.mxu0 0
    %4201 = vmatpush1.bf16.msra.mxu0 0
    %4202 = vmatprep.subr.bf16.mxu0 0
    %4203 = vmatpush1.bf16.msra.mxu0 0
    %4204 = vmatprep.subr.bf16.mxu0 0
    %4205 = vmatpush1.bf16.msra.mxu0 0
    %4206 = vmatprep.subr.bf16.mxu0 0
    %4207 = vmatpush1.bf16.msra.mxu0 0
    %4208 = vmatprep.subr.bf16.mxu0 0
    %4209 = vmatpush1.bf16.msra.mxu0 0
    %4210 = vmatprep.subr.bf16.mxu0 0
    %4211 = vmatpush1.bf16.msra.mxu0 0
    %4212 = vmatprep.subr.bf16.mxu0 0
    %4213 = vmatpush1.bf16.msra.mxu0 0
    %4214 = vmatprep.subr.bf16.mxu0 0
    %4215 = vmatpush1.bf16.msra.mxu0 0
    %4216 = vmatprep.subr.bf16.mxu0 0
    %4217 = vmatpush1.bf16.msra.mxu0 0
    %4218 = vmatprep.subr.bf16.mxu0 0
    %4219 = vmatpush1.bf16.msra.mxu0 0
    %4220 = vmatprep.subr.bf16.mxu0 0
    %4221 = vmatpush1.bf16.msra.mxu0 0
    %4222 = vmatprep.subr.bf16.mxu0 0
    %4223 = vmatpush1.bf16.msra.mxu0 0
    %4224 = vmatprep.subr.bf16.mxu0 0
    %4225 = vmatpush1.bf16.msra.mxu0 0
    %4226 = vmatprep.subr.bf16.mxu0 0
    %4227 = vmatpush1.bf16.msra.mxu0 0
    %4228 = vmatprep.mubr.bf16.mxu0 0
    %4229 = vmatmul.mubr.bf16.gmra.mrb[0].mxu0 %v4191
    %v4230 = vpop.f32.mrb[0].mxu0
    %v4231 = vadd.f32 0.0, %v4230
    %v4232 = vpop.f32.mrb[0].mxu0
    %v4233 = vpop.f32.mrb[0].mxu0
    %v4234 = vpop.f32.mrb[0].mxu0
    %4235 = vdwg.mxu0
    %v4237 = vsel %vm1117, %v4040, 0
    %v4240 = vsel %vm1609, %v4048, 0
    %4242 = vmatprep.subr.bf16.mxu0 0
    %4243 = vmatpush1.bf16.msra.mxu0 %v4240
    %4244 = vmatprep.subr.bf16.mxu0 0
    %4245 = vmatpush1.bf16.msra.mxu0 0
    %4246 = vmatprep.subr.bf16.mxu0 0
    %4247 = vmatpush1.bf16.msra.mxu0 0
    %4248 = vmatprep.subr.bf16.mxu0 0
    %4249 = vmatpush1.bf16.msra.mxu0 0
    %4250 = vmatprep.subr.bf16.mxu0 0
    %4251 = vmatpush1.bf16.msra.mxu0 0
    %4252 = vmatprep.subr.bf16.mxu0 0
    %4253 = vmatpush1.bf16.msra.mxu0 0
    %4254 = vmatprep.subr.bf16.mxu0 0
    %4255 = vmatpush1.bf16.msra.mxu0 0
    %4256 = vmatprep.subr.bf16.mxu0 0
    %4257 = vmatpush1.bf16.msra.mxu0 0
    %4258 = vmatprep.subr.bf16.mxu0 0
    %4259 = vmatpush1.bf16.msra.mxu0 0
    %4260 = vmatprep.subr.bf16.mxu0 0
    %4261 = vmatpush1.bf16.msra.mxu0 0
    %4262 = vmatprep.subr.bf16.mxu0 0
    %4263 = vmatpush1.bf16.msra.mxu0 0
    %4264 = vmatprep.subr.bf16.mxu0 0
    %4265 = vmatpush1.bf16.msra.mxu0 0
    %4266 = vmatprep.subr.bf16.mxu0 0
    %4267 = vmatpush1.bf16.msra.mxu0 0
    %4268 = vmatprep.subr.bf16.mxu0 0
    %4269 = vmatpush1.bf16.msra.mxu0 0
    %4270 = vmatprep.subr.bf16.mxu0 0
    %4271 = vmatpush1.bf16.msra.mxu0 0
    %4272 = vmatprep.subr.bf16.mxu0 0
    %4273 = vmatpush1.bf16.msra.mxu0 0
    %4274 = vmatprep.mubr.bf16.mxu0 0
    %4275 = vmatmul.mubr.bf16.gmra.mrb[0].mxu0 %v4237
    %v4276 = vpop.f32.mrb[0].mxu0
    %v4277 = vadd.f32 0.0, %v4276
    %v4278 = vpop.f32.mrb[0].mxu0
    %v4279 = vpop.f32.mrb[0].mxu0
    %v4280 = vpop.f32.mrb[0].mxu0
    %4281 = vdwg.mxu0
    %v4283 = vsel %vm1117, %v4041, 0
    %v4286 = vsel %vm1609, %v4049, 0
    %4288 = vmatprep.subr.bf16.mxu0 0
    %4289 = vmatpush1.bf16.msra.mxu0 %v4286
    %4290 = vmatprep.subr.bf16.mxu0 0
    %4291 = vmatpush1.bf16.msra.mxu0 0
    %4292 = vmatprep.subr.bf16.mxu0 0
    %4293 = vmatpush1.bf16.msra.mxu0 0
    %4294 = vmatprep.subr.bf16.mxu0 0
    %4295 = vmatpush1.bf16.msra.mxu0 0
    %4296 = vmatprep.subr.bf16.mxu0 0
    %4297 = vmatpush1.bf16.msra.mxu0 0
    %4298 = vmatprep.subr.bf16.mxu0 0
    %4299 = vmatpush1.bf16.msra.mxu0 0
    %4300 = vmatprep.subr.bf16.mxu0 0
    %4301 = vmatpush1.bf16.msra.mxu0 0
    %4302 = vmatprep.subr.bf16.mxu0 0
    %4303 = vmatpush1.bf16.msra.mxu0 0
    %4304 = vmatprep.subr.bf16.mxu0 0
    %4305 = vmatpush1.bf16.msra.mxu0 0
    %4306 = vmatprep.subr.bf16.mxu0 0
    %4307 = vmatpush1.bf16.msra.mxu0 0
    %4308 = vmatprep.subr.bf16.mxu0 0
    %4309 = vmatpush1.bf16.msra.mxu0 0
    %4310 = vmatprep.subr.bf16.mxu0 0
    %4311 = vmatpush1.bf16.msra.mxu0 0
    %4312 = vmatprep.subr.bf16.mxu0 0
    %4313 = vmatpush1.bf16.msra.mxu0 0
    %4314 = vmatprep.subr.bf16.mxu0 0
    %4315 = vmatpush1.bf16.msra.mxu0 0
    %4316 = vmatprep.subr.bf16.mxu0 0
    %4317 = vmatpush1.bf16.msra.mxu0 0
    %4318 = vmatprep.subr.bf16.mxu0 0
    %4319 = vmatpush1.bf16.msra.mxu0 0
    %4320 = vmatprep.mubr.bf16.mxu0 0
    %4321 = vmatmul.mubr.bf16.gmra.mrb[0].mxu0 %v4283
    %v4322 = vpop.f32.mrb[0].mxu0
    %v4323 = vadd.f32 0.0, %v4322
    %v4324 = vpop.f32.mrb[0].mxu0
    %v4325 = vpop.f32.mrb[0].mxu0
    %v4326 = vpop.f32.mrb[0].mxu0
    %4327 = vdwg.mxu0
    %v4329 = vsel %vm1117, %v4042, 0
    %v4332 = vsel %vm1609, %v4050, 0
    %4334 = vmatprep.subr.bf16.mxu0 0
    %4335 = vmatpush1.bf16.msra.mxu0 %v4332
    %4336 = vmatprep.subr.bf16.mxu0 0
    %4337 = vmatpush1.bf16.msra.mxu0 0
    %4338 = vmatprep.subr.bf16.mxu0 0
    %4339 = vmatpush1.bf16.msra.mxu0 0
    %4340 = vmatprep.subr.bf16.mxu0 0
    %4341 = vmatpush1.bf16.msra.mxu0 0
    %4342 = vmatprep.subr.bf16.mxu0 0
    %4343 = vmatpush1.bf16.msra.mxu0 0
    %4344 = vmatprep.subr.bf16.mxu0 0
    %4345 = vmatpush1.bf16.msra.mxu0 0
    %4346 = vmatprep.subr.bf16.mxu0 0
    %4347 = vmatpush1.bf16.msra.mxu0 0
    %4348 = vmatprep.subr.bf16.mxu0 0
    %4349 = vmatpush1.bf16.msra.mxu0 0
    %4350 = vmatprep.subr.bf16.mxu0 0
    %4351 = vmatpush1.bf16.msra.mxu0 0
    %4352 = vmatprep.subr.bf16.mxu0 0
    %4353 = vmatpush1.bf16.msra.mxu0 0
    %4354 = vmatprep.subr.bf16.mxu0 0
    %4355 = vmatpush1.bf16.msra.mxu0 0
    %4356 = vmatprep.subr.bf16.mxu0 0
    %4357 = vmatpush1.bf16.msra.mxu0 0
    %4358 = vmatprep.subr.bf16.mxu0 0
    %4359 = vmatpush1.bf16.msra.mxu0 0
    %4360 = vmatprep.subr.bf16.mxu0 0
    %4361 = vmatpush1.bf16.msra.mxu0 0
    %4362 = vmatprep.subr.bf16.mxu0 0
    %4363 = vmatpush1.bf16.msra.mxu0 0
    %4364 = vmatprep.subr.bf16.mxu0 0
    %4365 = vmatpush1.bf16.msra.mxu0 0
    %4366 = vmatprep.mubr.bf16.mxu0 0
    %4367 = vmatmul.mubr.bf16.gmra.mrb[0].mxu0 %v4329
    %v4368 = vpop.f32.mrb[0].mxu0
    %v4369 = vadd.f32 0.0, %v4368
    %v4370 = vpop.f32.mrb[0].mxu0
    %v4371 = vpop.f32.mrb[0].mxu0
    %v4372 = vpop.f32.mrb[0].mxu0
    %4373 = vdwg.mxu0
    %v4375 = vsel %vm1117, %v4043, 0
    %v4378 = vsel %vm1609, %v4051, 0
    %4380 = vmatprep.subr.bf16.mxu0 0
    %4381 = vmatpush1.bf16.msra.mxu0 %v4378
    %4382 = vmatprep.subr.bf16.mxu0 0
    %4383 = vmatpush1.bf16.msra.mxu0 0
    %4384 = vmatprep.subr.bf16.mxu0 0
    %4385 = vmatpush1.bf16.msra.mxu0 0
    %4386 = vmatprep.subr.bf16.mxu0 0
    %4387 = vmatpush1.bf16.msra.mxu0 0
    %4388 = vmatprep.subr.bf16.mxu0 0
    %4389 = vmatpush1.bf16.msra.mxu0 0
    %4390 = vmatprep.subr.bf16.mxu0 0
    %4391 = vmatpush1.bf16.msra.mxu0 0
    %4392 = vmatprep.subr.bf16.mxu0 0
    %4393 = vmatpush1.bf16.msra.mxu0 0
    %4394 = vmatprep.subr.bf16.mxu0 0
    %4395 = vmatpush1.bf16.msra.mxu0 0
    %4396 = vmatprep.subr.bf16.mxu0 0
    %4397 = vmatpush1.bf16.msra.mxu0 0
    %4398 = vmatprep.subr.bf16.mxu0 0
    %4399 = vmatpush1.bf16.msra.mxu0 0
    %4400 = vmatprep.subr.bf16.mxu0 0
    %4401 = vmatpush1.bf16.msra.mxu0 0
    %4402 = vmatprep.subr.bf16.mxu0 0
    %4403 = vmatpush1.bf16.msra.mxu0 0
    %4404 = vmatprep.subr.bf16.mxu0 0
    %4405 = vmatpush1.bf16.msra.mxu0 0
    %4406 = vmatprep.subr.bf16.mxu0 0
    %4407 = vmatpush1.bf16.msra.mxu0 0
    %4408 = vmatprep.subr.bf16.mxu0 0
    %4409 = vmatpush1.bf16.msra.mxu0 0
    %4410 = vmatprep.subr.bf16.mxu0 0
    %4411 = vmatpush1.bf16.msra.mxu0 0
    %4412 = vmatprep.mubr.bf16.mxu0 0
    %4413 = vmatmul.mubr.bf16.gmra.mrb[0].mxu0 %v4375
    %v4414 = vpop.f32.mrb[0].mxu0
    %v4415 = vadd.f32 0.0, %v4414
    %v4416 = vpop.f32.mrb[0].mxu0
    %v4417 = vpop.f32.mrb[0].mxu0
    %v4418 = vpop.f32.mrb[0].mxu0
    %4419 = vdwg.mxu0
    %v4420 = vcombine.low %v4093, %v4185
    %v4421 = vcombine.high %v4093, %v4185
    %v4423 = vunpack.c.l.s4 1983009808
    %v4424 = vunpack.c.0.s8 %v4423
    %v4425 = vlaneseq
    %v4426 = vshrl.u32 %v4425, 7
    %v4427 = vsub.s32 %v4424, %v4426
    %v4428 = vrot.slane %v4420, %v4427
    %v4430 = vunpack.c.l.s4 1983009808
    %v4431 = vunpack.c.0.s8 %v4430
    %v4432 = vlaneseq
    %v4433 = vshrl.u32 %v4432, 7
    %v4434 = vsub.s32 %v4431, %v4433
    %v4435 = vrot.slane %v4421, %v4434
    %v4436 = vcombine.low %v4139, %v4231
    %v4437 = vcombine.high %v4139, %v4231
    %v4439 = vunpack.c.l.s4 1983009808
    %v4440 = vunpack.c.0.s8 %v4439
    %v4441 = vlaneseq
    %v4442 = vshrl.u32 %v4441, 7
    %v4443 = vsub.s32 %v4440, %v4442
    %v4444 = vrot.slane %v4436, %v4443
    %v4446 = vunpack.c.l.s4 1983009808
    %v4447 = vunpack.c.0.s8 %v4446
    %v4448 = vlaneseq
    %v4449 = vshrl.u32 %v4448, 7
    %v4450 = vsub.s32 %v4447, %v4449
    %v4451 = vrot.slane %v4437, %v4450
    %v4452 = vcombine.low %v4428, %v4444
    %v4453 = vcombine.high %v4428, %v4444
    %v4455 = vunpack.c.l.s4 1934713408
    %v4456 = vunpack.c.0.s8 %v4455
    %v4457 = vlaneseq
    %v4458 = vshrl.u32 %v4457, 7
    %v4459 = vsub.s32 %v4456, %v4458
    %v4460 = vrot.slane %v4452, %v4459
    %v4462 = vunpack.c.l.s4 1934713408
    %v4463 = vunpack.c.0.s8 %v4462
    %v4464 = vlaneseq
    %v4465 = vshrl.u32 %v4464, 7
    %v4466 = vsub.s32 %v4463, %v4465
    %v4467 = vrot.slane %v4453, %v4466
    %v4468 = vcombine.low %v4435, %v4451
    %v4469 = vcombine.high %v4435, %v4451
    %v4471 = vunpack.c.l.s4 1934713408
    %v4472 = vunpack.c.0.s8 %v4471
    %v4473 = vlaneseq
    %v4474 = vshrl.u32 %v4473, 7
    %v4475 = vsub.s32 %v4472, %v4474
    %v4476 = vrot.slane %v4468, %v4475
    %v4478 = vunpack.c.l.s4 1934713408
    %v4479 = vunpack.c.0.s8 %v4478
    %v4480 = vlaneseq
    %v4481 = vshrl.u32 %v4480, 7
    %v4482 = vsub.s32 %v4479, %v4481
    %v4483 = vrot.slane %v4469, %v4482
    %v4484 = vcombine.high %v4460, 0.0
    %v4485 = vcombine.high %v4467, 0.0
    %v4486 = vcombine.high %v4476, 0.0
    %v4487 = vcombine.high %v4483, 0.0
    %v4488 = vcombine.low %v4277, %v4369
    %v4489 = vcombine.high %v4277, %v4369
    %v4491 = vunpack.c.l.s4 1983009808
    %v4492 = vunpack.c.0.s8 %v4491
    %v4493 = vlaneseq
    %v4494 = vshrl.u32 %v4493, 7
    %v4495 = vsub.s32 %v4492, %v4494
    %v4496 = vrot.slane %v4488, %v4495
    %v4498 = vunpack.c.l.s4 1983009808
    %v4499 = vunpack.c.0.s8 %v4498
    %v4500 = vlaneseq
    %v4501 = vshrl.u32 %v4500, 7
    %v4502 = vsub.s32 %v4499, %v4501
    %v4503 = vrot.slane %v4489, %v4502
    %v4504 = vcombine.low %v4323, %v4415
    %v4505 = vcombine.high %v4323, %v4415
    %v4507 = vunpack.c.l.s4 1983009808
    %v4508 = vunpack.c.0.s8 %v4507
    %v4509 = vlaneseq
    %v4510 = vshrl.u32 %v4509, 7
    %v4511 = vsub.s32 %v4508, %v4510
    %v4512 = vrot.slane %v4504, %v4511
    %v4514 = vunpack.c.l.s4 1983009808
    %v4515 = vunpack.c.0.s8 %v4514
    %v4516 = vlaneseq
    %v4517 = vshrl.u32 %v4516, 7
    %v4518 = vsub.s32 %v4515, %v4517
    %v4519 = vrot.slane %v4505, %v4518
    %v4520 = vcombine.low %v4496, %v4512
    %v4521 = vcombine.high %v4496, %v4512
    %v4523 = vunpack.c.l.s4 1934713408
    %v4524 = vunpack.c.0.s8 %v4523
    %v4525 = vlaneseq
    %v4526 = vshrl.u32 %v4525, 7
    %v4527 = vsub.s32 %v4524, %v4526
    %v4528 = vrot.slane %v4520, %v4527
    %v4530 = vunpack.c.l.s4 1934713408
    %v4531 = vunpack.c.0.s8 %v4530
    %v4532 = vlaneseq
    %v4533 = vshrl.u32 %v4532, 7
    %v4534 = vsub.s32 %v4531, %v4533
    %v4535 = vrot.slane %v4521, %v4534
    %v4536 = vcombine.low %v4503, %v4519
    %v4537 = vcombine.high %v4503, %v4519
    %v4539 = vunpack.c.l.s4 1934713408
    %v4540 = vunpack.c.0.s8 %v4539
    %v4541 = vlaneseq
    %v4542 = vshrl.u32 %v4541, 7
    %v4543 = vsub.s32 %v4540, %v4542
    %v4544 = vrot.slane %v4536, %v4543
    %v4546 = vunpack.c.l.s4 1934713408
    %v4547 = vunpack.c.0.s8 %v4546
    %v4548 = vlaneseq
    %v4549 = vshrl.u32 %v4548, 7
    %v4550 = vsub.s32 %v4547, %v4549
    %v4551 = vrot.slane %v4537, %v4550
    %v4552 = vcombine.high %v4528, 0.0
    %v4553 = vcombine.high %v4535, 0.0
    %v4554 = vcombine.high %v4544, 0.0
    %v4555 = vcombine.high %v4551, 0.0
    %v4556 = vcombine.low %v4460, %v4467
    %v4558 = vunpack.c.l.s4 1983009808
    %v4559 = vunpack.c.0.s8 %v4558
    %v4560 = vlaneseq
    %v4561 = vshrl.u32 %v4560, 7
    %v4562 = vsub.s32 %v4559, %v4561
    %v4563 = vrot.slane %v4556, %v4562
    %v4564 = vcombine.low %v4484, %v4485
    %v4566 = vunpack.c.l.s4 1983009808
    %v4567 = vunpack.c.0.s8 %v4566
    %v4568 = vlaneseq
    %v4569 = vshrl.u32 %v4568, 7
    %v4570 = vsub.s32 %v4567, %v4569
    %v4571 = vrot.slane %v4564, %v4570
    %v4572 = vcombine.low %v4476, %v4483
    %v4574 = vunpack.c.l.s4 1983009808
    %v4575 = vunpack.c.0.s8 %v4574
    %v4576 = vlaneseq
    %v4577 = vshrl.u32 %v4576, 7
    %v4578 = vsub.s32 %v4575, %v4577
    %v4579 = vrot.slane %v4572, %v4578
    %v4580 = vcombine.low %v4486, %v4487
    %v4582 = vunpack.c.l.s4 1983009808
    %v4583 = vunpack.c.0.s8 %v4582
    %v4584 = vlaneseq
    %v4585 = vshrl.u32 %v4584, 7
    %v4586 = vsub.s32 %v4583, %v4585
    %v4587 = vrot.slane %v4580, %v4586
    %v4588 = vcombine.low %v4563, %v4571
    %v4589 = vcombine.high %v4563, %v4571
    %v4591 = vunpack.c.l.s4 1934713408
    %v4592 = vunpack.c.0.s8 %v4591
    %v4593 = vlaneseq
    %v4594 = vshrl.u32 %v4593, 7
    %v4595 = vsub.s32 %v4592, %v4594
    %v4596 = vrot.slane %v4588, %v4595
    %v4598 = vunpack.c.l.s4 1934713408
    %v4599 = vunpack.c.0.s8 %v4598
    %v4600 = vlaneseq
    %v4601 = vshrl.u32 %v4600, 7
    %v4602 = vsub.s32 %v4599, %v4601
    %v4603 = vrot.slane %v4589, %v4602
    %v4604 = vcombine.low %v4579, %v4587
    %v4605 = vcombine.high %v4579, %v4587
    %v4607 = vunpack.c.l.s4 1934713408
    %v4608 = vunpack.c.0.s8 %v4607
    %v4609 = vlaneseq
    %v4610 = vshrl.u32 %v4609, 7
    %v4611 = vsub.s32 %v4608, %v4610
    %v4612 = vrot.slane %v4604, %v4611
    %v4614 = vunpack.c.l.s4 1934713408
    %v4615 = vunpack.c.0.s8 %v4614
    %v4616 = vlaneseq
    %v4617 = vshrl.u32 %v4616, 7
    %v4618 = vsub.s32 %v4615, %v4617
    %v4619 = vrot.slane %v4605, %v4618
    %v4620 = vcombine.low %v4596, %v4612
    %v4621 = vcombine.high %v4596, %v4612
    %v4622 = vcombine.low %v4603, %v4619
    %v4623 = vcombine.high %v4603, %v4619
    %v4624 = vcombine.low %v4528, %v4535
    %v4626 = vunpack.c.l.s4 1983009808
    %v4627 = vunpack.c.0.s8 %v4626
    %v4628 = vlaneseq
    %v4629 = vshrl.u32 %v4628, 7
    %v4630 = vsub.s32 %v4627, %v4629
    %v4631 = vrot.slane %v4624, %v4630
    %v4632 = vcombine.low %v4552, %v4553
    %v4634 = vunpack.c.l.s4 1983009808
    %v4635 = vunpack.c.0.s8 %v4634
    %v4636 = vlaneseq
    %v4637 = vshrl.u32 %v4636, 7
    %v4638 = vsub.s32 %v4635, %v4637
    %v4639 = vrot.slane %v4632, %v4638
    %v4640 = vcombine.low %v4544, %v4551
    %v4642 = vunpack.c.l.s4 1983009808
    %v4643 = vunpack.c.0.s8 %v4642
    %v4644 = vlaneseq
    %v4645 = vshrl.u32 %v4644, 7
    %v4646 = vsub.s32 %v4643, %v4645
    %v4647 = vrot.slane %v4640, %v4646
    %v4648 = vcombine.low %v4554, %v4555
    %v4650 = vunpack.c.l.s4 1983009808
    %v4651 = vunpack.c.0.s8 %v4650
    %v4652 = vlaneseq
    %v4653 = vshrl.u32 %v4652, 7
    %v4654 = vsub.s32 %v4651, %v4653
    %v4655 = vrot.slane %v4648, %v4654
    %v4656 = vcombine.low %v4631, %v4639
    %v4657 = vcombine.high %v4631, %v4639
    %v4659 = vunpack.c.l.s4 1934713408
    %v4660 = vunpack.c.0.s8 %v4659
    %v4661 = vlaneseq
    %v4662 = vshrl.u32 %v4661, 7
    %v4663 = vsub.s32 %v4660, %v4662
    %v4664 = vrot.slane %v4656, %v4663
    %v4666 = vunpack.c.l.s4 1934713408
    %v4667 = vunpack.c.0.s8 %v4666
    %v4668 = vlaneseq
    %v4669 = vshrl.u32 %v4668, 7
    %v4670 = vsub.s32 %v4667, %v4669
    %v4671 = vrot.slane %v4657, %v4670
    %v4672 = vcombine.low %v4647, %v4655
    %v4673 = vcombine.high %v4647, %v4655
    %v4675 = vunpack.c.l.s4 1934713408
    %v4676 = vunpack.c.0.s8 %v4675
    %v4677 = vlaneseq
    %v4678 = vshrl.u32 %v4677, 7
    %v4679 = vsub.s32 %v4676, %v4678
    %v4680 = vrot.slane %v4672, %v4679
    %v4682 = vunpack.c.l.s4 1934713408
    %v4683 = vunpack.c.0.s8 %v4682
    %v4684 = vlaneseq
    %v4685 = vshrl.u32 %v4684, 7
    %v4686 = vsub.s32 %v4683, %v4685
    %v4687 = vrot.slane %v4673, %v4686
    %v4688 = vcombine.low %v4664, %v4680
    %v4689 = vcombine.high %v4664, %v4680
    %v4690 = vcombine.low %v4671, %v4687
    %v4691 = vcombine.high %v4671, %v4687
    %4694 = vrot.lane.b32.xlu0 %v4621, 8
    %v4695 = vpop.permute.xlu0 %4694
    %4696 = vrot.lane.b32.xlu0 %v4689, 8
    %v4697 = vpop.permute.xlu0 %4696
    %4702 = vrot.lane.b32.xlu0 %v4622, 16
    %v4703 = vpop.permute.xlu0 %4702
    %4704 = vrot.lane.b32.xlu0 %v4690, 16
    %v4705 = vpop.permute.xlu0 %4704
    %4710 = vrot.lane.b32.xlu0 %v4623, 24
    %v4711 = vpop.permute.xlu0 %4710
    %4712 = vrot.lane.b32.xlu0 %v4691, 24
    %v4713 = vpop.permute.xlu0 %4712
    %v4716 = vsel %vm1117, %v4620, %v4695
    %v4717 = vsel %vm1117, %v4688, %v4697
    %v4718 = vsel %vm2273, %v4716, %v4703
    %v4719 = vsel %vm2273, %v4717, %v4705
    %v4720 = vsel %vm2276, %v4718, %v4711
    %v4721 = vsel %vm2276, %v4719, %v4713
    %v4722 = vpack.c.bf16 %v4721, %v4720
    %s4723 = scalar_lea.vmem %s4, 16
    %v4724 = vld [vmem:[%s4723] sm:$0xf]
    %v4725 = vld [vmem:[%s4723 + $0x4] sm:$0xf]
    %v4726 = vld [vmem:[%s4723 + $0x8] sm:$0xf]
    %v4727 = vld [vmem:[%s4723 + $0xc] sm:$0xf]
    %v4728 = vld [vmem:[%s2602 + $0x1] sm:$0x1]
    %v4729 = vlaneseq
    %v4730 = vshrl.u32 %v4729, 7
    %v4731 = vsub.s32 0, %v4730
    %v4732 = vrot.slane %v4728, %v4731
    %v4737 = vunpack.c.l.b16 %v4724
    %v4738 = vunpack.c.l.b16 %v4725
    %v4739 = vunpack.c.l.b16 %v4726
    %v4740 = vunpack.c.l.b16 %v4727
    %v4741 = vpack.c.b16 %v4738, %v4737
    %v4742 = vpack.c.b16 %v4740, %v4739
    %v4746 = vsel %vm111, %v4722, 0
    %4748 = vmatprep.subr.bf16.mxu0 0
    %4749 = vmatpush1.bf16.msra.mxu0 %v4741
    %4750 = vmatprep.subr.bf16.mxu0 0
    %4751 = vmatpush1.bf16.msra.mxu0 %v4742
    %4752 = vmatprep.subr.bf16.mxu0 0
    %4753 = vmatpush1.bf16.msra.mxu0 0
    %4754 = vmatprep.subr.bf16.mxu0 0
    %4755 = vmatpush1.bf16.msra.mxu0 0
    %4756 = vmatprep.subr.bf16.mxu0 0
    %4757 = vmatpush1.bf16.msra.mxu0 0
    %4758 = vmatprep.subr.bf16.mxu0 0
    %4759 = vmatpush1.bf16.msra.mxu0 0
    %4760 = vmatprep.subr.bf16.mxu0 0
    %4761 = vmatpush1.bf16.msra.mxu0 0
    %4762 = vmatprep.subr.bf16.mxu0 0
    %4763 = vmatpush1.bf16.msra.mxu0 0
    %4764 = vmatprep.subr.bf16.mxu0 0
    %4765 = vmatpush1.bf16.msra.mxu0 0
    %4766 = vmatprep.subr.bf16.mxu0 0
    %4767 = vmatpush1.bf16.msra.mxu0 0
    %4768 = vmatprep.subr.bf16.mxu0 0
    %4769 = vmatpush1.bf16.msra.mxu0 0
    %4770 = vmatprep.subr.bf16.mxu0 0
    %4771 = vmatpush1.bf16.msra.mxu0 0
    %4772 = vmatprep.subr.bf16.mxu0 0
    %4773 = vmatpush1.bf16.msra.mxu0 0
    %4774 = vmatprep.subr.bf16.mxu0 0
    %4775 = vmatpush1.bf16.msra.mxu0 0
    %4776 = vmatprep.subr.bf16.mxu0 0
    %4777 = vmatpush1.bf16.msra.mxu0 0
    %4778 = vmatprep.subr.bf16.mxu0 0
    %4779 = vmatpush1.bf16.msra.mxu0 0
    %4780 = vmatprep.mubr.bf16.mxu0 0
    %4781 = vmatmul.mubr.bf16.gmra.mrb[0].mxu0 %v4746
    %v4782 = vpop.f32.mrb[0].mxu0
    %v4783 = vadd.f32 %v4732, %v4782
    %v4784 = vpop.f32.mrb[0].mxu0
    %v4785 = vpop.f32.mrb[0].mxu0
    %v4786 = vadd.f32 %v4732, %v4785
    %v4787 = vpop.f32.mrb[0].mxu0
    %4788 = vdwg.mxu0
    %v4789 = vadd.f32 %v2594, %v4783
    %v4790 = vadd.f32 %v2595, %v4786
    %v4791 = vld [vmem:[%s2602 + $0x2] sm:$0x1]
    %v4792 = vld [vmem:[%s2602 + $0x3] sm:$0x1]
    %v4793 = vsel %vm111, %v4789, 0.0
    %4794 = vadd.xlane.f32.xlu0 %v4793
    %v4795 = vpop.xlane.xlu0 %4794
    %v4796 = vsel %vm111, %v4790, 0.0
    %4797 = vadd.xlane.f32.xlu0 %v4796
    %v4798 = vpop.xlane.xlu0 %4797
    %v4799 = vmul.f32 %v4795, %v118
    %v4800 = vmul.f32 %v4798, %v118
    %v4801 = vsub.f32 %v4789, %v4799
    %v4802 = vsub.f32 %v4790, %v4800
    %v4803 = vmul.f32 %v4801, %v4801
    %v4804 = vmul.f32 %v4802, %v4802
    %v4805 = vsel %vm111, %v4803, 0.0
    %4806 = vadd.xlane.f32.xlu0 %v4805
    %v4807 = vpop.xlane.xlu0 %4806
    %v4808 = vsel %vm111, %v4804, 0.0
    %4809 = vadd.xlane.f32.xlu0 %v4808
    %v4810 = vpop.xlane.xlu0 %4809
    %v4811 = vmul.f32 %v4807, %v118
    %v4812 = vmul.f32 %v4810, %v118
    %v4813 = vadd.f32 %v4811, 1e-12
    %v4814 = vadd.f32 %v4812, 1e-12
    %v4815 = vrsqrt.pop %v4813
    %v4816 = vrsqrt.pop %v4814
    %v4817 = vmul.f32 %v4801, %v4815
    %v4818 = vmul.f32 %v4802, %v4816
    %v4819 = vlaneseq
    %v4820 = vshrl.u32 %v4819, 7
    %v4821 = vsub.s32 0, %v4820
    %v4822 = vrot.slane %v4791, %v4821
    %v4823 = vmul.f32 %v4817, %v4822
    %v4824 = vmul.f32 %v4818, %v4822
    %v4825 = vlaneseq
    %v4826 = vshrl.u32 %v4825, 7
    %v4827 = vsub.s32 0, %v4826
    %v4828 = vrot.slane %v4792, %v4827
    %v4829 = vadd.f32 %v4823, %v4828
    %v4830 = vadd.f32 %v4824, %v4828
    %v4831 = vpack.c.bf16 %v4830, %v4829
    %s4832 = scalar_lea.vmem %s6, 16
    %v4833 = vld [vmem:[%s4832] sm:$0xf]
    %v4834 = vld [vmem:[%s4832 + $0x4] sm:$0xf]
    %v4835 = vld [vmem:[%s4832 + $0x8] sm:$0xf]
    %v4836 = vld [vmem:[%s4832 + $0xc] sm:$0xf]
    %v4837 = vld [vmem:[%s2602 + $0x4] sm:$0x1]
    %v4838 = vlaneseq
    %v4839 = vshrl.u32 %v4838, 7
    %v4840 = vsub.s32 0, %v4839
    %v4841 = vrot.slane %v4837, %v4840
    %v4846 = vunpack.c.l.b16 %v4833
    %v4847 = vunpack.c.l.b16 %v4834
    %v4848 = vunpack.c.l.b16 %v4835
    %v4849 = vunpack.c.l.b16 %v4836
    %v4850 = vpack.c.b16 %v4847, %v4846
    %v4851 = vpack.c.b16 %v4849, %v4848
    %v4855 = vsel %vm111, %v4831, 0
    %4857 = vmatprep.subr.bf16.mxu0 0
    %4858 = vmatpush1.bf16.msra.mxu0 %v4850
    %4859 = vmatprep.subr.bf16.mxu0 0
    %4860 = vmatpush1.bf16.msra.mxu0 %v4851
    %4861 = vmatprep.subr.bf16.mxu0 0
    %4862 = vmatpush1.bf16.msra.mxu0 0
    %4863 = vmatprep.subr.bf16.mxu0 0
    %4864 = vmatpush1.bf16.msra.mxu0 0
    %4865 = vmatprep.subr.bf16.mxu0 0
    %4866 = vmatpush1.bf16.msra.mxu0 0
    %4867 = vmatprep.subr.bf16.mxu0 0
    %4868 = vmatpush1.bf16.msra.mxu0 0
    %4869 = vmatprep.subr.bf16.mxu0 0
    %4870 = vmatpush1.bf16.msra.mxu0 0
    %4871 = vmatprep.subr.bf16.mxu0 0
    %4872 = vmatpush1.bf16.msra.mxu0 0
    %4873 = vmatprep.subr.bf16.mxu0 0
    %4874 = vmatpush1.bf16.msra.mxu0 0
    %4875 = vmatprep.subr.bf16.mxu0 0
    %4876 = vmatpush1.bf16.msra.mxu0 0
    %4877 = vmatprep.subr.bf16.mxu0 0
    %4878 = vmatpush1.bf16.msra.mxu0 0
    %4879 = vmatprep.subr.bf16.mxu0 0
    %4880 = vmatpush1.bf16.msra.mxu0 0
    %4881 = vmatprep.subr.bf16.mxu0 0
    %4882 = vmatpush1.bf16.msra.mxu0 0
    %4883 = vmatprep.subr.bf16.mxu0 0
    %4884 = vmatpush1.bf16.msra.mxu0 0
    %4885 = vmatprep.subr.bf16.mxu0 0
    %4886 = vmatpush1.bf16.msra.mxu0 0
    %4887 = vmatprep.subr.bf16.mxu0 0
    %4888 = vmatpush1.bf16.msra.mxu0 0
    %4889 = vmatprep.mubr.bf16.mxu0 0
    %4890 = vmatmul.mubr.bf16.gmra.mrb[0].mxu0 %v4855
    %v4891 = vpop.f32.mrb[0].mxu0
    %v4892 = vadd.f32 %v4841, %v4891
    %v4893 = vpop.f32.mrb[0].mxu0
    %v4894 = vpop.f32.mrb[0].mxu0
    %v4895 = vadd.f32 %v4841, %v4894
    %v4896 = vpop.f32.mrb[0].mxu0
    %4897 = vdwg.mxu0
    %v4898 = vmul.f32 %v4892, 0.5
    %v4899 = vmul.f32 %v4895, 0.5
    %v4900 = vmul.f32 %v4892, 0.044715
    %v4901 = vmul.f32 %v4895, 0.044715
    %v4902 = vmul.f32 %v4900, %v4892
    %v4903 = vmul.f32 %v4901, %v4895
    %v4904 = vmul.f32 %v4902, %v4892
    %v4905 = vmul.f32 %v4903, %v4895
    %v4906 = vadd.f32 %v4892, %v4904
    %v4907 = vadd.f32 %v4895, %v4905
    %v4908 = vmul.f32 %v4906, 0.7978846
    %v4909 = vmul.f32 %v4907, 0.7978846
    %v4910 = vtanh.pop %v4908
    %v4911 = vtanh.pop %v4909
    %v4912 = vadd.f32 %v4910, 1.0
    %v4913 = vadd.f32 %v4911, 1.0
    %v4914 = vmul.f32 %v4898, %v4912
    %v4915 = vmul.f32 %v4899, %v4913
    %v4916 = vpack.c.bf16 %v4915, %v4914
    %s4917 = scalar_lea.vmem %s7, 32
    %v4918 = vld [vmem:[%s4917] sm:$0xf]
    %v4919 = vld [vmem:[%s4917 + $0x4] sm:$0xf]
    %v4920 = vld [vmem:[%s4917 + $0x8] sm:$0xf]
    %v4921 = vld [vmem:[%s4917 + $0xc] sm:$0xf]
    %v4922 = vld [vmem:[%s4917 + $0x10] sm:$0xf]
    %v4923 = vld [vmem:[%s4917 + $0x14] sm:$0xf]
    %v4924 = vld [vmem:[%s4917 + $0x18] sm:$0xf]
    %v4925 = vld [vmem:[%s4917 + $0x1c] sm:$0xf]
    %v4926 = vld [vmem:[%s2602 + $0x5] sm:$0x1]
    %v4927 = vlaneseq
    %v4928 = vshrl.u32 %v4927, 7
    %v4929 = vsub.s32 0, %v4928
    %v4930 = vrot.slane %v4926, %v4929
    %v4939 = vunpack.c.l.b16 %v4918
    %v4940 = vunpack.c.l.b16 %v4919
    %v4941 = vunpack.c.l.b16 %v4920
    %v4942 = vunpack.c.l.b16 %v4921
    %v4943 = vunpack.c.l.b16 %v4922
    %v4944 = vunpack.c.l.b16 %v4923
    %v4945 = vunpack.c.l.b16 %v4924
    %v4946 = vunpack.c.l.b16 %v4925
    %v4947 = vpack.c.b16 %v4940, %v4939
    %v4948 = vpack.c.b16 %v4942, %v4941
    %v4949 = vpack.c.b16 %v4944, %v4943
    %v4950 = vpack.c.b16 %v4946, %v4945
    %v4956 = vsel %vm2509, %v4916, 0
    %4958 = vmatprep.subr.bf16.mxu0 0
    %4959 = vmatpush1.bf16.msra.mxu0 %v4947
    %4960 = vmatprep.subr.bf16.mxu0 0
    %4961 = vmatpush1.bf16.msra.mxu0 %v4948
    %4962 = vmatprep.subr.bf16.mxu0 0
    %4963 = vmatpush1.bf16.msra.mxu0 %v4949
    %4964 = vmatprep.subr.bf16.mxu0 0
    %4965 = vmatpush1.bf16.msra.mxu0 %v4950
    %4966 = vmatprep.subr.bf16.mxu0 0
    %4967 = vmatpush1.bf16.msra.mxu0 0
    %4968 = vmatprep.subr.bf16.mxu0 0
    %4969 = vmatpush1.bf16.msra.mxu0 0
    %4970 = vmatprep.subr.bf16.mxu0 0
    %4971 = vmatpush1.bf16.msra.mxu0 0
    %4972 = vmatprep.subr.bf16.mxu0 0
    %4973 = vmatpush1.bf16.msra.mxu0 0
    %4974 = vmatprep.subr.bf16.mxu0 0
    %4975 = vmatpush1.bf16.msra.mxu0 0
    %4976 = vmatprep.subr.bf16.mxu0 0
    %4977 = vmatpush1.bf16.msra.mxu0 0
    %4978 = vmatprep.subr.bf16.mxu0 0
    %4979 = vmatpush1.bf16.msra.mxu0 0
    %4980 = vmatprep.subr.bf16.mxu0 0
    %4981 = vmatpush1.bf16.msra.mxu0 0
    %4982 = vmatprep.subr.bf16.mxu0 0
    %4983 = vmatpush1.bf16.msra.mxu0 0
    %4984 = vmatprep.subr.bf16.mxu0 0
    %4985 = vmatpush1.bf16.msra.mxu0 0
    %4986 = vmatprep.subr.bf16.mxu0 0
    %4987 = vmatpush1.bf16.msra.mxu0 0
    %4988 = vmatprep.subr.bf16.mxu0 0
    %4989 = vmatpush1.bf16.msra.mxu0 0
    %4990 = vmatprep.mubr.bf16.mxu0 0
    %4991 = vmatmul.mubr.bf16.gmra.mrb[0].mxu0 %v4956
    %v4992 = vpop.f32.mrb[0].mxu0
    %v4993 = vadd.f32 %v4930, %v4992
    %v4994 = vpop.f32.mrb[0].mxu0
    %v4995 = vpop.f32.mrb[0].mxu0
    %v4996 = vadd.f32 %v4930, %v4995
    %v4997 = vpop.f32.mrb[0].mxu0
    %4998 = vdwg.mxu0
    %v4999 = vadd.f32 %v4829, %v4993
    %v5000 = vadd.f32 %v4830, %v4996
    %v5001 = vld [vmem:[%s2602 + $0x6] sm:$0x1]
    %v5002 = vld [vmem:[%s2602 + $0x7] sm:$0x1]
    %v5003 = vsel %vm111, %v4999, 0.0
    %5004 = vadd.xlane.f32.xlu0 %v5003
    %v5005 = vpop.xlane.xlu0 %5004
    %v5006 = vsel %vm111, %v5000, 0.0
    %5007 = vadd.xlane.f32.xlu0 %v5006
    %v5008 = vpop.xlane.xlu0 %5007
    %v5009 = vmul.f32 %v5005, %v118
    %v5010 = vmul.f32 %v5008, %v118
    %v5011 = vsub.f32 %v4999, %v5009
    %v5012 = vsub.f32 %v5000, %v5010
    %v5013 = vmul.f32 %v5011, %v5011
    %v5014 = vmul.f32 %v5012, %v5012
    %v5015 = vsel %vm111, %v5013, 0.0
    %5016 = vadd.xlane.f32.xlu0 %v5015
    %v5017 = vpop.xlane.xlu0 %5016
    %v5018 = vsel %vm111, %v5014, 0.0
    %5019 = vadd.xlane.f32.xlu0 %v5018
    %v5020 = vpop.xlane.xlu0 %5019
    %v5021 = vmul.f32 %v5017, %v118
    %v5022 = vmul.f32 %v5020, %v118
    %v5023 = vadd.f32 %v5021, 1e-12
    %v5024 = vadd.f32 %v5022, 1e-12
    %v5025 = vrsqrt.pop %v5023
    %v5026 = vrsqrt.pop %v5024
    %v5027 = vmul.f32 %v5011, %v5025
    %v5028 = vmul.f32 %v5012, %v5026
    %v5029 = vlaneseq
    %v5030 = vshrl.u32 %v5029, 7
    %v5031 = vsub.s32 0, %v5030
    %v5032 = vrot.slane %v5001, %v5031
    %v5033 = vmul.f32 %v5027, %v5032
    %v5034 = vmul.f32 %v5028, %v5032
    %v5035 = vlaneseq
    %v5036 = vshrl.u32 %v5035, 7
    %v5037 = vsub.s32 0, %v5036
    %v5038 = vrot.slane %v5002, %v5037
    %v5039 = vadd.f32 %v5033, %v5038
    %v5040 = vadd.f32 %v5034, %v5038
    %v5041 = vpack.c.bf16 %v5039, %v5039
    %v5042 = vpack.c.bf16 %v5040, %v5040
    %v5043 = vld [vmem:[#allocation7] sm:$0xf]
    %v5044 = vld [vmem:[#allocation7 + $0x4] sm:$0xf]
    %v5045 = vld [vmem:[#allocation7 + $0x8] sm:$0xf]
    %v5046 = vld [vmem:[#allocation7 + $0xc] sm:$0xf]
    %v5047 = vld [vmem:[#allocation5 + $0x2] sm:$0x1]
    %v5048 = vlaneseq
    %v5049 = vshrl.u32 %v5048, 7
    %v5050 = vsub.s32 0, %v5049
    %v5051 = vrot.slane %v5047, %v5050
    %v5054 = vunpack.c.l.b16 %v5041
    %v5055 = vunpack.c.l.b16 %v5042
    %v5056 = vrot.slane %v5055, 7
    %vm5057 = vcmask 1041409
    %v5058 = vsel %vm5057, %v5056, %v5054
    %v5059 = vpack.c.b16 %v5058, %v5058
    %v5064 = vunpack.c.l.b16 %v5043
    %v5065 = vunpack.c.l.b16 %v5044
    %v5066 = vunpack.c.l.b16 %v5045
    %v5067 = vunpack.c.l.b16 %v5046
    %v5068 = vpack.c.b16 %v5065, %v5064
    %v5069 = vpack.c.b16 %v5067, %v5066
    %v5073 = vsel %vm111, %v5059, 0
    %5075 = vmatprep.subr.bf16.mxu0 0
    %5076 = vmatpush1.bf16.msra.mxu0 %v5068
    %5077 = vmatprep.subr.bf16.mxu0 0
    %5078 = vmatpush1.bf16.msra.mxu0 %v5069
    %5079 = vmatprep.subr.bf16.mxu0 0
    %5080 = vmatpush1.bf16.msra.mxu0 0
    %5081 = vmatprep.subr.bf16.mxu0 0
    %5082 = vmatpush1.bf16.msra.mxu0 0
    %5083 = vmatprep.subr.bf16.mxu0 0
    %5084 = vmatpush1.bf16.msra.mxu0 0
    %5085 = vmatprep.subr.bf16.mxu0 0
    %5086 = vmatpush1.bf16.msra.mxu0 0
    %5087 = vmatprep.subr.bf16.mxu0 0
    %5088 = vmatpush1.bf16.msra.mxu0 0
    %5089 = vmatprep.subr.bf16.mxu0 0
    %5090 = vmatpush1.bf16.msra.mxu0 0
    %5091 = vmatprep.subr.bf16.mxu0 0
    %5092 = vmatpush1.bf16.msra.mxu0 0
    %5093 = vmatprep.subr.bf16.mxu0 0
    %5094 = vmatpush1.bf16.msra.mxu0 0
    %5095 = vmatprep.subr.bf16.mxu0 0
    %5096 = vmatpush1.bf16.msra.mxu0 0
    %5097 = vmatprep.subr.bf16.mxu0 0
    %5098 = vmatpush1.bf16.msra.mxu0 0
    %5099 = vmatprep.subr.bf16.mxu0 0
    %5100 = vmatpush1.bf16.msra.mxu0 0
    %5101 = vmatprep.subr.bf16.mxu0 0
    %5102 = vmatpush1.bf16.msra.mxu0 0
    %5103 = vmatprep.subr.bf16.mxu0 0
    %5104 = vmatpush1.bf16.msra.mxu0 0
    %5105 = vmatprep.subr.bf16.mxu0 0
    %5106 = vmatpush1.bf16.msra.mxu0 0
    %5107 = vmatprep.mubr.bf16.mxu0 0
    %5108 = vmatmul.mubr.bf16.gmra.mrb[0].mxu0 %v5073
    %v5109 = vpop.f32.mrb[0].mxu0
    %v5110 = vadd.f32 %v5051, %v5109
    %v5111 = vpop.f32.mrb[0].mxu0
    %v5112 = vpop.f32.mrb[0].mxu0
    %v5113 = vpop.f32.mrb[0].mxu0
    %5114 = vdwg.mxu0
    %v5115 = vtanh.pop %v5110
    %v5116 = vpack.c.bf16 %v5115, %v5115
    %s5117 = scalar_lea.vmem [#allocation7], 16
    %v5118 = vld [vmem:[%s5117] sm:$0xf]
    %v5119 = vld [vmem:[%s5117 + $0x4] sm:$0xf]
    %v5120 = vld [vmem:[%s5117 + $0x8] sm:$0xf]
    %v5121 = vld [vmem:[%s5117 + $0xc] sm:$0xf]
    %v5122 = vld [vmem:[#allocation5 + $0x3] sm:$0x1]
    %v5123 = vlaneseq
    %v5124 = vshrl.u32 %v5123, 7
    %v5125 = vsub.s32 0, %v5124
    %v5126 = vrot.slane %v5122, %v5125
    %v5131 = vunpack.c.l.b16 %v5118
    %v5132 = vunpack.c.l.b16 %v5119
    %v5133 = vunpack.c.l.b16 %v5120
    %v5134 = vunpack.c.l.b16 %v5121
    %v5135 = vpack.c.b16 %v5132, %v5131
    %v5136 = vpack.c.b16 %v5134, %v5133
    %v5140 = vsel %vm111, %v5116, 0
    %5142 = vmatprep.subr.bf16.mxu0 0
    %5143 = vmatpush1.bf16.msra.mxu0 %v5135
    %5144 = vmatprep.subr.bf16.mxu0 0
    %5145 = vmatpush1.bf16.msra.mxu0 %v5136
    %5146 = vmatprep.subr.bf16.mxu0 0
    %5147 = vmatpush1.bf16.msra.mxu0 0
    %5148 = vmatprep.subr.bf16.mxu0 0
    %5149 = vmatpush1.bf16.msra.mxu0 0
    %5150 = vmatprep.subr.bf16.mxu0 0
    %5151 = vmatpush1.bf16.msra.mxu0 0
    %5152 = vmatprep.subr.bf16.mxu0 0
    %5153 = vmatpush1.bf16.msra.mxu0 0
    %5154 = vmatprep.subr.bf16.mxu0 0
    %5155 = vmatpush1.bf16.msra.mxu0 0
    %5156 = vmatprep.subr.bf16.mxu0 0
    %5157 = vmatpush1.bf16.msra.mxu0 0
    %5158 = vmatprep.subr.bf16.mxu0 0
    %5159 = vmatpush1.bf16.msra.mxu0 0
    %5160 = vmatprep.subr.bf16.mxu0 0
    %5161 = vmatpush1.bf16.msra.mxu0 0
    %5162 = vmatprep.subr.bf16.mxu0 0
    %5163 = vmatpush1.bf16.msra.mxu0 0
    %5164 = vmatprep.subr.bf16.mxu0 0
    %5165 = vmatpush1.bf16.msra.mxu0 0
    %5166 = vmatprep.subr.bf16.mxu0 0
    %5167 = vmatpush1.bf16.msra.mxu0 0
    %5168 = vmatprep.subr.bf16.mxu0 0
    %5169 = vmatpush1.bf16.msra.mxu0 0
    %5170 = vmatprep.subr.bf16.mxu0 0
    %5171 = vmatpush1.bf16.msra.mxu0 0
    %5172 = vmatprep.subr.bf16.mxu0 0
    %5173 = vmatpush1.bf16.msra.mxu0 0
    %5174 = vmatprep.mubr.bf16.mxu0 0
    %5175 = vmatmul.mubr.bf16.gmra.mrb[0].mxu0 %v5140
    %v5176 = vpop.f32.mrb[0].mxu0
    %v5177 = vadd.f32 %v5126, %v5176
    %v5178 = vpop.f32.mrb[0].mxu0
    %v5179 = vpop.f32.mrb[0].mxu0
    %v5180 = vpop.f32.mrb[0].mxu0
    %5181 = vdwg.mxu0
    %vm5182 = vcmask 9216
    %5183 = vst.msk [vmem:[#allocation8] sm:$0x3] %vm5182, %v5177
    // Predicated region
    $region50: #{tpu_custom_call.1} parent=1 // pred_check
      _
    $region51: #{tpu_custom_call.1} parent=1 // pred_check_branch
      %5185 = sbr.rel (0) target = $region53
    $region52: #{tpu_custom_call.1} parent=1 // pred_region
      %s5187 = ssub.s32 32, 32
      %5188 = vsyncadd [#allocation4], %s5187
      %s5190 = sshll.u32 [#allocation8], 4
      %s5191 = int_to_ptr.vmem [resolvable:$true] %s5190
      %5193 = dma.vmem_to_hbm [thread:$0]  %s5191, 32, %s9, [#allocation4]
    $region53: #{tpu_custom_call.1} parent=1 // pred_fallthru
      _
    // Predicated region
    $region54: #{tpu_custom_call.1} parent=1 // pred_check
      _
    $region55: #{tpu_custom_call.1} parent=1 // pred_check_branch
      %5195 = sbr.rel (0) target = $region57
    $region56: #{tpu_custom_call.1} parent=1 // pred_region
      %5196 = dma.done [#allocation4], 32
    $region57: #{tpu_custom_call.1} parent=1 // pred_fallthru
      _
    %5197 = vsyncpa [#allocation3], 1
    %5198 = vsyncpa [#allocation6], 1
    %5199 = vsyncpa [#allocation4], 1

</llo_original>
